<compile_context>
chip_gen: v5e
topology: v5e:2x2
jax: 0.10.0
libtpu: 0.0.40
codegen_flags: <defaults>
</compile_context>

<pallas_src>
import functools

import jax
import jax.numpy as jnp
from jax.experimental import pallas as pl
from jax.experimental.pallas import tpu as pltpu

K = 7            # conv kernel size
PAD = K // 2     # spatial padding


def _spatial_channel_kernel(w_ref, x_ref, o_ref,
                            maxacc_ref, sumacc_ref, pad_ref,
                            *, C, TC, H, W):
    """Grid = (N, num_channel_tiles); the channel-tile axis is the reduction axis.

    w_ref      : SMEM f32[2*K*K]             conv weight flattened as [in_ch, kh, kw]
    x_ref      : VMEM x.dtype[1, TC, H*W]    lane-dense input block (one channel tile)
    o_ref      : VMEM f32[1, 1, H, W]        output block (written on last channel tile)
    maxacc_ref : VMEM f32[1, H*W]            running channel max
    sumacc_ref : VMEM f32[1, H*W]            running channel sum
    pad_ref    : VMEM f32[2, H+6, W+6]       zero-padded reduced maps for the 7x7 conv
    """
    k = pl.program_id(1)
    nk = pl.num_programs(1)
    HW = H * W

    # Single load of the block feeds both reductions.
    xblk = x_ref[0].astype(jnp.float32)                      # (TC, HW)

    if C % TC != 0:
        # Last channel tile is partial -> mask out-of-range channels.
        c0 = k * TC
        ch = jax.lax.broadcasted_iota(jnp.int32, (TC, HW), 0) + c0
        valid = ch < C
        x_max = jnp.where(valid, xblk, -jnp.inf)
        x_sum = jnp.where(valid, xblk, 0.0)
    else:
        x_max = xblk
        x_sum = xblk

    blk_max = jnp.max(x_max, axis=0, keepdims=True)          # (1, HW)
    blk_sum = jnp.sum(x_sum, axis=0, keepdims=True)          # (1, HW)

    @pl.when(k == 0)
    def _init():
        maxacc_ref[...] = jnp.full((1, HW), -jnp.inf, jnp.float32)
        sumacc_ref[...] = jnp.zeros((1, HW), jnp.float32)

    maxacc_ref[...] = jnp.maximum(maxacc_ref[...], blk_max)
    sumacc_ref[...] = sumacc_ref[...] + blk_sum

    @pl.when(k == nk - 1)
    def _finalize():
        # Zero-pad the two reduced maps into the (2, H+6, W+6) scratch.
        pad_ref[...] = jnp.zeros_like(pad_ref)
        inv_c = 1.0 / C
        for i in range(H):
            pad_ref[0, PAD + i:PAD + i + 1, PAD:PAD + W] = (
                maxacc_ref[:, i * W:(i + 1) * W])
            pad_ref[1, PAD + i:PAD + i + 1, PAD:PAD + W] = (
                sumacc_ref[:, i * W:(i + 1) * W] * inv_c)

        # 7x7 "valid" conv over the 2 padded maps; shifts come from ref slices
        # (offset VMEM loads), accumulation on the VPU.
        acc = jnp.zeros((H, W), jnp.float32)
        for c in range(2):
            base = c * K * K
            for ki in range(K):
                for kj in range(K):
                    acc = acc + w_ref[base + ki * K + kj] * pad_ref[c, ki:ki + H, kj:kj + W]

        o_ref[0, 0] = jax.nn.sigmoid(acc).astype(o_ref.dtype)


@jax.jit
def spatial_channel(x, weight):
    """x: [N, C, H, W]; weight: f32[1, 2, K, K] (PyTorch OIHW). Returns f32[N, 1, H, W]."""
    N, C, H, W = x.shape
    HW = H * W

    # Free (contiguous) reshape: lane-dense view for the channel reduction.
    x_flat = x.reshape(N, C, HW)
    w_flat = weight.astype(jnp.float32).reshape(-1)          # order: [in_ch, kh, kw]

    # Channel tile sized so the double-buffered input block stays well inside the
    # default scoped VMEM on every TPU generation.
    itemsize = jnp.dtype(x.dtype).itemsize
    budget_channels = max(1, (2 * 1024 * 1024) // (HW * itemsize))
    if budget_channels >= C:
        tc = C
    elif budget_channels >= 8:
        tc = (budget_channels // 8) * 8
    else:
        tc = min(8, C)
    nck = pl.cdiv(C, tc)

    kernel = functools.partial(_spatial_channel_kernel, C=C, TC=tc, H=H, W=W)

    return pl.pallas_call(
        kernel,
        out_shape=jax.ShapeDtypeStruct((N, 1, H, W), jnp.float32),
        grid=(N, nck),
        in_specs=[
            pl.BlockSpec(memory_space=pltpu.MemorySpace.SMEM),            # conv weights
            pl.BlockSpec((1, tc, HW), lambda n, k: (n, k, 0)),            # x channel tile
        ],
        out_specs=pl.BlockSpec((1, 1, H, W), lambda n, k: (n, 0, 0, 0)),
        scratch_shapes=[
            pltpu.VMEM((1, HW), jnp.float32),                             # running max
            pltpu.VMEM((1, HW), jnp.float32),                             # running sum
            pltpu.VMEM((2, H + 2 * PAD, W + 2 * PAD), jnp.float32),       # padded maps
        ],
        compiler_params=pltpu.CompilerParams(
            dimension_semantics=("parallel", "arbitrary")),
    )(w_flat, x_flat)


def spatial_channel_reference(x, weight):
    """Pure-JAX reference matching the PyTorch forward."""
    xf = x.astype(jnp.float32)
    max_out = jnp.max(xf, axis=1, keepdims=True)
    avg_out = jnp.mean(xf, axis=1, keepdims=True)
    feats = jnp.concatenate([max_out, avg_out], axis=1)
    y = jax.lax.conv_general_dilated(
        feats, weight.astype(jnp.float32), window_strides=(1, 1),
        padding=[(PAD, PAD), (PAD, PAD)],
        dimension_numbers=("NCHW", "OIHW", "NCHW"))
    return jax.nn.sigmoid(y)


if __name__ == "__main__":
    key = jax.random.PRNGKey(0)
    kx, kw = jax.random.split(key)

    N, C, H, W = 2, 4, 16, 16
    x = jax.random.normal(kx, (N, C, H, W), dtype=jnp.float32)
    # Conv2d(2, 1, 7, bias=False) -> OIHW (1, 2, 7, 7).
    weight = 0.05 * jax.random.normal(kw, (1, 2, K, K), dtype=jnp.float32)

    out = spatial_channel(x, weight)
    out = jax.block_until_ready(out)

    ref = spatial_channel_reference(x, weight)
    assert out.shape == (N, 1, H, W), out.shape
    assert jnp.allclose(out, ref, atol=1e-5, rtol=1e-5), \
        float(jnp.max(jnp.abs(out - ref)))

    print("KERNEL_OK")
</pallas_src>

<mosaic_0001>
module attributes {stable_mosaic.version = 11 : i64} {
  func.func @_spatial_channel_kernel(%arg0: i32, %arg1: i32, %arg2: memref<98xf32, #tpu.memory_space<smem>>, %arg3: memref<1x4x256xf32, #tpu.memory_space<vmem>>, %arg4: memref<1x1x16x16xf32, #tpu.memory_space<vmem>>, %arg5: memref<1x256xf32, #tpu.memory_space<vmem>>, %arg6: memref<1x256xf32, #tpu.memory_space<vmem>>, %arg7: memref<2x22x22xf32, #tpu.memory_space<vmem>>) attributes {dimension_semantics = [#tpu.dimension_semantics<parallel>, #tpu.dimension_semantics<arbitrary>], iteration_bounds = array<i64: 2, 1>, scalar_prefetch = 0 : i64, scratch_operands = 3 : i64, tpu.core_type = #tpu.core_type<tc>, window_params = [{transform_indices = @transform_0, window_bounds = array<i64: 98>}, {transform_indices = @transform_1, window_bounds = array<i64: 1, 4, 256>}, {transform_indices = @transform_2, window_bounds = array<i64: 1, 1, 16, 16>}]} {
    %c0 = arith.constant 0 : index
    %c0_0 = arith.constant 0 : index
    %c0_1 = arith.constant 0 : index
    %0 = vector.load %arg3[%c0, %c0_0, %c0_1] : memref<1x4x256xf32, #tpu.memory_space<vmem>>, vector<1x4x256xf32>
    %1 = vector.shape_cast %0 : vector<1x4x256xf32> to vector<4x256xf32>
    %cst = arith.constant dense<0xFF800000> : vector<256xf32>
    %2 = vector.multi_reduction <maximumf>, %1, %cst [0] : vector<4x256xf32> to vector<256xf32>
    %3 = vector.shape_cast %2 : vector<256xf32> to vector<1x256xf32>
    %cst_2 = arith.constant dense<0.000000e+00> : vector<256xf32>
    %4 = vector.multi_reduction <add>, %1, %cst_2 [0] : vector<4x256xf32> to vector<256xf32>
    %5 = vector.shape_cast %4 : vector<256xf32> to vector<1x256xf32>
    %c0_i32 = arith.constant 0 : i32
    %6 = arith.cmpi eq, %arg1, %c0_i32 : i32
    %7 = arith.extui %6 : i1 to i32
    %c0_i32_3 = arith.constant 0 : i32
    %8 = arith.cmpi ne, %7, %c0_i32_3 : i32
    scf.if %8 {
      %cst_14 = arith.constant 0xFF800000 : f32
      %18 = vector.broadcast %cst_14 : f32 to vector<1x256xf32>
      %c0_15 = arith.constant 0 : index
      %c0_16 = arith.constant 0 : index
      %19 = vector.load %arg5[%c0_15, %c0_16] : memref<1x256xf32, #tpu.memory_space<vmem>>, vector<1x256xf32>
      tpu.vector_store %arg5[%c0_15, %c0_16], %18 {strides = array<i32>} : memref<1x256xf32, #tpu.memory_space<vmem>>, vector<1x256xf32>,
      %cst_17 = arith.constant 0.000000e+00 : f32
      %20 = vector.broadcast %cst_17 : f32 to vector<1x256xf32>
      %c0_18 = arith.constant 0 : index
      %c0_19 = arith.constant 0 : index
      %21 = vector.load %arg6[%c0_18, %c0_19] : memref<1x256xf32, #tpu.memory_space<vmem>>, vector<1x256xf32>
      tpu.vector_store %arg6[%c0_18, %c0_19], %20 {strides = array<i32>} : memref<1x256xf32, #tpu.memory_space<vmem>>, vector<1x256xf32>,
    } else {
    }
    %c0_4 = arith.constant 0 : index
    %c0_5 = arith.constant 0 : index
    %9 = vector.load %arg5[%c0_4, %c0_5] : memref<1x256xf32, #tpu.memory_space<vmem>>, vector<1x256xf32>
    %10 = arith.maximumf %9, %3 : vector<1x256xf32>
    %c0_6 = arith.constant 0 : index
    %c0_7 = arith.constant 0 : index
    %11 = vector.load %arg5[%c0_6, %c0_7] : memref<1x256xf32, #tpu.memory_space<vmem>>, vector<1x256xf32>
    tpu.vector_store %arg5[%c0_6, %c0_7], %10 {strides = array<i32>} : memref<1x256xf32, #tpu.memory_space<vmem>>, vector<1x256xf32>,
    %c0_8 = arith.constant 0 : index
    %c0_9 = arith.constant 0 : index
    %12 = vector.load %arg6[%c0_8, %c0_9] : memref<1x256xf32, #tpu.memory_space<vmem>>, vector<1x256xf32>
    %13 = arith.addf %12, %5 : vector<1x256xf32>
    %c0_10 = arith.constant 0 : index
    %c0_11 = arith.constant 0 : index
    %14 = vector.load %arg6[%c0_10, %c0_11] : memref<1x256xf32, #tpu.memory_space<vmem>>, vector<1x256xf32>
    tpu.vector_store %arg6[%c0_10, %c0_11], %13 {strides = array<i32>} : memref<1x256xf32, #tpu.memory_space<vmem>>, vector<1x256xf32>,
    %c0_i32_12 = arith.constant 0 : i32
    %15 = arith.cmpi eq, %arg1, %c0_i32_12 : i32
    %16 = arith.extui %15 : i1 to i32
    %c0_i32_13 = arith.constant 0 : i32
    %17 = arith.cmpi ne, %16, %c0_i32_13 : i32
    scf.if %17 {
      %cst_14 = arith.constant 0.000000e+00 : f32
      %18 = vector.broadcast %cst_14 : f32 to vector<2x22x22xf32>
      %c0_15 = arith.constant 0 : index
      %c0_16 = arith.constant 0 : index
      %c0_17 = arith.constant 0 : index
      %19 = vector.load %arg7[%c0_15, %c0_16, %c0_17] : memref<2x22x22xf32, #tpu.memory_space<vmem>>, vector<2x22x22xf32>
      tpu.vector_store %arg7[%c0_15, %c0_16, %c0_17], %18 {strides = array<i32>} : memref<2x22x22xf32, #tpu.memory_space<vmem>>, vector<2x22x22xf32>,
      %c0_18 = arith.constant 0 : index
      %c0_19 = arith.constant 0 : index
      %20 = vector.load %arg5[%c0_18, %c0_19] : memref<1x256xf32, #tpu.memory_space<vmem>>, vector<1x16xf32>
      %c0_20 = arith.constant 0 : index
      %c3 = arith.constant 3 : index
      %c3_21 = arith.constant 3 : index
      %21 = vector.load %arg7[%c0_20, %c3, %c3_21] : memref<2x22x22xf32, #tpu.memory_space<vmem>>, vector<1x1x16xf32>
      %22 = vector.shape_cast %21 : vector<1x1x16xf32> to vector<1x16xf32>
      %23 = vector.shape_cast %20 : vector<1x16xf32> to vector<1x1x16xf32>
      tpu.vector_store %arg7[%c0_20, %c3, %c3_21], %23 {strides = array<i32>} : memref<2x22x22xf32, #tpu.memory_space<vmem>>, vector<1x1x16xf32>,
      %c0_22 = arith.constant 0 : index
      %c0_23 = arith.constant 0 : index
      %24 = vector.load %arg6[%c0_22, %c0_23] : memref<1x256xf32, #tpu.memory_space<vmem>>, vector<1x16xf32>
      %cst_24 = arith.constant 2.500000e-01 : f32
      %25 = vector.broadcast %cst_24 : f32 to vector<1x16xf32>
      %26 = arith.mulf %24, %25 : vector<1x16xf32>
      %c1 = arith.constant 1 : index
      %c3_25 = arith.constant 3 : index
      %c3_26 = arith.constant 3 : index
      %27 = vector.load %arg7[%c1, %c3_25, %c3_26] : memref<2x22x22xf32, #tpu.memory_space<vmem>>, vector<1x1x16xf32>
      %28 = vector.shape_cast %27 : vector<1x1x16xf32> to vector<1x16xf32>
      %29 = vector.shape_cast %26 : vector<1x16xf32> to vector<1x1x16xf32>
      tpu.vector_store %arg7[%c1, %c3_25, %c3_26], %29 {strides = array<i32>} : memref<2x22x22xf32, #tpu.memory_space<vmem>>, vector<1x1x16xf32>,
      %c0_27 = arith.constant 0 : index
      %c16 = arith.constant 16 : index
      %30 = vector.load %arg5[%c0_27, %c16] : memref<1x256xf32, #tpu.memory_space<vmem>>, vector<1x16xf32>
      %c0_28 = arith.constant 0 : index
      %c4 = arith.constant 4 : index
      %c3_29 = arith.constant 3 : index
      %31 = vector.load %arg7[%c0_28, %c4, %c3_29] : memref<2x22x22xf32, #tpu.memory_space<vmem>>, vector<1x1x16xf32>
      %32 = vector.shape_cast %31 : vector<1x1x16xf32> to vector<1x16xf32>
      %33 = vector.shape_cast %30 : vector<1x16xf32> to vector<1x1x16xf32>
      tpu.vector_store %arg7[%c0_28, %c4, %c3_29], %33 {strides = array<i32>} : memref<2x22x22xf32, #tpu.memory_space<vmem>>, vector<1x1x16xf32>,
      %c0_30 = arith.constant 0 : index
      %c16_31 = arith.constant 16 : index
      %34 = vector.load %arg6[%c0_30, %c16_31] : memref<1x256xf32, #tpu.memory_space<vmem>>, vector<1x16xf32>
      %cst_32 = arith.constant 2.500000e-01 : f32
      %35 = vector.broadcast %cst_32 : f32 to vector<1x16xf32>
      %36 = arith.mulf %34, %35 : vector<1x16xf32>
      %c1_33 = arith.constant 1 : index
      %c4_34 = arith.constant 4 : index
      %c3_35 = arith.constant 3 : index
      %37 = vector.load %arg7[%c1_33, %c4_34, %c3_35] : memref<2x22x22xf32, #tpu.memory_space<vmem>>, vector<1x1x16xf32>
      %38 = vector.shape_cast %37 : vector<1x1x16xf32> to vector<1x16xf32>
      %39 = vector.shape_cast %36 : vector<1x16xf32> to vector<1x1x16xf32>
      tpu.vector_store %arg7[%c1_33, %c4_34, %c3_35], %39 {strides = array<i32>} : memref<2x22x22xf32, #tpu.memory_space<vmem>>, vector<1x1x16xf32>,
      %c0_36 = arith.constant 0 : index
      %c32 = arith.constant 32 : index
      %40 = vector.load %arg5[%c0_36, %c32] : memref<1x256xf32, #tpu.memory_space<vmem>>, vector<1x16xf32>
      %c0_37 = arith.constant 0 : index
      %c5 = arith.constant 5 : index
      %c3_38 = arith.constant 3 : index
      %41 = vector.load %arg7[%c0_37, %c5, %c3_38] : memref<2x22x22xf32, #tpu.memory_space<vmem>>, vector<1x1x16xf32>
      %42 = vector.shape_cast %41 : vector<1x1x16xf32> to vector<1x16xf32>
      %43 = vector.shape_cast %40 : vector<1x16xf32> to vector<1x1x16xf32>
      tpu.vector_store %arg7[%c0_37, %c5, %c3_38], %43 {strides = array<i32>} : memref<2x22x22xf32, #tpu.memory_space<vmem>>, vector<1x1x16xf32>,
      %c0_39 = arith.constant 0 : index
      %c32_40 = arith.constant 32 : index
      %44 = vector.load %arg6[%c0_39, %c32_40] : memref<1x256xf32, #tpu.memory_space<vmem>>, vector<1x16xf32>
      %cst_41 = arith.constant 2.500000e-01 : f32
      %45 = vector.broadcast %cst_41 : f32 to vector<1x16xf32>
      %46 = arith.mulf %44, %45 : vector<1x16xf32>
      %c1_42 = arith.constant 1 : index
      %c5_43 = arith.constant 5 : index
      %c3_44 = arith.constant 3 : index
      %47 = vector.load %arg7[%c1_42, %c5_43, %c3_44] : memref<2x22x22xf32, #tpu.memory_space<vmem>>, vector<1x1x16xf32>
      %48 = vector.shape_cast %47 : vector<1x1x16xf32> to vector<1x16xf32>
      %49 = vector.shape_cast %46 : vector<1x16xf32> to vector<1x1x16xf32>
      tpu.vector_store %arg7[%c1_42, %c5_43, %c3_44], %49 {strides = array<i32>} : memref<2x22x22xf32, #tpu.memory_space<vmem>>, vector<1x1x16xf32>,
      %c0_45 = arith.constant 0 : index
      %c48 = arith.constant 48 : index
      %50 = vector.load %arg5[%c0_45, %c48] : memref<1x256xf32, #tpu.memory_space<vmem>>, vector<1x16xf32>
      %c0_46 = arith.constant 0 : index
      %c6 = arith.constant 6 : index
      %c3_47 = arith.constant 3 : index
      %51 = vector.load %arg7[%c0_46, %c6, %c3_47] : memref<2x22x22xf32, #tpu.memory_space<vmem>>, vector<1x1x16xf32>
      %52 = vector.shape_cast %51 : vector<1x1x16xf32> to vector<1x16xf32>
      %53 = vector.shape_cast %50 : vector<1x16xf32> to vector<1x1x16xf32>
      tpu.vector_store %arg7[%c0_46, %c6, %c3_47], %53 {strides = array<i32>} : memref<2x22x22xf32, #tpu.memory_space<vmem>>, vector<1x1x16xf32>,
      %c0_48 = arith.constant 0 : index
      %c48_49 = arith.constant 48 : index
      %54 = vector.load %arg6[%c0_48, %c48_49] : memref<1x256xf32, #tpu.memory_space<vmem>>, vector<1x16xf32>
      %cst_50 = arith.constant 2.500000e-01 : f32
      %55 = vector.broadcast %cst_50 : f32 to vector<1x16xf32>
      %56 = arith.mulf %54, %55 : vector<1x16xf32>
      %c1_51 = arith.constant 1 : index
      %c6_52 = arith.constant 6 : index
      %c3_53 = arith.constant 3 : index
      %57 = vector.load %arg7[%c1_51, %c6_52, %c3_53] : memref<2x22x22xf32, #tpu.memory_space<vmem>>, vector<1x1x16xf32>
      %58 = vector.shape_cast %57 : vector<1x1x16xf32> to vector<1x16xf32>
      %59 = vector.shape_cast %56 : vector<1x16xf32> to vector<1x1x16xf32>
      tpu.vector_store %arg7[%c1_51, %c6_52, %c3_53], %59 {strides = array<i32>} : memref<2x22x22xf32, #tpu.memory_space<vmem>>, vector<1x1x16xf32>,
      %c0_54 = arith.constant 0 : index
      %c64 = arith.constant 64 : index
      %60 = vector.load %arg5[%c0_54, %c64] : memref<1x256xf32, #tpu.memory_space<vmem>>, vector<1x16xf32>
      %c0_55 = arith.constant 0 : index
      %c7 = arith.constant 7 : index
      %c3_56 = arith.constant 3 : index
      %61 = vector.load %arg7[%c0_55, %c7, %c3_56] : memref<2x22x22xf32, #tpu.memory_space<vmem>>, vector<1x1x16xf32>
      %62 = vector.shape_cast %61 : vector<1x1x16xf32> to vector<1x16xf32>
      %63 = vector.shape_cast %60 : vector<1x16xf32> to vector<1x1x16xf32>
      tpu.vector_store %arg7[%c0_55, %c7, %c3_56], %63 {strides = array<i32>} : memref<2x22x22xf32, #tpu.memory_space<vmem>>, vector<1x1x16xf32>,
      %c0_57 = arith.constant 0 : index
      %c64_58 = arith.constant 64 : index
      %64 = vector.load %arg6[%c0_57, %c64_58] : memref<1x256xf32, #tpu.memory_space<vmem>>, vector<1x16xf32>
      %cst_59 = arith.constant 2.500000e-01 : f32
      %65 = vector.broadcast %cst_59 : f32 to vector<1x16xf32>
      %66 = arith.mulf %64, %65 : vector<1x16xf32>
      %c1_60 = arith.constant 1 : index
      %c7_61 = arith.constant 7 : index
      %c3_62 = arith.constant 3 : index
      %67 = vector.load %arg7[%c1_60, %c7_61, %c3_62] : memref<2x22x22xf32, #tpu.memory_space<vmem>>, vector<1x1x16xf32>
      %68 = vector.shape_cast %67 : vector<1x1x16xf32> to vector<1x16xf32>
      %69 = vector.shape_cast %66 : vector<1x16xf32> to vector<1x1x16xf32>
      tpu.vector_store %arg7[%c1_60, %c7_61, %c3_62], %69 {strides = array<i32>} : memref<2x22x22xf32, #tpu.memory_space<vmem>>, vector<1x1x16xf32>,
      %c0_63 = arith.constant 0 : index
      %c80 = arith.constant 80 : index
      %70 = vector.load %arg5[%c0_63, %c80] : memref<1x256xf32, #tpu.memory_space<vmem>>, vector<1x16xf32>
      %c0_64 = arith.constant 0 : index
      %c8 = arith.constant 8 : index
      %c3_65 = arith.constant 3 : index
      %71 = vector.load %arg7[%c0_64, %c8, %c3_65] : memref<2x22x22xf32, #tpu.memory_space<vmem>>, vector<1x1x16xf32>
      %72 = vector.shape_cast %71 : vector<1x1x16xf32> to vector<1x16xf32>
      %73 = vector.shape_cast %70 : vector<1x16xf32> to vector<1x1x16xf32>
      tpu.vector_store %arg7[%c0_64, %c8, %c3_65], %73 {strides = array<i32>} : memref<2x22x22xf32, #tpu.memory_space<vmem>>, vector<1x1x16xf32>,
      %c0_66 = arith.constant 0 : index
      %c80_67 = arith.constant 80 : index
      %74 = vector.load %arg6[%c0_66, %c80_67] : memref<1x256xf32, #tpu.memory_space<vmem>>, vector<1x16xf32>
      %cst_68 = arith.constant 2.500000e-01 : f32
      %75 = vector.broadcast %cst_68 : f32 to vector<1x16xf32>
      %76 = arith.mulf %74, %75 : vector<1x16xf32>
      %c1_69 = arith.constant 1 : index
      %c8_70 = arith.constant 8 : index
      %c3_71 = arith.constant 3 : index
      %77 = vector.load %arg7[%c1_69, %c8_70, %c3_71] : memref<2x22x22xf32, #tpu.memory_space<vmem>>, vector<1x1x16xf32>
      %78 = vector.shape_cast %77 : vector<1x1x16xf32> to vector<1x16xf32>
      %79 = vector.shape_cast %76 : vector<1x16xf32> to vector<1x1x16xf32>
      tpu.vector_store %arg7[%c1_69, %c8_70, %c3_71], %79 {strides = array<i32>} : memref<2x22x22xf32, #tpu.memory_space<vmem>>, vector<1x1x16xf32>,
      %c0_72 = arith.constant 0 : index
      %c96 = arith.constant 96 : index
      %80 = vector.load %arg5[%c0_72, %c96] : memref<1x256xf32, #tpu.memory_space<vmem>>, vector<1x16xf32>
      %c0_73 = arith.constant 0 : index
      %c9 = arith.constant 9 : index
      %c3_74 = arith.constant 3 : index
      %81 = vector.load %arg7[%c0_73, %c9, %c3_74] : memref<2x22x22xf32, #tpu.memory_space<vmem>>, vector<1x1x16xf32>
      %82 = vector.shape_cast %81 : vector<1x1x16xf32> to vector<1x16xf32>
      %83 = vector.shape_cast %80 : vector<1x16xf32> to vector<1x1x16xf32>
      tpu.vector_store %arg7[%c0_73, %c9, %c3_74], %83 {strides = array<i32>} : memref<2x22x22xf32, #tpu.memory_space<vmem>>, vector<1x1x16xf32>,
      %c0_75 = arith.constant 0 : index
      %c96_76 = arith.constant 96 : index
      %84 = vector.load %arg6[%c0_75, %c96_76] : memref<1x256xf32, #tpu.memory_space<vmem>>, vector<1x16xf32>
      %cst_77 = arith.constant 2.500000e-01 : f32
      %85 = vector.broadcast %cst_77 : f32 to vector<1x16xf32>
      %86 = arith.mulf %84, %85 : vector<1x16xf32>
      %c1_78 = arith.constant 1 : index
      %c9_79 = arith.constant 9 : index
      %c3_80 = arith.constant 3 : index
      %87 = vector.load %arg7[%c1_78, %c9_79, %c3_80] : memref<2x22x22xf32, #tpu.memory_space<vmem>>, vector<1x1x16xf32>
      %88 = vector.shape_cast %87 : vector<1x1x16xf32> to vector<1x16xf32>
      %89 = vector.shape_cast %86 : vector<1x16xf32> to vector<1x1x16xf32>
      tpu.vector_store %arg7[%c1_78, %c9_79, %c3_80], %89 {strides = array<i32>} : memref<2x22x22xf32, #tpu.memory_space<vmem>>, vector<1x1x16xf32>,
      %c0_81 = arith.constant 0 : index
      %c112 = arith.constant 112 : index
      %90 = vector.load %arg5[%c0_81, %c112] : memref<1x256xf32, #tpu.memory_space<vmem>>, vector<1x16xf32>
      %c0_82 = arith.constant 0 : index
      %c10 = arith.constant 10 : index
      %c3_83 = arith.constant 3 : index
      %91 = vector.load %arg7[%c0_82, %c10, %c3_83] : memref<2x22x22xf32, #tpu.memory_space<vmem>>, vector<1x1x16xf32>
      %92 = vector.shape_cast %91 : vector<1x1x16xf32> to vector<1x16xf32>
      %93 = vector.shape_cast %90 : vector<1x16xf32> to vector<1x1x16xf32>
      tpu.vector_store %arg7[%c0_82, %c10, %c3_83], %93 {strides = array<i32>} : memref<2x22x22xf32, #tpu.memory_space<vmem>>, vector<1x1x16xf32>,
      %c0_84 = arith.constant 0 : index
      %c112_85 = arith.constant 112 : index
      %94 = vector.load %arg6[%c0_84, %c112_85] : memref<1x256xf32, #tpu.memory_space<vmem>>, vector<1x16xf32>
      %cst_86 = arith.constant 2.500000e-01 : f32
      %95 = vector.broadcast %cst_86 : f32 to vector<1x16xf32>
      %96 = arith.mulf %94, %95 : vector<1x16xf32>
      %c1_87 = arith.constant 1 : index
      %c10_88 = arith.constant 10 : index
      %c3_89 = arith.constant 3 : index
      %97 = vector.load %arg7[%c1_87, %c10_88, %c3_89] : memref<2x22x22xf32, #tpu.memory_space<vmem>>, vector<1x1x16xf32>
      %98 = vector.shape_cast %97 : vector<1x1x16xf32> to vector<1x16xf32>
      %99 = vector.shape_cast %96 : vector<1x16xf32> to vector<1x1x16xf32>
      tpu.vector_store %arg7[%c1_87, %c10_88, %c3_89], %99 {strides = array<i32>} : memref<2x22x22xf32, #tpu.memory_space<vmem>>, vector<1x1x16xf32>,
      %c0_90 = arith.constant 0 : index
      %c128 = arith.constant 128 : index
      %100 = vector.load %arg5[%c0_90, %c128] : memref<1x256xf32, #tpu.memory_space<vmem>>, vector<1x16xf32>
      %c0_91 = arith.constant 0 : index
      %c11 = arith.constant 11 : index
      %c3_92 = arith.constant 3 : index
      %101 = vector.load %arg7[%c0_91, %c11, %c3_92] : memref<2x22x22xf32, #tpu.memory_space<vmem>>, vector<1x1x16xf32>
      %102 = vector.shape_cast %101 : vector<1x1x16xf32> to vector<1x16xf32>
      %103 = vector.shape_cast %100 : vector<1x16xf32> to vector<1x1x16xf32>
      tpu.vector_store %arg7[%c0_91, %c11, %c3_92], %103 {strides = array<i32>} : memref<2x22x22xf32, #tpu.memory_space<vmem>>, vector<1x1x16xf32>,
      %c0_93 = arith.constant 0 : index
      %c128_94 = arith.constant 128 : index
      %104 = vector.load %arg6[%c0_93, %c128_94] : memref<1x256xf32, #tpu.memory_space<vmem>>, vector<1x16xf32>
      %cst_95 = arith.constant 2.500000e-01 : f32
      %105 = vector.broadcast %cst_95 : f32 to vector<1x16xf32>
      %106 = arith.mulf %104, %105 : vector<1x16xf32>
      %c1_96 = arith.constant 1 : index
      %c11_97 = arith.constant 11 : index
      %c3_98 = arith.constant 3 : index
      %107 = vector.load %arg7[%c1_96, %c11_97, %c3_98] : memref<2x22x22xf32, #tpu.memory_space<vmem>>, vector<1x1x16xf32>
      %108 = vector.shape_cast %107 : vector<1x1x16xf32> to vector<1x16xf32>
      %109 = vector.shape_cast %106 : vector<1x16xf32> to vector<1x1x16xf32>
      tpu.vector_store %arg7[%c1_96, %c11_97, %c3_98], %109 {strides = array<i32>} : memref<2x22x22xf32, #tpu.memory_space<vmem>>, vector<1x1x16xf32>,
      %c0_99 = arith.constant 0 : index
      %c144 = arith.constant 144 : index
      %110 = vector.load %arg5[%c0_99, %c144] : memref<1x256xf32, #tpu.memory_space<vmem>>, vector<1x16xf32>
      %c0_100 = arith.constant 0 : index
      %c12 = arith.constant 12 : index
      %c3_101 = arith.constant 3 : index
      %111 = vector.load %arg7[%c0_100, %c12, %c3_101] : memref<2x22x22xf32, #tpu.memory_space<vmem>>, vector<1x1x16xf32>
      %112 = vector.shape_cast %111 : vector<1x1x16xf32> to vector<1x16xf32>
      %113 = vector.shape_cast %110 : vector<1x16xf32> to vector<1x1x16xf32>
      tpu.vector_store %arg7[%c0_100, %c12, %c3_101], %113 {strides = array<i32>} : memref<2x22x22xf32, #tpu.memory_space<vmem>>, vector<1x1x16xf32>,
      %c0_102 = arith.constant 0 : index
      %c144_103 = arith.constant 144 : index
      %114 = vector.load %arg6[%c0_102, %c144_103] : memref<1x256xf32, #tpu.memory_space<vmem>>, vector<1x16xf32>
      %cst_104 = arith.constant 2.500000e-01 : f32
      %115 = vector.broadcast %cst_104 : f32 to vector<1x16xf32>
      %116 = arith.mulf %114, %115 : vector<1x16xf32>
      %c1_105 = arith.constant 1 : index
      %c12_106 = arith.constant 12 : index
      %c3_107 = arith.constant 3 : index
      %117 = vector.load %arg7[%c1_105, %c12_106, %c3_107] : memref<2x22x22xf32, #tpu.memory_space<vmem>>, vector<1x1x16xf32>
      %118 = vector.shape_cast %117 : vector<1x1x16xf32> to vector<1x16xf32>
      %119 = vector.shape_cast %116 : vector<1x16xf32> to vector<1x1x16xf32>
      tpu.vector_store %arg7[%c1_105, %c12_106, %c3_107], %119 {strides = array<i32>} : memref<2x22x22xf32, #tpu.memory_space<vmem>>, vector<1x1x16xf32>,
      %c0_108 = arith.constant 0 : index
      %c160 = arith.constant 160 : index
      %120 = vector.load %arg5[%c0_108, %c160] : memref<1x256xf32, #tpu.memory_space<vmem>>, vector<1x16xf32>
      %c0_109 = arith.constant 0 : index
      %c13 = arith.constant 13 : index
      %c3_110 = arith.constant 3 : index
      %121 = vector.load %arg7[%c0_109, %c13, %c3_110] : memref<2x22x22xf32, #tpu.memory_space<vmem>>, vector<1x1x16xf32>
      %122 = vector.shape_cast %121 : vector<1x1x16xf32> to vector<1x16xf32>
      %123 = vector.shape_cast %120 : vector<1x16xf32> to vector<1x1x16xf32>
      tpu.vector_store %arg7[%c0_109, %c13, %c3_110], %123 {strides = array<i32>} : memref<2x22x22xf32, #tpu.memory_space<vmem>>, vector<1x1x16xf32>,
      %c0_111 = arith.constant 0 : index
      %c160_112 = arith.constant 160 : index
      %124 = vector.load %arg6[%c0_111, %c160_112] : memref<1x256xf32, #tpu.memory_space<vmem>>, vector<1x16xf32>
      %cst_113 = arith.constant 2.500000e-01 : f32
      %125 = vector.broadcast %cst_113 : f32 to vector<1x16xf32>
      %126 = arith.mulf %124, %125 : vector<1x16xf32>
      %c1_114 = arith.constant 1 : index
      %c13_115 = arith.constant 13 : index
      %c3_116 = arith.constant 3 : index
      %127 = vector.load %arg7[%c1_114, %c13_115, %c3_116] : memref<2x22x22xf32, #tpu.memory_space<vmem>>, vector<1x1x16xf32>
      %128 = vector.shape_cast %127 : vector<1x1x16xf32> to vector<1x16xf32>
      %129 = vector.shape_cast %126 : vector<1x16xf32> to vector<1x1x16xf32>
      tpu.vector_store %arg7[%c1_114, %c13_115, %c3_116], %129 {strides = array<i32>} : memref<2x22x22xf32, #tpu.memory_space<vmem>>, vector<1x1x16xf32>,
      %c0_117 = arith.constant 0 : index
      %c176 = arith.constant 176 : index
      %130 = vector.load %arg5[%c0_117, %c176] : memref<1x256xf32, #tpu.memory_space<vmem>>, vector<1x16xf32>
      %c0_118 = arith.constant 0 : index
      %c14 = arith.constant 14 : index
      %c3_119 = arith.constant 3 : index
      %131 = vector.load %arg7[%c0_118, %c14, %c3_119] : memref<2x22x22xf32, #tpu.memory_space<vmem>>, vector<1x1x16xf32>
      %132 = vector.shape_cast %131 : vector<1x1x16xf32> to vector<1x16xf32>
      %133 = vector.shape_cast %130 : vector<1x16xf32> to vector<1x1x16xf32>
      tpu.vector_store %arg7[%c0_118, %c14, %c3_119], %133 {strides = array<i32>} : memref<2x22x22xf32, #tpu.memory_space<vmem>>, vector<1x1x16xf32>,
      %c0_120 = arith.constant 0 : index
      %c176_121 = arith.constant 176 : index
      %134 = vector.load %arg6[%c0_120, %c176_121] : memref<1x256xf32, #tpu.memory_space<vmem>>, vector<1x16xf32>
      %cst_122 = arith.constant 2.500000e-01 : f32
      %135 = vector.broadcast %cst_122 : f32 to vector<1x16xf32>
      %136 = arith.mulf %134, %135 : vector<1x16xf32>
      %c1_123 = arith.constant 1 : index
      %c14_124 = arith.constant 14 : index
      %c3_125 = arith.constant 3 : index
      %137 = vector.load %arg7[%c1_123, %c14_124, %c3_125] : memref<2x22x22xf32, #tpu.memory_space<vmem>>, vector<1x1x16xf32>
      %138 = vector.shape_cast %137 : vector<1x1x16xf32> to vector<1x16xf32>
      %139 = vector.shape_cast %136 : vector<1x16xf32> to vector<1x1x16xf32>
      tpu.vector_store %arg7[%c1_123, %c14_124, %c3_125], %139 {strides = array<i32>} : memref<2x22x22xf32, #tpu.memory_space<vmem>>, vector<1x1x16xf32>,
      %c0_126 = arith.constant 0 : index
      %c192 = arith.constant 192 : index
      %140 = vector.load %arg5[%c0_126, %c192] : memref<1x256xf32, #tpu.memory_space<vmem>>, vector<1x16xf32>
      %c0_127 = arith.constant 0 : index
      %c15 = arith.constant 15 : index
      %c3_128 = arith.constant 3 : index
      %141 = vector.load %arg7[%c0_127, %c15, %c3_128] : memref<2x22x22xf32, #tpu.memory_space<vmem>>, vector<1x1x16xf32>
      %142 = vector.shape_cast %141 : vector<1x1x16xf32> to vector<1x16xf32>
      %143 = vector.shape_cast %140 : vector<1x16xf32> to vector<1x1x16xf32>
      tpu.vector_store %arg7[%c0_127, %c15, %c3_128], %143 {strides = array<i32>} : memref<2x22x22xf32, #tpu.memory_space<vmem>>, vector<1x1x16xf32>,
      %c0_129 = arith.constant 0 : index
      %c192_130 = arith.constant 192 : index
      %144 = vector.load %arg6[%c0_129, %c192_130] : memref<1x256xf32, #tpu.memory_space<vmem>>, vector<1x16xf32>
      %cst_131 = arith.constant 2.500000e-01 : f32
      %145 = vector.broadcast %cst_131 : f32 to vector<1x16xf32>
      %146 = arith.mulf %144, %145 : vector<1x16xf32>
      %c1_132 = arith.constant 1 : index
      %c15_133 = arith.constant 15 : index
      %c3_134 = arith.constant 3 : index
      %147 = vector.load %arg7[%c1_132, %c15_133, %c3_134] : memref<2x22x22xf32, #tpu.memory_space<vmem>>, vector<1x1x16xf32>
      %148 = vector.shape_cast %147 : vector<1x1x16xf32> to vector<1x16xf32>
      %149 = vector.shape_cast %146 : vector<1x16xf32> to vector<1x1x16xf32>
      tpu.vector_store %arg7[%c1_132, %c15_133, %c3_134], %149 {strides = array<i32>} : memref<2x22x22xf32, #tpu.memory_space<vmem>>, vector<1x1x16xf32>,
      %c0_135 = arith.constant 0 : index
      %c208 = arith.constant 208 : index
      %150 = vector.load %arg5[%c0_135, %c208] : memref<1x256xf32, #tpu.memory_space<vmem>>, vector<1x16xf32>
      %c0_136 = arith.constant 0 : index
      %c16_137 = arith.constant 16 : index
      %c3_138 = arith.constant 3 : index
      %151 = vector.load %arg7[%c0_136, %c16_137, %c3_138] : memref<2x22x22xf32, #tpu.memory_space<vmem>>, vector<1x1x16xf32>
      %152 = vector.shape_cast %151 : vector<1x1x16xf32> to vector<1x16xf32>
      %153 = vector.shape_cast %150 : vector<1x16xf32> to vector<1x1x16xf32>
      tpu.vector_store %arg7[%c0_136, %c16_137, %c3_138], %153 {strides = array<i32>} : memref<2x22x22xf32, #tpu.memory_space<vmem>>, vector<1x1x16xf32>,
      %c0_139 = arith.constant 0 : index
      %c208_140 = arith.constant 208 : index
      %154 = vector.load %arg6[%c0_139, %c208_140] : memref<1x256xf32, #tpu.memory_space<vmem>>, vector<1x16xf32>
      %cst_141 = arith.constant 2.500000e-01 : f32
      %155 = vector.broadcast %cst_141 : f32 to vector<1x16xf32>
      %156 = arith.mulf %154, %155 : vector<1x16xf32>
      %c1_142 = arith.constant 1 : index
      %c16_143 = arith.constant 16 : index
      %c3_144 = arith.constant 3 : index
      %157 = vector.load %arg7[%c1_142, %c16_143, %c3_144] : memref<2x22x22xf32, #tpu.memory_space<vmem>>, vector<1x1x16xf32>
      %158 = vector.shape_cast %157 : vector<1x1x16xf32> to vector<1x16xf32>
      %159 = vector.shape_cast %156 : vector<1x16xf32> to vector<1x1x16xf32>
      tpu.vector_store %arg7[%c1_142, %c16_143, %c3_144], %159 {strides = array<i32>} : memref<2x22x22xf32, #tpu.memory_space<vmem>>, vector<1x1x16xf32>,
      %c0_145 = arith.constant 0 : index
      %c224 = arith.constant 224 : index
      %160 = vector.load %arg5[%c0_145, %c224] : memref<1x256xf32, #tpu.memory_space<vmem>>, vector<1x16xf32>
      %c0_146 = arith.constant 0 : index
      %c17 = arith.constant 17 : index
      %c3_147 = arith.constant 3 : index
      %161 = vector.load %arg7[%c0_146, %c17, %c3_147] : memref<2x22x22xf32, #tpu.memory_space<vmem>>, vector<1x1x16xf32>
      %162 = vector.shape_cast %161 : vector<1x1x16xf32> to vector<1x16xf32>
      %163 = vector.shape_cast %160 : vector<1x16xf32> to vector<1x1x16xf32>
      tpu.vector_store %arg7[%c0_146, %c17, %c3_147], %163 {strides = array<i32>} : memref<2x22x22xf32, #tpu.memory_space<vmem>>, vector<1x1x16xf32>,
      %c0_148 = arith.constant 0 : index
      %c224_149 = arith.constant 224 : index
      %164 = vector.load %arg6[%c0_148, %c224_149] : memref<1x256xf32, #tpu.memory_space<vmem>>, vector<1x16xf32>
      %cst_150 = arith.constant 2.500000e-01 : f32
      %165 = vector.broadcast %cst_150 : f32 to vector<1x16xf32>
      %166 = arith.mulf %164, %165 : vector<1x16xf32>
      %c1_151 = arith.constant 1 : index
      %c17_152 = arith.constant 17 : index
      %c3_153 = arith.constant 3 : index
      %167 = vector.load %arg7[%c1_151, %c17_152, %c3_153] : memref<2x22x22xf32, #tpu.memory_space<vmem>>, vector<1x1x16xf32>
      %168 = vector.shape_cast %167 : vector<1x1x16xf32> to vector<1x16xf32>
      %169 = vector.shape_cast %166 : vector<1x16xf32> to vector<1x1x16xf32>
      tpu.vector_store %arg7[%c1_151, %c17_152, %c3_153], %169 {strides = array<i32>} : memref<2x22x22xf32, #tpu.memory_space<vmem>>, vector<1x1x16xf32>,
      %c0_154 = arith.constant 0 : index
      %c240 = arith.constant 240 : index
      %170 = vector.load %arg5[%c0_154, %c240] : memref<1x256xf32, #tpu.memory_space<vmem>>, vector<1x16xf32>
      %c0_155 = arith.constant 0 : index
      %c18 = arith.constant 18 : index
      %c3_156 = arith.constant 3 : index
      %171 = vector.load %arg7[%c0_155, %c18, %c3_156] : memref<2x22x22xf32, #tpu.memory_space<vmem>>, vector<1x1x16xf32>
      %172 = vector.shape_cast %171 : vector<1x1x16xf32> to vector<1x16xf32>
      %173 = vector.shape_cast %170 : vector<1x16xf32> to vector<1x1x16xf32>
      tpu.vector_store %arg7[%c0_155, %c18, %c3_156], %173 {strides = array<i32>} : memref<2x22x22xf32, #tpu.memory_space<vmem>>, vector<1x1x16xf32>,
      %c0_157 = arith.constant 0 : index
      %c240_158 = arith.constant 240 : index
      %174 = vector.load %arg6[%c0_157, %c240_158] : memref<1x256xf32, #tpu.memory_space<vmem>>, vector<1x16xf32>
      %cst_159 = arith.constant 2.500000e-01 : f32
      %175 = vector.broadcast %cst_159 : f32 to vector<1x16xf32>
      %176 = arith.mulf %174, %175 : vector<1x16xf32>
      %c1_160 = arith.constant 1 : index
      %c18_161 = arith.constant 18 : index
      %c3_162 = arith.constant 3 : index
      %177 = vector.load %arg7[%c1_160, %c18_161, %c3_162] : memref<2x22x22xf32, #tpu.memory_space<vmem>>, vector<1x1x16xf32>
      %178 = vector.shape_cast %177 : vector<1x1x16xf32> to vector<1x16xf32>
      %179 = vector.shape_cast %176 : vector<1x16xf32> to vector<1x1x16xf32>
      tpu.vector_store %arg7[%c1_160, %c18_161, %c3_162], %179 {strides = array<i32>} : memref<2x22x22xf32, #tpu.memory_space<vmem>>, vector<1x1x16xf32>,
      %cst_163 = arith.constant 0.000000e+00 : f32
      %180 = vector.broadcast %cst_163 : f32 to vector<16x16xf32>
      %c0_164 = arith.constant 0 : index
      %181 = memref.load %arg2[%c0_164] : memref<98xf32, #tpu.memory_space<smem>>
      %c0_165 = arith.constant 0 : index
      %c0_166 = arith.constant 0 : index
      %c0_167 = arith.constant 0 : index
      %182 = vector.load %arg7[%c0_165, %c0_166, %c0_167] : memref<2x22x22xf32, #tpu.memory_space<vmem>>, vector<1x16x16xf32>
      %183 = vector.shape_cast %182 : vector<1x16x16xf32> to vector<16x16xf32>
      %184 = vector.broadcast %181 : f32 to vector<16x16xf32>
      %185 = arith.mulf %184, %183 : vector<16x16xf32>
      %186 = arith.addf %180, %185 : vector<16x16xf32>
      %c1_168 = arith.constant 1 : index
      %187 = memref.load %arg2[%c1_168] : memref<98xf32, #tpu.memory_space<smem>>
      %c0_169 = arith.constant 0 : index
      %c0_170 = arith.constant 0 : index
      %c1_171 = arith.constant 1 : index
      %188 = vector.load %arg7[%c0_169, %c0_170, %c1_171] : memref<2x22x22xf32, #tpu.memory_space<vmem>>, vector<1x16x16xf32>
      %189 = vector.shape_cast %188 : vector<1x16x16xf32> to vector<16x16xf32>
      %190 = vector.broadcast %187 : f32 to vector<16x16xf32>
      %191 = arith.mulf %190, %189 : vector<16x16xf32>
      %192 = arith.addf %186, %191 : vector<16x16xf32>
      %c2 = arith.constant 2 : index
      %193 = memref.load %arg2[%c2] : memref<98xf32, #tpu.memory_space<smem>>
      %c0_172 = arith.constant 0 : index
      %c0_173 = arith.constant 0 : index
      %c2_174 = arith.constant 2 : index
      %194 = vector.load %arg7[%c0_172, %c0_173, %c2_174] : memref<2x22x22xf32, #tpu.memory_space<vmem>>, vector<1x16x16xf32>
      %195 = vector.shape_cast %194 : vector<1x16x16xf32> to vector<16x16xf32>
      %196 = vector.broadcast %193 : f32 to vector<16x16xf32>
      %197 = arith.mulf %196, %195 : vector<16x16xf32>
      %198 = arith.addf %192, %197 : vector<16x16xf32>
      %c3_175 = arith.constant 3 : index
      %199 = memref.load %arg2[%c3_175] : memref<98xf32, #tpu.memory_space<smem>>
      %c0_176 = arith.constant 0 : index
      %c0_177 = arith.constant 0 : index
      %c3_178 = arith.constant 3 : index
      %200 = vector.load %arg7[%c0_176, %c0_177, %c3_178] : memref<2x22x22xf32, #tpu.memory_space<vmem>>, vector<1x16x16xf32>
      %201 = vector.shape_cast %200 : vector<1x16x16xf32> to vector<16x16xf32>
      %202 = vector.broadcast %199 : f32 to vector<16x16xf32>
      %203 = arith.mulf %202, %201 : vector<16x16xf32>
      %204 = arith.addf %198, %203 : vector<16x16xf32>
      %c4_179 = arith.constant 4 : index
      %205 = memref.load %arg2[%c4_179] : memref<98xf32, #tpu.memory_space<smem>>
      %c0_180 = arith.constant 0 : index
      %c0_181 = arith.constant 0 : index
      %c4_182 = arith.constant 4 : index
      %206 = vector.load %arg7[%c0_180, %c0_181, %c4_182] : memref<2x22x22xf32, #tpu.memory_space<vmem>>, vector<1x16x16xf32>
      %207 = vector.shape_cast %206 : vector<1x16x16xf32> to vector<16x16xf32>
      %208 = vector.broadcast %205 : f32 to vector<16x16xf32>
      %209 = arith.mulf %208, %207 : vector<16x16xf32>
      %210 = arith.addf %204, %209 : vector<16x16xf32>
      %c5_183 = arith.constant 5 : index
      %211 = memref.load %arg2[%c5_183] : memref<98xf32, #tpu.memory_space<smem>>
      %c0_184 = arith.constant 0 : index
      %c0_185 = arith.constant 0 : index
      %c5_186 = arith.constant 5 : index
      %212 = vector.load %arg7[%c0_184, %c0_185, %c5_186] : memref<2x22x22xf32, #tpu.memory_space<vmem>>, vector<1x16x16xf32>
      %213 = vector.shape_cast %212 : vector<1x16x16xf32> to vector<16x16xf32>
      %214 = vector.broadcast %211 : f32 to vector<16x16xf32>
      %215 = arith.mulf %214, %213 : vector<16x16xf32>
      %216 = arith.addf %210, %215 : vector<16x16xf32>
      %c6_187 = arith.constant 6 : index
      %217 = memref.load %arg2[%c6_187] : memref<98xf32, #tpu.memory_space<smem>>
      %c0_188 = arith.constant 0 : index
      %c0_189 = arith.constant 0 : index
      %c6_190 = arith.constant 6 : index
      %218 = vector.load %arg7[%c0_188, %c0_189, %c6_190] : memref<2x22x22xf32, #tpu.memory_space<vmem>>, vector<1x16x16xf32>
      %219 = vector.shape_cast %218 : vector<1x16x16xf32> to vector<16x16xf32>
      %220 = vector.broadcast %217 : f32 to vector<16x16xf32>
      %221 = arith.mulf %220, %219 : vector<16x16xf32>
      %222 = arith.addf %216, %221 : vector<16x16xf32>
      %c7_191 = arith.constant 7 : index
      %223 = memref.load %arg2[%c7_191] : memref<98xf32, #tpu.memory_space<smem>>
      %c0_192 = arith.constant 0 : index
      %c1_193 = arith.constant 1 : index
      %c0_194 = arith.constant 0 : index
      %224 = vector.load %arg7[%c0_192, %c1_193, %c0_194] : memref<2x22x22xf32, #tpu.memory_space<vmem>>, vector<1x16x16xf32>
      %225 = vector.shape_cast %224 : vector<1x16x16xf32> to vector<16x16xf32>
      %226 = vector.broadcast %223 : f32 to vector<16x16xf32>
      %227 = arith.mulf %226, %225 : vector<16x16xf32>
      %228 = arith.addf %222, %227 : vector<16x16xf32>
      %c8_195 = arith.constant 8 : index
      %229 = memref.load %arg2[%c8_195] : memref<98xf32, #tpu.memory_space<smem>>
      %c0_196 = arith.constant 0 : index
      %c1_197 = arith.constant 1 : index
      %c1_198 = arith.constant 1 : index
      %230 = vector.load %arg7[%c0_196, %c1_197, %c1_198] : memref<2x22x22xf32, #tpu.memory_space<vmem>>, vector<1x16x16xf32>
      %231 = vector.shape_cast %230 : vector<1x16x16xf32> to vector<16x16xf32>
      %232 = vector.broadcast %229 : f32 to vector<16x16xf32>
      %233 = arith.mulf %232, %231 : vector<16x16xf32>
      %234 = arith.addf %228, %233 : vector<16x16xf32>
      %c9_199 = arith.constant 9 : index
      %235 = memref.load %arg2[%c9_199] : memref<98xf32, #tpu.memory_space<smem>>
      %c0_200 = arith.constant 0 : index
      %c1_201 = arith.constant 1 : index
      %c2_202 = arith.constant 2 : index
      %236 = vector.load %arg7[%c0_200, %c1_201, %c2_202] : memref<2x22x22xf32, #tpu.memory_space<vmem>>, vector<1x16x16xf32>
      %237 = vector.shape_cast %236 : vector<1x16x16xf32> to vector<16x16xf32>
      %238 = vector.broadcast %235 : f32 to vector<16x16xf32>
      %239 = arith.mulf %238, %237 : vector<16x16xf32>
      %240 = arith.addf %234, %239 : vector<16x16xf32>
      %c10_203 = arith.constant 10 : index
      %241 = memref.load %arg2[%c10_203] : memref<98xf32, #tpu.memory_space<smem>>
      %c0_204 = arith.constant 0 : index
      %c1_205 = arith.constant 1 : index
      %c3_206 = arith.constant 3 : index
      %242 = vector.load %arg7[%c0_204, %c1_205, %c3_206] : memref<2x22x22xf32, #tpu.memory_space<vmem>>, vector<1x16x16xf32>
      %243 = vector.shape_cast %242 : vector<1x16x16xf32> to vector<16x16xf32>
      %244 = vector.broadcast %241 : f32 to vector<16x16xf32>
      %245 = arith.mulf %244, %243 : vector<16x16xf32>
      %246 = arith.addf %240, %245 : vector<16x16xf32>
      %c11_207 = arith.constant 11 : index
      %247 = memref.load %arg2[%c11_207] : memref<98xf32, #tpu.memory_space<smem>>
      %c0_208 = arith.constant 0 : index
      %c1_209 = arith.constant 1 : index
      %c4_210 = arith.constant 4 : index
      %248 = vector.load %arg7[%c0_208, %c1_209, %c4_210] : memref<2x22x22xf32, #tpu.memory_space<vmem>>, vector<1x16x16xf32>
      %249 = vector.shape_cast %248 : vector<1x16x16xf32> to vector<16x16xf32>
      %250 = vector.broadcast %247 : f32 to vector<16x16xf32>
      %251 = arith.mulf %250, %249 : vector<16x16xf32>
      %252 = arith.addf %246, %251 : vector<16x16xf32>
      %c12_211 = arith.constant 12 : index
      %253 = memref.load %arg2[%c12_211] : memref<98xf32, #tpu.memory_space<smem>>
      %c0_212 = arith.constant 0 : index
      %c1_213 = arith.constant 1 : index
      %c5_214 = arith.constant 5 : index
      %254 = vector.load %arg7[%c0_212, %c1_213, %c5_214] : memref<2x22x22xf32, #tpu.memory_space<vmem>>, vector<1x16x16xf32>
      %255 = vector.shape_cast %254 : vector<1x16x16xf32> to vector<16x16xf32>
      %256 = vector.broadcast %253 : f32 to vector<16x16xf32>
      %257 = arith.mulf %256, %255 : vector<16x16xf32>
      %258 = arith.addf %252, %257 : vector<16x16xf32>
      %c13_215 = arith.constant 13 : index
      %259 = memref.load %arg2[%c13_215] : memref<98xf32, #tpu.memory_space<smem>>
      %c0_216 = arith.constant 0 : index
      %c1_217 = arith.constant 1 : index
      %c6_218 = arith.constant 6 : index
      %260 = vector.load %arg7[%c0_216, %c1_217, %c6_218] : memref<2x22x22xf32, #tpu.memory_space<vmem>>, vector<1x16x16xf32>
      %261 = vector.shape_cast %260 : vector<1x16x16xf32> to vector<16x16xf32>
      %262 = vector.broadcast %259 : f32 to vector<16x16xf32>
      %263 = arith.mulf %262, %261 : vector<16x16xf32>
      %264 = arith.addf %258, %263 : vector<16x16xf32>
      %c14_219 = arith.constant 14 : index
      %265 = memref.load %arg2[%c14_219] : memref<98xf32, #tpu.memory_space<smem>>
      %c0_220 = arith.constant 0 : index
      %c2_221 = arith.constant 2 : index
      %c0_222 = arith.constant 0 : index
      %266 = vector.load %arg7[%c0_220, %c2_221, %c0_222] : memref<2x22x22xf32, #tpu.memory_space<vmem>>, vector<1x16x16xf32>
      %267 = vector.shape_cast %266 : vector<1x16x16xf32> to vector<16x16xf32>
      %268 = vector.broadcast %265 : f32 to vector<16x16xf32>
      %269 = arith.mulf %268, %267 : vector<16x16xf32>
      %270 = arith.addf %264, %269 : vector<16x16xf32>
      %c15_223 = arith.constant 15 : index
      %271 = memref.load %arg2[%c15_223] : memref<98xf32, #tpu.memory_space<smem>>
      %c0_224 = arith.constant 0 : index
      %c2_225 = arith.constant 2 : index
      %c1_226 = arith.constant 1 : index
      %272 = vector.load %arg7[%c0_224, %c2_225, %c1_226] : memref<2x22x22xf32, #tpu.memory_space<vmem>>, vector<1x16x16xf32>
      %273 = vector.shape_cast %272 : vector<1x16x16xf32> to vector<16x16xf32>
      %274 = vector.broadcast %271 : f32 to vector<16x16xf32>
      %275 = arith.mulf %274, %273 : vector<16x16xf32>
      %276 = arith.addf %270, %275 : vector<16x16xf32>
      %c16_227 = arith.constant 16 : index
      %277 = memref.load %arg2[%c16_227] : memref<98xf32, #tpu.memory_space<smem>>
      %c0_228 = arith.constant 0 : index
      %c2_229 = arith.constant 2 : index
      %c2_230 = arith.constant 2 : index
      %278 = vector.load %arg7[%c0_228, %c2_229, %c2_230] : memref<2x22x22xf32, #tpu.memory_space<vmem>>, vector<1x16x16xf32>
      %279 = vector.shape_cast %278 : vector<1x16x16xf32> to vector<16x16xf32>
      %280 = vector.broadcast %277 : f32 to vector<16x16xf32>
      %281 = arith.mulf %280, %279 : vector<16x16xf32>
      %282 = arith.addf %276, %281 : vector<16x16xf32>
      %c17_231 = arith.constant 17 : index
      %283 = memref.load %arg2[%c17_231] : memref<98xf32, #tpu.memory_space<smem>>
      %c0_232 = arith.constant 0 : index
      %c2_233 = arith.constant 2 : index
      %c3_234 = arith.constant 3 : index
      %284 = vector.load %arg7[%c0_232, %c2_233, %c3_234] : memref<2x22x22xf32, #tpu.memory_space<vmem>>, vector<1x16x16xf32>
      %285 = vector.shape_cast %284 : vector<1x16x16xf32> to vector<16x16xf32>
      %286 = vector.broadcast %283 : f32 to vector<16x16xf32>
      %287 = arith.mulf %286, %285 : vector<16x16xf32>
      %288 = arith.addf %282, %287 : vector<16x16xf32>
      %c18_235 = arith.constant 18 : index
      %289 = memref.load %arg2[%c18_235] : memref<98xf32, #tpu.memory_space<smem>>
      %c0_236 = arith.constant 0 : index
      %c2_237 = arith.constant 2 : index
      %c4_238 = arith.constant 4 : index
      %290 = vector.load %arg7[%c0_236, %c2_237, %c4_238] : memref<2x22x22xf32, #tpu.memory_space<vmem>>, vector<1x16x16xf32>
      %291 = vector.shape_cast %290 : vector<1x16x16xf32> to vector<16x16xf32>
      %292 = vector.broadcast %289 : f32 to vector<16x16xf32>
      %293 = arith.mulf %292, %291 : vector<16x16xf32>
      %294 = arith.addf %288, %293 : vector<16x16xf32>
      %c19 = arith.constant 19 : index
      %295 = memref.load %arg2[%c19] : memref<98xf32, #tpu.memory_space<smem>>
      %c0_239 = arith.constant 0 : index
      %c2_240 = arith.constant 2 : index
      %c5_241 = arith.constant 5 : index
      %296 = vector.load %arg7[%c0_239, %c2_240, %c5_241] : memref<2x22x22xf32, #tpu.memory_space<vmem>>, vector<1x16x16xf32>
      %297 = vector.shape_cast %296 : vector<1x16x16xf32> to vector<16x16xf32>
      %298 = vector.broadcast %295 : f32 to vector<16x16xf32>
      %299 = arith.mulf %298, %297 : vector<16x16xf32>
      %300 = arith.addf %294, %299 : vector<16x16xf32>
      %c20 = arith.constant 20 : index
      %301 = memref.load %arg2[%c20] : memref<98xf32, #tpu.memory_space<smem>>
      %c0_242 = arith.constant 0 : index
      %c2_243 = arith.constant 2 : index
      %c6_244 = arith.constant 6 : index
      %302 = vector.load %arg7[%c0_242, %c2_243, %c6_244] : memref<2x22x22xf32, #tpu.memory_space<vmem>>, vector<1x16x16xf32>
      %303 = vector.shape_cast %302 : vector<1x16x16xf32> to vector<16x16xf32>
      %304 = vector.broadcast %301 : f32 to vector<16x16xf32>
      %305 = arith.mulf %304, %303 : vector<16x16xf32>
      %306 = arith.addf %300, %305 : vector<16x16xf32>
      %c21 = arith.constant 21 : index
      %307 = memref.load %arg2[%c21] : memref<98xf32, #tpu.memory_space<smem>>
      %c0_245 = arith.constant 0 : index
      %c3_246 = arith.constant 3 : index
      %c0_247 = arith.constant 0 : index
      %308 = vector.load %arg7[%c0_245, %c3_246, %c0_247] : memref<2x22x22xf32, #tpu.memory_space<vmem>>, vector<1x16x16xf32>
      %309 = vector.shape_cast %308 : vector<1x16x16xf32> to vector<16x16xf32>
      %310 = vector.broadcast %307 : f32 to vector<16x16xf32>
      %311 = arith.mulf %310, %309 : vector<16x16xf32>
      %312 = arith.addf %306, %311 : vector<16x16xf32>
      %c22 = arith.constant 22 : index
      %313 = memref.load %arg2[%c22] : memref<98xf32, #tpu.memory_space<smem>>
      %c0_248 = arith.constant 0 : index
      %c3_249 = arith.constant 3 : index
      %c1_250 = arith.constant 1 : index
      %314 = vector.load %arg7[%c0_248, %c3_249, %c1_250] : memref<2x22x22xf32, #tpu.memory_space<vmem>>, vector<1x16x16xf32>
      %315 = vector.shape_cast %314 : vector<1x16x16xf32> to vector<16x16xf32>
      %316 = vector.broadcast %313 : f32 to vector<16x16xf32>
      %317 = arith.mulf %316, %315 : vector<16x16xf32>
      %318 = arith.addf %312, %317 : vector<16x16xf32>
      %c23 = arith.constant 23 : index
      %319 = memref.load %arg2[%c23] : memref<98xf32, #tpu.memory_space<smem>>
      %c0_251 = arith.constant 0 : index
      %c3_252 = arith.constant 3 : index
      %c2_253 = arith.constant 2 : index
      %320 = vector.load %arg7[%c0_251, %c3_252, %c2_253] : memref<2x22x22xf32, #tpu.memory_space<vmem>>, vector<1x16x16xf32>
      %321 = vector.shape_cast %320 : vector<1x16x16xf32> to vector<16x16xf32>
      %322 = vector.broadcast %319 : f32 to vector<16x16xf32>
      %323 = arith.mulf %322, %321 : vector<16x16xf32>
      %324 = arith.addf %318, %323 : vector<16x16xf32>
      %c24 = arith.constant 24 : index
      %325 = memref.load %arg2[%c24] : memref<98xf32, #tpu.memory_space<smem>>
      %c0_254 = arith.constant 0 : index
      %c3_255 = arith.constant 3 : index
      %c3_256 = arith.constant 3 : index
      %326 = vector.load %arg7[%c0_254, %c3_255, %c3_256] : memref<2x22x22xf32, #tpu.memory_space<vmem>>, vector<1x16x16xf32>
      %327 = vector.shape_cast %326 : vector<1x16x16xf32> to vector<16x16xf32>
      %328 = vector.broadcast %325 : f32 to vector<16x16xf32>
      %329 = arith.mulf %328, %327 : vector<16x16xf32>
      %330 = arith.addf %324, %329 : vector<16x16xf32>
      %c25 = arith.constant 25 : index
      %331 = memref.load %arg2[%c25] : memref<98xf32, #tpu.memory_space<smem>>
      %c0_257 = arith.constant 0 : index
      %c3_258 = arith.constant 3 : index
      %c4_259 = arith.constant 4 : index
      %332 = vector.load %arg7[%c0_257, %c3_258, %c4_259] : memref<2x22x22xf32, #tpu.memory_space<vmem>>, vector<1x16x16xf32>
      %333 = vector.shape_cast %332 : vector<1x16x16xf32> to vector<16x16xf32>
      %334 = vector.broadcast %331 : f32 to vector<16x16xf32>
      %335 = arith.mulf %334, %333 : vector<16x16xf32>
      %336 = arith.addf %330, %335 : vector<16x16xf32>
      %c26 = arith.constant 26 : index
      %337 = memref.load %arg2[%c26] : memref<98xf32, #tpu.memory_space<smem>>
      %c0_260 = arith.constant 0 : index
      %c3_261 = arith.constant 3 : index
      %c5_262 = arith.constant 5 : index
      %338 = vector.load %arg7[%c0_260, %c3_261, %c5_262] : memref<2x22x22xf32, #tpu.memory_space<vmem>>, vector<1x16x16xf32>
      %339 = vector.shape_cast %338 : vector<1x16x16xf32> to vector<16x16xf32>
      %340 = vector.broadcast %337 : f32 to vector<16x16xf32>
      %341 = arith.mulf %340, %339 : vector<16x16xf32>
      %342 = arith.addf %336, %341 : vector<16x16xf32>
      %c27 = arith.constant 27 : index
      %343 = memref.load %arg2[%c27] : memref<98xf32, #tpu.memory_space<smem>>
      %c0_263 = arith.constant 0 : index
      %c3_264 = arith.constant 3 : index
      %c6_265 = arith.constant 6 : index
      %344 = vector.load %arg7[%c0_263, %c3_264, %c6_265] : memref<2x22x22xf32, #tpu.memory_space<vmem>>, vector<1x16x16xf32>
      %345 = vector.shape_cast %344 : vector<1x16x16xf32> to vector<16x16xf32>
      %346 = vector.broadcast %343 : f32 to vector<16x16xf32>
      %347 = arith.mulf %346, %345 : vector<16x16xf32>
      %348 = arith.addf %342, %347 : vector<16x16xf32>
      %c28 = arith.constant 28 : index
      %349 = memref.load %arg2[%c28] : memref<98xf32, #tpu.memory_space<smem>>
      %c0_266 = arith.constant 0 : index
      %c4_267 = arith.constant 4 : index
      %c0_268 = arith.constant 0 : index
      %350 = vector.load %arg7[%c0_266, %c4_267, %c0_268] : memref<2x22x22xf32, #tpu.memory_space<vmem>>, vector<1x16x16xf32>
      %351 = vector.shape_cast %350 : vector<1x16x16xf32> to vector<16x16xf32>
      %352 = vector.broadcast %349 : f32 to vector<16x16xf32>
      %353 = arith.mulf %352, %351 : vector<16x16xf32>
      %354 = arith.addf %348, %353 : vector<16x16xf32>
      %c29 = arith.constant 29 : index
      %355 = memref.load %arg2[%c29] : memref<98xf32, #tpu.memory_space<smem>>
      %c0_269 = arith.constant 0 : index
      %c4_270 = arith.constant 4 : index
      %c1_271 = arith.constant 1 : index
      %356 = vector.load %arg7[%c0_269, %c4_270, %c1_271] : memref<2x22x22xf32, #tpu.memory_space<vmem>>, vector<1x16x16xf32>
      %357 = vector.shape_cast %356 : vector<1x16x16xf32> to vector<16x16xf32>
      %358 = vector.broadcast %355 : f32 to vector<16x16xf32>
      %359 = arith.mulf %358, %357 : vector<16x16xf32>
      %360 = arith.addf %354, %359 : vector<16x16xf32>
      %c30 = arith.constant 30 : index
      %361 = memref.load %arg2[%c30] : memref<98xf32, #tpu.memory_space<smem>>
      %c0_272 = arith.constant 0 : index
      %c4_273 = arith.constant 4 : index
      %c2_274 = arith.constant 2 : index
      %362 = vector.load %arg7[%c0_272, %c4_273, %c2_274] : memref<2x22x22xf32, #tpu.memory_space<vmem>>, vector<1x16x16xf32>
      %363 = vector.shape_cast %362 : vector<1x16x16xf32> to vector<16x16xf32>
      %364 = vector.broadcast %361 : f32 to vector<16x16xf32>
      %365 = arith.mulf %364, %363 : vector<16x16xf32>
      %366 = arith.addf %360, %365 : vector<16x16xf32>
      %c31 = arith.constant 31 : index
      %367 = memref.load %arg2[%c31] : memref<98xf32, #tpu.memory_space<smem>>
      %c0_275 = arith.constant 0 : index
      %c4_276 = arith.constant 4 : index
      %c3_277 = arith.constant 3 : index
      %368 = vector.load %arg7[%c0_275, %c4_276, %c3_277] : memref<2x22x22xf32, #tpu.memory_space<vmem>>, vector<1x16x16xf32>
      %369 = vector.shape_cast %368 : vector<1x16x16xf32> to vector<16x16xf32>
      %370 = vector.broadcast %367 : f32 to vector<16x16xf32>
      %371 = arith.mulf %370, %369 : vector<16x16xf32>
      %372 = arith.addf %366, %371 : vector<16x16xf32>
      %c32_278 = arith.constant 32 : index
      %373 = memref.load %arg2[%c32_278] : memref<98xf32, #tpu.memory_space<smem>>
      %c0_279 = arith.constant 0 : index
      %c4_280 = arith.constant 4 : index
      %c4_281 = arith.constant 4 : index
      %374 = vector.load %arg7[%c0_279, %c4_280, %c4_281] : memref<2x22x22xf32, #tpu.memory_space<vmem>>, vector<1x16x16xf32>
      %375 = vector.shape_cast %374 : vector<1x16x16xf32> to vector<16x16xf32>
      %376 = vector.broadcast %373 : f32 to vector<16x16xf32>
      %377 = arith.mulf %376, %375 : vector<16x16xf32>
      %378 = arith.addf %372, %377 : vector<16x16xf32>
      %c33 = arith.constant 33 : index
      %379 = memref.load %arg2[%c33] : memref<98xf32, #tpu.memory_space<smem>>
      %c0_282 = arith.constant 0 : index
      %c4_283 = arith.constant 4 : index
      %c5_284 = arith.constant 5 : index
      %380 = vector.load %arg7[%c0_282, %c4_283, %c5_284] : memref<2x22x22xf32, #tpu.memory_space<vmem>>, vector<1x16x16xf32>
      %381 = vector.shape_cast %380 : vector<1x16x16xf32> to vector<16x16xf32>
      %382 = vector.broadcast %379 : f32 to vector<16x16xf32>
      %383 = arith.mulf %382, %381 : vector<16x16xf32>
      %384 = arith.addf %378, %383 : vector<16x16xf32>
      %c34 = arith.constant 34 : index
      %385 = memref.load %arg2[%c34] : memref<98xf32, #tpu.memory_space<smem>>
      %c0_285 = arith.constant 0 : index
      %c4_286 = arith.constant 4 : index
      %c6_287 = arith.constant 6 : index
      %386 = vector.load %arg7[%c0_285, %c4_286, %c6_287] : memref<2x22x22xf32, #tpu.memory_space<vmem>>, vector<1x16x16xf32>
      %387 = vector.shape_cast %386 : vector<1x16x16xf32> to vector<16x16xf32>
      %388 = vector.broadcast %385 : f32 to vector<16x16xf32>
      %389 = arith.mulf %388, %387 : vector<16x16xf32>
      %390 = arith.addf %384, %389 : vector<16x16xf32>
      %c35 = arith.constant 35 : index
      %391 = memref.load %arg2[%c35] : memref<98xf32, #tpu.memory_space<smem>>
      %c0_288 = arith.constant 0 : index
      %c5_289 = arith.constant 5 : index
      %c0_290 = arith.constant 0 : index
      %392 = vector.load %arg7[%c0_288, %c5_289, %c0_290] : memref<2x22x22xf32, #tpu.memory_space<vmem>>, vector<1x16x16xf32>
      %393 = vector.shape_cast %392 : vector<1x16x16xf32> to vector<16x16xf32>
      %394 = vector.broadcast %391 : f32 to vector<16x16xf32>
      %395 = arith.mulf %394, %393 : vector<16x16xf32>
      %396 = arith.addf %390, %395 : vector<16x16xf32>
      %c36 = arith.constant 36 : index
      %397 = memref.load %arg2[%c36] : memref<98xf32, #tpu.memory_space<smem>>
      %c0_291 = arith.constant 0 : index
      %c5_292 = arith.constant 5 : index
      %c1_293 = arith.constant 1 : index
      %398 = vector.load %arg7[%c0_291, %c5_292, %c1_293] : memref<2x22x22xf32, #tpu.memory_space<vmem>>, vector<1x16x16xf32>
      %399 = vector.shape_cast %398 : vector<1x16x16xf32> to vector<16x16xf32>
      %400 = vector.broadcast %397 : f32 to vector<16x16xf32>
      %401 = arith.mulf %400, %399 : vector<16x16xf32>
      %402 = arith.addf %396, %401 : vector<16x16xf32>
      %c37 = arith.constant 37 : index
      %403 = memref.load %arg2[%c37] : memref<98xf32, #tpu.memory_space<smem>>
      %c0_294 = arith.constant 0 : index
      %c5_295 = arith.constant 5 : index
      %c2_296 = arith.constant 2 : index
      %404 = vector.load %arg7[%c0_294, %c5_295, %c2_296] : memref<2x22x22xf32, #tpu.memory_space<vmem>>, vector<1x16x16xf32>
      %405 = vector.shape_cast %404 : vector<1x16x16xf32> to vector<16x16xf32>
      %406 = vector.broadcast %403 : f32 to vector<16x16xf32>
      %407 = arith.mulf %406, %405 : vector<16x16xf32>
      %408 = arith.addf %402, %407 : vector<16x16xf32>
      %c38 = arith.constant 38 : index
      %409 = memref.load %arg2[%c38] : memref<98xf32, #tpu.memory_space<smem>>
      %c0_297 = arith.constant 0 : index
      %c5_298 = arith.constant 5 : index
      %c3_299 = arith.constant 3 : index
      %410 = vector.load %arg7[%c0_297, %c5_298, %c3_299] : memref<2x22x22xf32, #tpu.memory_space<vmem>>, vector<1x16x16xf32>
      %411 = vector.shape_cast %410 : vector<1x16x16xf32> to vector<16x16xf32>
      %412 = vector.broadcast %409 : f32 to vector<16x16xf32>
      %413 = arith.mulf %412, %411 : vector<16x16xf32>
      %414 = arith.addf %408, %413 : vector<16x16xf32>
      %c39 = arith.constant 39 : index
      %415 = memref.load %arg2[%c39] : memref<98xf32, #tpu.memory_space<smem>>
      %c0_300 = arith.constant 0 : index
      %c5_301 = arith.constant 5 : index
      %c4_302 = arith.constant 4 : index
      %416 = vector.load %arg7[%c0_300, %c5_301, %c4_302] : memref<2x22x22xf32, #tpu.memory_space<vmem>>, vector<1x16x16xf32>
      %417 = vector.shape_cast %416 : vector<1x16x16xf32> to vector<16x16xf32>
      %418 = vector.broadcast %415 : f32 to vector<16x16xf32>
      %419 = arith.mulf %418, %417 : vector<16x16xf32>
      %420 = arith.addf %414, %419 : vector<16x16xf32>
      %c40 = arith.constant 40 : index
      %421 = memref.load %arg2[%c40] : memref<98xf32, #tpu.memory_space<smem>>
      %c0_303 = arith.constant 0 : index
      %c5_304 = arith.constant 5 : index
      %c5_305 = arith.constant 5 : index
      %422 = vector.load %arg7[%c0_303, %c5_304, %c5_305] : memref<2x22x22xf32, #tpu.memory_space<vmem>>, vector<1x16x16xf32>
      %423 = vector.shape_cast %422 : vector<1x16x16xf32> to vector<16x16xf32>
      %424 = vector.broadcast %421 : f32 to vector<16x16xf32>
      %425 = arith.mulf %424, %423 : vector<16x16xf32>
      %426 = arith.addf %420, %425 : vector<16x16xf32>
      %c41 = arith.constant 41 : index
      %427 = memref.load %arg2[%c41] : memref<98xf32, #tpu.memory_space<smem>>
      %c0_306 = arith.constant 0 : index
      %c5_307 = arith.constant 5 : index
      %c6_308 = arith.constant 6 : index
      %428 = vector.load %arg7[%c0_306, %c5_307, %c6_308] : memref<2x22x22xf32, #tpu.memory_space<vmem>>, vector<1x16x16xf32>
      %429 = vector.shape_cast %428 : vector<1x16x16xf32> to vector<16x16xf32>
      %430 = vector.broadcast %427 : f32 to vector<16x16xf32>
      %431 = arith.mulf %430, %429 : vector<16x16xf32>
      %432 = arith.addf %426, %431 : vector<16x16xf32>
      %c42 = arith.constant 42 : index
      %433 = memref.load %arg2[%c42] : memref<98xf32, #tpu.memory_space<smem>>
      %c0_309 = arith.constant 0 : index
      %c6_310 = arith.constant 6 : index
      %c0_311 = arith.constant 0 : index
      %434 = vector.load %arg7[%c0_309, %c6_310, %c0_311] : memref<2x22x22xf32, #tpu.memory_space<vmem>>, vector<1x16x16xf32>
      %435 = vector.shape_cast %434 : vector<1x16x16xf32> to vector<16x16xf32>
      %436 = vector.broadcast %433 : f32 to vector<16x16xf32>
      %437 = arith.mulf %436, %435 : vector<16x16xf32>
      %438 = arith.addf %432, %437 : vector<16x16xf32>
      %c43 = arith.constant 43 : index
      %439 = memref.load %arg2[%c43] : memref<98xf32, #tpu.memory_space<smem>>
      %c0_312 = arith.constant 0 : index
      %c6_313 = arith.constant 6 : index
      %c1_314 = arith.constant 1 : index
      %440 = vector.load %arg7[%c0_312, %c6_313, %c1_314] : memref<2x22x22xf32, #tpu.memory_space<vmem>>, vector<1x16x16xf32>
      %441 = vector.shape_cast %440 : vector<1x16x16xf32> to vector<16x16xf32>
      %442 = vector.broadcast %439 : f32 to vector<16x16xf32>
      %443 = arith.mulf %442, %441 : vector<16x16xf32>
      %444 = arith.addf %438, %443 : vector<16x16xf32>
      %c44 = arith.constant 44 : index
      %445 = memref.load %arg2[%c44] : memref<98xf32, #tpu.memory_space<smem>>
      %c0_315 = arith.constant 0 : index
      %c6_316 = arith.constant 6 : index
      %c2_317 = arith.constant 2 : index
      %446 = vector.load %arg7[%c0_315, %c6_316, %c2_317] : memref<2x22x22xf32, #tpu.memory_space<vmem>>, vector<1x16x16xf32>
      %447 = vector.shape_cast %446 : vector<1x16x16xf32> to vector<16x16xf32>
      %448 = vector.broadcast %445 : f32 to vector<16x16xf32>
      %449 = arith.mulf %448, %447 : vector<16x16xf32>
      %450 = arith.addf %444, %449 : vector<16x16xf32>
      %c45 = arith.constant 45 : index
      %451 = memref.load %arg2[%c45] : memref<98xf32, #tpu.memory_space<smem>>
      %c0_318 = arith.constant 0 : index
      %c6_319 = arith.constant 6 : index
      %c3_320 = arith.constant 3 : index
      %452 = vector.load %arg7[%c0_318, %c6_319, %c3_320] : memref<2x22x22xf32, #tpu.memory_space<vmem>>, vector<1x16x16xf32>
      %453 = vector.shape_cast %452 : vector<1x16x16xf32> to vector<16x16xf32>
      %454 = vector.broadcast %451 : f32 to vector<16x16xf32>
      %455 = arith.mulf %454, %453 : vector<16x16xf32>
      %456 = arith.addf %450, %455 : vector<16x16xf32>
      %c46 = arith.constant 46 : index
      %457 = memref.load %arg2[%c46] : memref<98xf32, #tpu.memory_space<smem>>
      %c0_321 = arith.constant 0 : index
      %c6_322 = arith.constant 6 : index
      %c4_323 = arith.constant 4 : index
      %458 = vector.load %arg7[%c0_321, %c6_322, %c4_323] : memref<2x22x22xf32, #tpu.memory_space<vmem>>, vector<1x16x16xf32>
      %459 = vector.shape_cast %458 : vector<1x16x16xf32> to vector<16x16xf32>
      %460 = vector.broadcast %457 : f32 to vector<16x16xf32>
      %461 = arith.mulf %460, %459 : vector<16x16xf32>
      %462 = arith.addf %456, %461 : vector<16x16xf32>
      %c47 = arith.constant 47 : index
      %463 = memref.load %arg2[%c47] : memref<98xf32, #tpu.memory_space<smem>>
      %c0_324 = arith.constant 0 : index
      %c6_325 = arith.constant 6 : index
      %c5_326 = arith.constant 5 : index
      %464 = vector.load %arg7[%c0_324, %c6_325, %c5_326] : memref<2x22x22xf32, #tpu.memory_space<vmem>>, vector<1x16x16xf32>
      %465 = vector.shape_cast %464 : vector<1x16x16xf32> to vector<16x16xf32>
      %466 = vector.broadcast %463 : f32 to vector<16x16xf32>
      %467 = arith.mulf %466, %465 : vector<16x16xf32>
      %468 = arith.addf %462, %467 : vector<16x16xf32>
      %c48_327 = arith.constant 48 : index
      %469 = memref.load %arg2[%c48_327] : memref<98xf32, #tpu.memory_space<smem>>
      %c0_328 = arith.constant 0 : index
      %c6_329 = arith.constant 6 : index
      %c6_330 = arith.constant 6 : index
      %470 = vector.load %arg7[%c0_328, %c6_329, %c6_330] : memref<2x22x22xf32, #tpu.memory_space<vmem>>, vector<1x16x16xf32>
      %471 = vector.shape_cast %470 : vector<1x16x16xf32> to vector<16x16xf32>
      %472 = vector.broadcast %469 : f32 to vector<16x16xf32>
      %473 = arith.mulf %472, %471 : vector<16x16xf32>
      %474 = arith.addf %468, %473 : vector<16x16xf32>
      %c49 = arith.constant 49 : index
      %475 = memref.load %arg2[%c49] : memref<98xf32, #tpu.memory_space<smem>>
      %c1_331 = arith.constant 1 : index
      %c0_332 = arith.constant 0 : index
      %c0_333 = arith.constant 0 : index
      %476 = vector.load %arg7[%c1_331, %c0_332, %c0_333] : memref<2x22x22xf32, #tpu.memory_space<vmem>>, vector<1x16x16xf32>
      %477 = vector.shape_cast %476 : vector<1x16x16xf32> to vector<16x16xf32>
      %478 = vector.broadcast %475 : f32 to vector<16x16xf32>
      %479 = arith.mulf %478, %477 : vector<16x16xf32>
      %480 = arith.addf %474, %479 : vector<16x16xf32>
      %c50 = arith.constant 50 : index
      %481 = memref.load %arg2[%c50] : memref<98xf32, #tpu.memory_space<smem>>
      %c1_334 = arith.constant 1 : index
      %c0_335 = arith.constant 0 : index
      %c1_336 = arith.constant 1 : index
      %482 = vector.load %arg7[%c1_334, %c0_335, %c1_336] : memref<2x22x22xf32, #tpu.memory_space<vmem>>, vector<1x16x16xf32>
      %483 = vector.shape_cast %482 : vector<1x16x16xf32> to vector<16x16xf32>
      %484 = vector.broadcast %481 : f32 to vector<16x16xf32>
      %485 = arith.mulf %484, %483 : vector<16x16xf32>
      %486 = arith.addf %480, %485 : vector<16x16xf32>
      %c51 = arith.constant 51 : index
      %487 = memref.load %arg2[%c51] : memref<98xf32, #tpu.memory_space<smem>>
      %c1_337 = arith.constant 1 : index
      %c0_338 = arith.constant 0 : index
      %c2_339 = arith.constant 2 : index
      %488 = vector.load %arg7[%c1_337, %c0_338, %c2_339] : memref<2x22x22xf32, #tpu.memory_space<vmem>>, vector<1x16x16xf32>
      %489 = vector.shape_cast %488 : vector<1x16x16xf32> to vector<16x16xf32>
      %490 = vector.broadcast %487 : f32 to vector<16x16xf32>
      %491 = arith.mulf %490, %489 : vector<16x16xf32>
      %492 = arith.addf %486, %491 : vector<16x16xf32>
      %c52 = arith.constant 52 : index
      %493 = memref.load %arg2[%c52] : memref<98xf32, #tpu.memory_space<smem>>
      %c1_340 = arith.constant 1 : index
      %c0_341 = arith.constant 0 : index
      %c3_342 = arith.constant 3 : index
      %494 = vector.load %arg7[%c1_340, %c0_341, %c3_342] : memref<2x22x22xf32, #tpu.memory_space<vmem>>, vector<1x16x16xf32>
      %495 = vector.shape_cast %494 : vector<1x16x16xf32> to vector<16x16xf32>
      %496 = vector.broadcast %493 : f32 to vector<16x16xf32>
      %497 = arith.mulf %496, %495 : vector<16x16xf32>
      %498 = arith.addf %492, %497 : vector<16x16xf32>
      %c53 = arith.constant 53 : index
      %499 = memref.load %arg2[%c53] : memref<98xf32, #tpu.memory_space<smem>>
      %c1_343 = arith.constant 1 : index
      %c0_344 = arith.constant 0 : index
      %c4_345 = arith.constant 4 : index
      %500 = vector.load %arg7[%c1_343, %c0_344, %c4_345] : memref<2x22x22xf32, #tpu.memory_space<vmem>>, vector<1x16x16xf32>
      %501 = vector.shape_cast %500 : vector<1x16x16xf32> to vector<16x16xf32>
      %502 = vector.broadcast %499 : f32 to vector<16x16xf32>
      %503 = arith.mulf %502, %501 : vector<16x16xf32>
      %504 = arith.addf %498, %503 : vector<16x16xf32>
      %c54 = arith.constant 54 : index
      %505 = memref.load %arg2[%c54] : memref<98xf32, #tpu.memory_space<smem>>
      %c1_346 = arith.constant 1 : index
      %c0_347 = arith.constant 0 : index
      %c5_348 = arith.constant 5 : index
      %506 = vector.load %arg7[%c1_346, %c0_347, %c5_348] : memref<2x22x22xf32, #tpu.memory_space<vmem>>, vector<1x16x16xf32>
      %507 = vector.shape_cast %506 : vector<1x16x16xf32> to vector<16x16xf32>
      %508 = vector.broadcast %505 : f32 to vector<16x16xf32>
      %509 = arith.mulf %508, %507 : vector<16x16xf32>
      %510 = arith.addf %504, %509 : vector<16x16xf32>
      %c55 = arith.constant 55 : index
      %511 = memref.load %arg2[%c55] : memref<98xf32, #tpu.memory_space<smem>>
      %c1_349 = arith.constant 1 : index
      %c0_350 = arith.constant 0 : index
      %c6_351 = arith.constant 6 : index
      %512 = vector.load %arg7[%c1_349, %c0_350, %c6_351] : memref<2x22x22xf32, #tpu.memory_space<vmem>>, vector<1x16x16xf32>
      %513 = vector.shape_cast %512 : vector<1x16x16xf32> to vector<16x16xf32>
      %514 = vector.broadcast %511 : f32 to vector<16x16xf32>
      %515 = arith.mulf %514, %513 : vector<16x16xf32>
      %516 = arith.addf %510, %515 : vector<16x16xf32>
      %c56 = arith.constant 56 : index
      %517 = memref.load %arg2[%c56] : memref<98xf32, #tpu.memory_space<smem>>
      %c1_352 = arith.constant 1 : index
      %c1_353 = arith.constant 1 : index
      %c0_354 = arith.constant 0 : index
      %518 = vector.load %arg7[%c1_352, %c1_353, %c0_354] : memref<2x22x22xf32, #tpu.memory_space<vmem>>, vector<1x16x16xf32>
      %519 = vector.shape_cast %518 : vector<1x16x16xf32> to vector<16x16xf32>
      %520 = vector.broadcast %517 : f32 to vector<16x16xf32>
      %521 = arith.mulf %520, %519 : vector<16x16xf32>
      %522 = arith.addf %516, %521 : vector<16x16xf32>
      %c57 = arith.constant 57 : index
      %523 = memref.load %arg2[%c57] : memref<98xf32, #tpu.memory_space<smem>>
      %c1_355 = arith.constant 1 : index
      %c1_356 = arith.constant 1 : index
      %c1_357 = arith.constant 1 : index
      %524 = vector.load %arg7[%c1_355, %c1_356, %c1_357] : memref<2x22x22xf32, #tpu.memory_space<vmem>>, vector<1x16x16xf32>
      %525 = vector.shape_cast %524 : vector<1x16x16xf32> to vector<16x16xf32>
      %526 = vector.broadcast %523 : f32 to vector<16x16xf32>
      %527 = arith.mulf %526, %525 : vector<16x16xf32>
      %528 = arith.addf %522, %527 : vector<16x16xf32>
      %c58 = arith.constant 58 : index
      %529 = memref.load %arg2[%c58] : memref<98xf32, #tpu.memory_space<smem>>
      %c1_358 = arith.constant 1 : index
      %c1_359 = arith.constant 1 : index
      %c2_360 = arith.constant 2 : index
      %530 = vector.load %arg7[%c1_358, %c1_359, %c2_360] : memref<2x22x22xf32, #tpu.memory_space<vmem>>, vector<1x16x16xf32>
      %531 = vector.shape_cast %530 : vector<1x16x16xf32> to vector<16x16xf32>
      %532 = vector.broadcast %529 : f32 to vector<16x16xf32>
      %533 = arith.mulf %532, %531 : vector<16x16xf32>
      %534 = arith.addf %528, %533 : vector<16x16xf32>
      %c59 = arith.constant 59 : index
      %535 = memref.load %arg2[%c59] : memref<98xf32, #tpu.memory_space<smem>>
      %c1_361 = arith.constant 1 : index
      %c1_362 = arith.constant 1 : index
      %c3_363 = arith.constant 3 : index
      %536 = vector.load %arg7[%c1_361, %c1_362, %c3_363] : memref<2x22x22xf32, #tpu.memory_space<vmem>>, vector<1x16x16xf32>
      %537 = vector.shape_cast %536 : vector<1x16x16xf32> to vector<16x16xf32>
      %538 = vector.broadcast %535 : f32 to vector<16x16xf32>
      %539 = arith.mulf %538, %537 : vector<16x16xf32>
      %540 = arith.addf %534, %539 : vector<16x16xf32>
      %c60 = arith.constant 60 : index
      %541 = memref.load %arg2[%c60] : memref<98xf32, #tpu.memory_space<smem>>
      %c1_364 = arith.constant 1 : index
      %c1_365 = arith.constant 1 : index
      %c4_366 = arith.constant 4 : index
      %542 = vector.load %arg7[%c1_364, %c1_365, %c4_366] : memref<2x22x22xf32, #tpu.memory_space<vmem>>, vector<1x16x16xf32>
      %543 = vector.shape_cast %542 : vector<1x16x16xf32> to vector<16x16xf32>
      %544 = vector.broadcast %541 : f32 to vector<16x16xf32>
      %545 = arith.mulf %544, %543 : vector<16x16xf32>
      %546 = arith.addf %540, %545 : vector<16x16xf32>
      %c61 = arith.constant 61 : index
      %547 = memref.load %arg2[%c61] : memref<98xf32, #tpu.memory_space<smem>>
      %c1_367 = arith.constant 1 : index
      %c1_368 = arith.constant 1 : index
      %c5_369 = arith.constant 5 : index
      %548 = vector.load %arg7[%c1_367, %c1_368, %c5_369] : memref<2x22x22xf32, #tpu.memory_space<vmem>>, vector<1x16x16xf32>
      %549 = vector.shape_cast %548 : vector<1x16x16xf32> to vector<16x16xf32>
      %550 = vector.broadcast %547 : f32 to vector<16x16xf32>
      %551 = arith.mulf %550, %549 : vector<16x16xf32>
      %552 = arith.addf %546, %551 : vector<16x16xf32>
      %c62 = arith.constant 62 : index
      %553 = memref.load %arg2[%c62] : memref<98xf32, #tpu.memory_space<smem>>
      %c1_370 = arith.constant 1 : index
      %c1_371 = arith.constant 1 : index
      %c6_372 = arith.constant 6 : index
      %554 = vector.load %arg7[%c1_370, %c1_371, %c6_372] : memref<2x22x22xf32, #tpu.memory_space<vmem>>, vector<1x16x16xf32>
      %555 = vector.shape_cast %554 : vector<1x16x16xf32> to vector<16x16xf32>
      %556 = vector.broadcast %553 : f32 to vector<16x16xf32>
      %557 = arith.mulf %556, %555 : vector<16x16xf32>
      %558 = arith.addf %552, %557 : vector<16x16xf32>
      %c63 = arith.constant 63 : index
      %559 = memref.load %arg2[%c63] : memref<98xf32, #tpu.memory_space<smem>>
      %c1_373 = arith.constant 1 : index
      %c2_374 = arith.constant 2 : index
      %c0_375 = arith.constant 0 : index
      %560 = vector.load %arg7[%c1_373, %c2_374, %c0_375] : memref<2x22x22xf32, #tpu.memory_space<vmem>>, vector<1x16x16xf32>
      %561 = vector.shape_cast %560 : vector<1x16x16xf32> to vector<16x16xf32>
      %562 = vector.broadcast %559 : f32 to vector<16x16xf32>
      %563 = arith.mulf %562, %561 : vector<16x16xf32>
      %564 = arith.addf %558, %563 : vector<16x16xf32>
      %c64_376 = arith.constant 64 : index
      %565 = memref.load %arg2[%c64_376] : memref<98xf32, #tpu.memory_space<smem>>
      %c1_377 = arith.constant 1 : index
      %c2_378 = arith.constant 2 : index
      %c1_379 = arith.constant 1 : index
      %566 = vector.load %arg7[%c1_377, %c2_378, %c1_379] : memref<2x22x22xf32, #tpu.memory_space<vmem>>, vector<1x16x16xf32>
      %567 = vector.shape_cast %566 : vector<1x16x16xf32> to vector<16x16xf32>
      %568 = vector.broadcast %565 : f32 to vector<16x16xf32>
      %569 = arith.mulf %568, %567 : vector<16x16xf32>
      %570 = arith.addf %564, %569 : vector<16x16xf32>
      %c65 = arith.constant 65 : index
      %571 = memref.load %arg2[%c65] : memref<98xf32, #tpu.memory_space<smem>>
      %c1_380 = arith.constant 1 : index
      %c2_381 = arith.constant 2 : index
      %c2_382 = arith.constant 2 : index
      %572 = vector.load %arg7[%c1_380, %c2_381, %c2_382] : memref<2x22x22xf32, #tpu.memory_space<vmem>>, vector<1x16x16xf32>
      %573 = vector.shape_cast %572 : vector<1x16x16xf32> to vector<16x16xf32>
      %574 = vector.broadcast %571 : f32 to vector<16x16xf32>
      %575 = arith.mulf %574, %573 : vector<16x16xf32>
      %576 = arith.addf %570, %575 : vector<16x16xf32>
      %c66 = arith.constant 66 : index
      %577 = memref.load %arg2[%c66] : memref<98xf32, #tpu.memory_space<smem>>
      %c1_383 = arith.constant 1 : index
      %c2_384 = arith.constant 2 : index
      %c3_385 = arith.constant 3 : index
      %578 = vector.load %arg7[%c1_383, %c2_384, %c3_385] : memref<2x22x22xf32, #tpu.memory_space<vmem>>, vector<1x16x16xf32>
      %579 = vector.shape_cast %578 : vector<1x16x16xf32> to vector<16x16xf32>
      %580 = vector.broadcast %577 : f32 to vector<16x16xf32>
      %581 = arith.mulf %580, %579 : vector<16x16xf32>
      %582 = arith.addf %576, %581 : vector<16x16xf32>
      %c67 = arith.constant 67 : index
      %583 = memref.load %arg2[%c67] : memref<98xf32, #tpu.memory_space<smem>>
      %c1_386 = arith.constant 1 : index
      %c2_387 = arith.constant 2 : index
      %c4_388 = arith.constant 4 : index
      %584 = vector.load %arg7[%c1_386, %c2_387, %c4_388] : memref<2x22x22xf32, #tpu.memory_space<vmem>>, vector<1x16x16xf32>
      %585 = vector.shape_cast %584 : vector<1x16x16xf32> to vector<16x16xf32>
      %586 = vector.broadcast %583 : f32 to vector<16x16xf32>
      %587 = arith.mulf %586, %585 : vector<16x16xf32>
      %588 = arith.addf %582, %587 : vector<16x16xf32>
      %c68 = arith.constant 68 : index
      %589 = memref.load %arg2[%c68] : memref<98xf32, #tpu.memory_space<smem>>
      %c1_389 = arith.constant 1 : index
      %c2_390 = arith.constant 2 : index
      %c5_391 = arith.constant 5 : index
      %590 = vector.load %arg7[%c1_389, %c2_390, %c5_391] : memref<2x22x22xf32, #tpu.memory_space<vmem>>, vector<1x16x16xf32>
      %591 = vector.shape_cast %590 : vector<1x16x16xf32> to vector<16x16xf32>
      %592 = vector.broadcast %589 : f32 to vector<16x16xf32>
      %593 = arith.mulf %592, %591 : vector<16x16xf32>
      %594 = arith.addf %588, %593 : vector<16x16xf32>
      %c69 = arith.constant 69 : index
      %595 = memref.load %arg2[%c69] : memref<98xf32, #tpu.memory_space<smem>>
      %c1_392 = arith.constant 1 : index
      %c2_393 = arith.constant 2 : index
      %c6_394 = arith.constant 6 : index
      %596 = vector.load %arg7[%c1_392, %c2_393, %c6_394] : memref<2x22x22xf32, #tpu.memory_space<vmem>>, vector<1x16x16xf32>
      %597 = vector.shape_cast %596 : vector<1x16x16xf32> to vector<16x16xf32>
      %598 = vector.broadcast %595 : f32 to vector<16x16xf32>
      %599 = arith.mulf %598, %597 : vector<16x16xf32>
      %600 = arith.addf %594, %599 : vector<16x16xf32>
      %c70 = arith.constant 70 : index
      %601 = memref.load %arg2[%c70] : memref<98xf32, #tpu.memory_space<smem>>
      %c1_395 = arith.constant 1 : index
      %c3_396 = arith.constant 3 : index
      %c0_397 = arith.constant 0 : index
      %602 = vector.load %arg7[%c1_395, %c3_396, %c0_397] : memref<2x22x22xf32, #tpu.memory_space<vmem>>, vector<1x16x16xf32>
      %603 = vector.shape_cast %602 : vector<1x16x16xf32> to vector<16x16xf32>
      %604 = vector.broadcast %601 : f32 to vector<16x16xf32>
      %605 = arith.mulf %604, %603 : vector<16x16xf32>
      %606 = arith.addf %600, %605 : vector<16x16xf32>
      %c71 = arith.constant 71 : index
      %607 = memref.load %arg2[%c71] : memref<98xf32, #tpu.memory_space<smem>>
      %c1_398 = arith.constant 1 : index
      %c3_399 = arith.constant 3 : index
      %c1_400 = arith.constant 1 : index
      %608 = vector.load %arg7[%c1_398, %c3_399, %c1_400] : memref<2x22x22xf32, #tpu.memory_space<vmem>>, vector<1x16x16xf32>
      %609 = vector.shape_cast %608 : vector<1x16x16xf32> to vector<16x16xf32>
      %610 = vector.broadcast %607 : f32 to vector<16x16xf32>
      %611 = arith.mulf %610, %609 : vector<16x16xf32>
      %612 = arith.addf %606, %611 : vector<16x16xf32>
      %c72 = arith.constant 72 : index
      %613 = memref.load %arg2[%c72] : memref<98xf32, #tpu.memory_space<smem>>
      %c1_401 = arith.constant 1 : index
      %c3_402 = arith.constant 3 : index
      %c2_403 = arith.constant 2 : index
      %614 = vector.load %arg7[%c1_401, %c3_402, %c2_403] : memref<2x22x22xf32, #tpu.memory_space<vmem>>, vector<1x16x16xf32>
      %615 = vector.shape_cast %614 : vector<1x16x16xf32> to vector<16x16xf32>
      %616 = vector.broadcast %613 : f32 to vector<16x16xf32>
      %617 = arith.mulf %616, %615 : vector<16x16xf32>
      %618 = arith.addf %612, %617 : vector<16x16xf32>
      %c73 = arith.constant 73 : index
      %619 = memref.load %arg2[%c73] : memref<98xf32, #tpu.memory_space<smem>>
      %c1_404 = arith.constant 1 : index
      %c3_405 = arith.constant 3 : index
      %c3_406 = arith.constant 3 : index
      %620 = vector.load %arg7[%c1_404, %c3_405, %c3_406] : memref<2x22x22xf32, #tpu.memory_space<vmem>>, vector<1x16x16xf32>
      %621 = vector.shape_cast %620 : vector<1x16x16xf32> to vector<16x16xf32>
      %622 = vector.broadcast %619 : f32 to vector<16x16xf32>
      %623 = arith.mulf %622, %621 : vector<16x16xf32>
      %624 = arith.addf %618, %623 : vector<16x16xf32>
      %c74 = arith.constant 74 : index
      %625 = memref.load %arg2[%c74] : memref<98xf32, #tpu.memory_space<smem>>
      %c1_407 = arith.constant 1 : index
      %c3_408 = arith.constant 3 : index
      %c4_409 = arith.constant 4 : index
      %626 = vector.load %arg7[%c1_407, %c3_408, %c4_409] : memref<2x22x22xf32, #tpu.memory_space<vmem>>, vector<1x16x16xf32>
      %627 = vector.shape_cast %626 : vector<1x16x16xf32> to vector<16x16xf32>
      %628 = vector.broadcast %625 : f32 to vector<16x16xf32>
      %629 = arith.mulf %628, %627 : vector<16x16xf32>
      %630 = arith.addf %624, %629 : vector<16x16xf32>
      %c75 = arith.constant 75 : index
      %631 = memref.load %arg2[%c75] : memref<98xf32, #tpu.memory_space<smem>>
      %c1_410 = arith.constant 1 : index
      %c3_411 = arith.constant 3 : index
      %c5_412 = arith.constant 5 : index
      %632 = vector.load %arg7[%c1_410, %c3_411, %c5_412] : memref<2x22x22xf32, #tpu.memory_space<vmem>>, vector<1x16x16xf32>
      %633 = vector.shape_cast %632 : vector<1x16x16xf32> to vector<16x16xf32>
      %634 = vector.broadcast %631 : f32 to vector<16x16xf32>
      %635 = arith.mulf %634, %633 : vector<16x16xf32>
      %636 = arith.addf %630, %635 : vector<16x16xf32>
      %c76 = arith.constant 76 : index
      %637 = memref.load %arg2[%c76] : memref<98xf32, #tpu.memory_space<smem>>
      %c1_413 = arith.constant 1 : index
      %c3_414 = arith.constant 3 : index
      %c6_415 = arith.constant 6 : index
      %638 = vector.load %arg7[%c1_413, %c3_414, %c6_415] : memref<2x22x22xf32, #tpu.memory_space<vmem>>, vector<1x16x16xf32>
      %639 = vector.shape_cast %638 : vector<1x16x16xf32> to vector<16x16xf32>
      %640 = vector.broadcast %637 : f32 to vector<16x16xf32>
      %641 = arith.mulf %640, %639 : vector<16x16xf32>
      %642 = arith.addf %636, %641 : vector<16x16xf32>
      %c77 = arith.constant 77 : index
      %643 = memref.load %arg2[%c77] : memref<98xf32, #tpu.memory_space<smem>>
      %c1_416 = arith.constant 1 : index
      %c4_417 = arith.constant 4 : index
      %c0_418 = arith.constant 0 : index
      %644 = vector.load %arg7[%c1_416, %c4_417, %c0_418] : memref<2x22x22xf32, #tpu.memory_space<vmem>>, vector<1x16x16xf32>
      %645 = vector.shape_cast %644 : vector<1x16x16xf32> to vector<16x16xf32>
      %646 = vector.broadcast %643 : f32 to vector<16x16xf32>
      %647 = arith.mulf %646, %645 : vector<16x16xf32>
      %648 = arith.addf %642, %647 : vector<16x16xf32>
      %c78 = arith.constant 78 : index
      %649 = memref.load %arg2[%c78] : memref<98xf32, #tpu.memory_space<smem>>
      %c1_419 = arith.constant 1 : index
      %c4_420 = arith.constant 4 : index
      %c1_421 = arith.constant 1 : index
      %650 = vector.load %arg7[%c1_419, %c4_420, %c1_421] : memref<2x22x22xf32, #tpu.memory_space<vmem>>, vector<1x16x16xf32>
      %651 = vector.shape_cast %650 : vector<1x16x16xf32> to vector<16x16xf32>
      %652 = vector.broadcast %649 : f32 to vector<16x16xf32>
      %653 = arith.mulf %652, %651 : vector<16x16xf32>
      %654 = arith.addf %648, %653 : vector<16x16xf32>
      %c79 = arith.constant 79 : index
      %655 = memref.load %arg2[%c79] : memref<98xf32, #tpu.memory_space<smem>>
      %c1_422 = arith.constant 1 : index
      %c4_423 = arith.constant 4 : index
      %c2_424 = arith.constant 2 : index
      %656 = vector.load %arg7[%c1_422, %c4_423, %c2_424] : memref<2x22x22xf32, #tpu.memory_space<vmem>>, vector<1x16x16xf32>
      %657 = vector.shape_cast %656 : vector<1x16x16xf32> to vector<16x16xf32>
      %658 = vector.broadcast %655 : f32 to vector<16x16xf32>
      %659 = arith.mulf %658, %657 : vector<16x16xf32>
      %660 = arith.addf %654, %659 : vector<16x16xf32>
      %c80_425 = arith.constant 80 : index
      %661 = memref.load %arg2[%c80_425] : memref<98xf32, #tpu.memory_space<smem>>
      %c1_426 = arith.constant 1 : index
      %c4_427 = arith.constant 4 : index
      %c3_428 = arith.constant 3 : index
      %662 = vector.load %arg7[%c1_426, %c4_427, %c3_428] : memref<2x22x22xf32, #tpu.memory_space<vmem>>, vector<1x16x16xf32>
      %663 = vector.shape_cast %662 : vector<1x16x16xf32> to vector<16x16xf32>
      %664 = vector.broadcast %661 : f32 to vector<16x16xf32>
      %665 = arith.mulf %664, %663 : vector<16x16xf32>
      %666 = arith.addf %660, %665 : vector<16x16xf32>
      %c81 = arith.constant 81 : index
      %667 = memref.load %arg2[%c81] : memref<98xf32, #tpu.memory_space<smem>>
      %c1_429 = arith.constant 1 : index
      %c4_430 = arith.constant 4 : index
      %c4_431 = arith.constant 4 : index
      %668 = vector.load %arg7[%c1_429, %c4_430, %c4_431] : memref<2x22x22xf32, #tpu.memory_space<vmem>>, vector<1x16x16xf32>
      %669 = vector.shape_cast %668 : vector<1x16x16xf32> to vector<16x16xf32>
      %670 = vector.broadcast %667 : f32 to vector<16x16xf32>
      %671 = arith.mulf %670, %669 : vector<16x16xf32>
      %672 = arith.addf %666, %671 : vector<16x16xf32>
      %c82 = arith.constant 82 : index
      %673 = memref.load %arg2[%c82] : memref<98xf32, #tpu.memory_space<smem>>
      %c1_432 = arith.constant 1 : index
      %c4_433 = arith.constant 4 : index
      %c5_434 = arith.constant 5 : index
      %674 = vector.load %arg7[%c1_432, %c4_433, %c5_434] : memref<2x22x22xf32, #tpu.memory_space<vmem>>, vector<1x16x16xf32>
      %675 = vector.shape_cast %674 : vector<1x16x16xf32> to vector<16x16xf32>
      %676 = vector.broadcast %673 : f32 to vector<16x16xf32>
      %677 = arith.mulf %676, %675 : vector<16x16xf32>
      %678 = arith.addf %672, %677 : vector<16x16xf32>
      %c83 = arith.constant 83 : index
      %679 = memref.load %arg2[%c83] : memref<98xf32, #tpu.memory_space<smem>>
      %c1_435 = arith.constant 1 : index
      %c4_436 = arith.constant 4 : index
      %c6_437 = arith.constant 6 : index
      %680 = vector.load %arg7[%c1_435, %c4_436, %c6_437] : memref<2x22x22xf32, #tpu.memory_space<vmem>>, vector<1x16x16xf32>
      %681 = vector.shape_cast %680 : vector<1x16x16xf32> to vector<16x16xf32>
      %682 = vector.broadcast %679 : f32 to vector<16x16xf32>
      %683 = arith.mulf %682, %681 : vector<16x16xf32>
      %684 = arith.addf %678, %683 : vector<16x16xf32>
      %c84 = arith.constant 84 : index
      %685 = memref.load %arg2[%c84] : memref<98xf32, #tpu.memory_space<smem>>
      %c1_438 = arith.constant 1 : index
      %c5_439 = arith.constant 5 : index
      %c0_440 = arith.constant 0 : index
      %686 = vector.load %arg7[%c1_438, %c5_439, %c0_440] : memref<2x22x22xf32, #tpu.memory_space<vmem>>, vector<1x16x16xf32>
      %687 = vector.shape_cast %686 : vector<1x16x16xf32> to vector<16x16xf32>
      %688 = vector.broadcast %685 : f32 to vector<16x16xf32>
      %689 = arith.mulf %688, %687 : vector<16x16xf32>
      %690 = arith.addf %684, %689 : vector<16x16xf32>
      %c85 = arith.constant 85 : index
      %691 = memref.load %arg2[%c85] : memref<98xf32, #tpu.memory_space<smem>>
      %c1_441 = arith.constant 1 : index
      %c5_442 = arith.constant 5 : index
      %c1_443 = arith.constant 1 : index
      %692 = vector.load %arg7[%c1_441, %c5_442, %c1_443] : memref<2x22x22xf32, #tpu.memory_space<vmem>>, vector<1x16x16xf32>
      %693 = vector.shape_cast %692 : vector<1x16x16xf32> to vector<16x16xf32>
      %694 = vector.broadcast %691 : f32 to vector<16x16xf32>
      %695 = arith.mulf %694, %693 : vector<16x16xf32>
      %696 = arith.addf %690, %695 : vector<16x16xf32>
      %c86 = arith.constant 86 : index
      %697 = memref.load %arg2[%c86] : memref<98xf32, #tpu.memory_space<smem>>
      %c1_444 = arith.constant 1 : index
      %c5_445 = arith.constant 5 : index
      %c2_446 = arith.constant 2 : index
      %698 = vector.load %arg7[%c1_444, %c5_445, %c2_446] : memref<2x22x22xf32, #tpu.memory_space<vmem>>, vector<1x16x16xf32>
      %699 = vector.shape_cast %698 : vector<1x16x16xf32> to vector<16x16xf32>
      %700 = vector.broadcast %697 : f32 to vector<16x16xf32>
      %701 = arith.mulf %700, %699 : vector<16x16xf32>
      %702 = arith.addf %696, %701 : vector<16x16xf32>
      %c87 = arith.constant 87 : index
      %703 = memref.load %arg2[%c87] : memref<98xf32, #tpu.memory_space<smem>>
      %c1_447 = arith.constant 1 : index
      %c5_448 = arith.constant 5 : index
      %c3_449 = arith.constant 3 : index
      %704 = vector.load %arg7[%c1_447, %c5_448, %c3_449] : memref<2x22x22xf32, #tpu.memory_space<vmem>>, vector<1x16x16xf32>
      %705 = vector.shape_cast %704 : vector<1x16x16xf32> to vector<16x16xf32>
      %706 = vector.broadcast %703 : f32 to vector<16x16xf32>
      %707 = arith.mulf %706, %705 : vector<16x16xf32>
      %708 = arith.addf %702, %707 : vector<16x16xf32>
      %c88 = arith.constant 88 : index
      %709 = memref.load %arg2[%c88] : memref<98xf32, #tpu.memory_space<smem>>
      %c1_450 = arith.constant 1 : index
      %c5_451 = arith.constant 5 : index
      %c4_452 = arith.constant 4 : index
      %710 = vector.load %arg7[%c1_450, %c5_451, %c4_452] : memref<2x22x22xf32, #tpu.memory_space<vmem>>, vector<1x16x16xf32>
      %711 = vector.shape_cast %710 : vector<1x16x16xf32> to vector<16x16xf32>
      %712 = vector.broadcast %709 : f32 to vector<16x16xf32>
      %713 = arith.mulf %712, %711 : vector<16x16xf32>
      %714 = arith.addf %708, %713 : vector<16x16xf32>
      %c89 = arith.constant 89 : index
      %715 = memref.load %arg2[%c89] : memref<98xf32, #tpu.memory_space<smem>>
      %c1_453 = arith.constant 1 : index
      %c5_454 = arith.constant 5 : index
      %c5_455 = arith.constant 5 : index
      %716 = vector.load %arg7[%c1_453, %c5_454, %c5_455] : memref<2x22x22xf32, #tpu.memory_space<vmem>>, vector<1x16x16xf32>
      %717 = vector.shape_cast %716 : vector<1x16x16xf32> to vector<16x16xf32>
      %718 = vector.broadcast %715 : f32 to vector<16x16xf32>
      %719 = arith.mulf %718, %717 : vector<16x16xf32>
      %720 = arith.addf %714, %719 : vector<16x16xf32>
      %c90 = arith.constant 90 : index
      %721 = memref.load %arg2[%c90] : memref<98xf32, #tpu.memory_space<smem>>
      %c1_456 = arith.constant 1 : index
      %c5_457 = arith.constant 5 : index
      %c6_458 = arith.constant 6 : index
      %722 = vector.load %arg7[%c1_456, %c5_457, %c6_458] : memref<2x22x22xf32, #tpu.memory_space<vmem>>, vector<1x16x16xf32>
      %723 = vector.shape_cast %722 : vector<1x16x16xf32> to vector<16x16xf32>
      %724 = vector.broadcast %721 : f32 to vector<16x16xf32>
      %725 = arith.mulf %724, %723 : vector<16x16xf32>
      %726 = arith.addf %720, %725 : vector<16x16xf32>
      %c91 = arith.constant 91 : index
      %727 = memref.load %arg2[%c91] : memref<98xf32, #tpu.memory_space<smem>>
      %c1_459 = arith.constant 1 : index
      %c6_460 = arith.constant 6 : index
      %c0_461 = arith.constant 0 : index
      %728 = vector.load %arg7[%c1_459, %c6_460, %c0_461] : memref<2x22x22xf32, #tpu.memory_space<vmem>>, vector<1x16x16xf32>
      %729 = vector.shape_cast %728 : vector<1x16x16xf32> to vector<16x16xf32>
      %730 = vector.broadcast %727 : f32 to vector<16x16xf32>
      %731 = arith.mulf %730, %729 : vector<16x16xf32>
      %732 = arith.addf %726, %731 : vector<16x16xf32>
      %c92 = arith.constant 92 : index
      %733 = memref.load %arg2[%c92] : memref<98xf32, #tpu.memory_space<smem>>
      %c1_462 = arith.constant 1 : index
      %c6_463 = arith.constant 6 : index
      %c1_464 = arith.constant 1 : index
      %734 = vector.load %arg7[%c1_462, %c6_463, %c1_464] : memref<2x22x22xf32, #tpu.memory_space<vmem>>, vector<1x16x16xf32>
      %735 = vector.shape_cast %734 : vector<1x16x16xf32> to vector<16x16xf32>
      %736 = vector.broadcast %733 : f32 to vector<16x16xf32>
      %737 = arith.mulf %736, %735 : vector<16x16xf32>
      %738 = arith.addf %732, %737 : vector<16x16xf32>
      %c93 = arith.constant 93 : index
      %739 = memref.load %arg2[%c93] : memref<98xf32, #tpu.memory_space<smem>>
      %c1_465 = arith.constant 1 : index
      %c6_466 = arith.constant 6 : index
      %c2_467 = arith.constant 2 : index
      %740 = vector.load %arg7[%c1_465, %c6_466, %c2_467] : memref<2x22x22xf32, #tpu.memory_space<vmem>>, vector<1x16x16xf32>
      %741 = vector.shape_cast %740 : vector<1x16x16xf32> to vector<16x16xf32>
      %742 = vector.broadcast %739 : f32 to vector<16x16xf32>
      %743 = arith.mulf %742, %741 : vector<16x16xf32>
      %744 = arith.addf %738, %743 : vector<16x16xf32>
      %c94 = arith.constant 94 : index
      %745 = memref.load %arg2[%c94] : memref<98xf32, #tpu.memory_space<smem>>
      %c1_468 = arith.constant 1 : index
      %c6_469 = arith.constant 6 : index
      %c3_470 = arith.constant 3 : index
      %746 = vector.load %arg7[%c1_468, %c6_469, %c3_470] : memref<2x22x22xf32, #tpu.memory_space<vmem>>, vector<1x16x16xf32>
      %747 = vector.shape_cast %746 : vector<1x16x16xf32> to vector<16x16xf32>
      %748 = vector.broadcast %745 : f32 to vector<16x16xf32>
      %749 = arith.mulf %748, %747 : vector<16x16xf32>
      %750 = arith.addf %744, %749 : vector<16x16xf32>
      %c95 = arith.constant 95 : index
      %751 = memref.load %arg2[%c95] : memref<98xf32, #tpu.memory_space<smem>>
      %c1_471 = arith.constant 1 : index
      %c6_472 = arith.constant 6 : index
      %c4_473 = arith.constant 4 : index
      %752 = vector.load %arg7[%c1_471, %c6_472, %c4_473] : memref<2x22x22xf32, #tpu.memory_space<vmem>>, vector<1x16x16xf32>
      %753 = vector.shape_cast %752 : vector<1x16x16xf32> to vector<16x16xf32>
      %754 = vector.broadcast %751 : f32 to vector<16x16xf32>
      %755 = arith.mulf %754, %753 : vector<16x16xf32>
      %756 = arith.addf %750, %755 : vector<16x16xf32>
      %c96_474 = arith.constant 96 : index
      %757 = memref.load %arg2[%c96_474] : memref<98xf32, #tpu.memory_space<smem>>
      %c1_475 = arith.constant 1 : index
      %c6_476 = arith.constant 6 : index
      %c5_477 = arith.constant 5 : index
      %758 = vector.load %arg7[%c1_475, %c6_476, %c5_477] : memref<2x22x22xf32, #tpu.memory_space<vmem>>, vector<1x16x16xf32>
      %759 = vector.shape_cast %758 : vector<1x16x16xf32> to vector<16x16xf32>
      %760 = vector.broadcast %757 : f32 to vector<16x16xf32>
      %761 = arith.mulf %760, %759 : vector<16x16xf32>
      %762 = arith.addf %756, %761 : vector<16x16xf32>
      %c97 = arith.constant 97 : index
      %763 = memref.load %arg2[%c97] : memref<98xf32, #tpu.memory_space<smem>>
      %c1_478 = arith.constant 1 : index
      %c6_479 = arith.constant 6 : index
      %c6_480 = arith.constant 6 : index
      %764 = vector.load %arg7[%c1_478, %c6_479, %c6_480] : memref<2x22x22xf32, #tpu.memory_space<vmem>>, vector<1x16x16xf32>
      %765 = vector.shape_cast %764 : vector<1x16x16xf32> to vector<16x16xf32>
      %766 = vector.broadcast %763 : f32 to vector<16x16xf32>
      %767 = arith.mulf %766, %765 : vector<16x16xf32>
      %768 = arith.addf %762, %767 : vector<16x16xf32>
      %769 = arith.negf %768 : vector<16x16xf32>
      %770 = math.exp %769 : vector<16x16xf32>
      %cst_481 = arith.constant 1.000000e+00 : f32
      %771 = vector.broadcast %cst_481 : f32 to vector<16x16xf32>
      %772 = arith.addf %771, %770 : vector<16x16xf32>
      %773 = arith.divf %771, %772 : vector<16x16xf32>
      %c0_482 = arith.constant 0 : index
      %c0_483 = arith.constant 0 : index
      %c0_484 = arith.constant 0 : index
      %c0_485 = arith.constant 0 : index
      %774 = vector.load %arg4[%c0_482, %c0_483, %c0_484, %c0_485] : memref<1x1x16x16xf32, #tpu.memory_space<vmem>>, vector<1x1x16x16xf32>
      %775 = vector.shape_cast %774 : vector<1x1x16x16xf32> to vector<16x16xf32>
      %776 = vector.shape_cast %773 : vector<16x16xf32> to vector<1x1x16x16xf32>
      tpu.vector_store %arg4[%c0_482, %c0_483, %c0_484, %c0_485], %776 {strides = array<i32>} : memref<1x1x16x16xf32, #tpu.memory_space<vmem>>, vector<1x1x16x16xf32>,
    } else {
    }
    return
  }
  func.func @transform_0(%arg0: i32, %arg1: i32) -> i32 {
    %c0_i32 = arith.constant 0 : i32
    %c0_i32_0 = arith.constant 0 : i32
    return %c0_i32 : i32
  }
  func.func @transform_1(%arg0: i32, %arg1: i32) -> (i32, i32, i32) {
    %c0_i32 = arith.constant 0 : i32
    %c0_i32_0 = arith.constant 0 : i32
    return %arg0, %arg1, %c0_i32 : i32, i32, i32
  }
  func.func @transform_2(%arg0: i32, %arg1: i32) -> (i32, i32, i32, i32) {
    %c0_i32 = arith.constant 0 : i32
    %c0_i32_0 = arith.constant 0 : i32
    %c0_i32_1 = arith.constant 0 : i32
    %c0_i32_2 = arith.constant 0 : i32
    return %arg0, %c0_i32, %c0_i32_0, %c0_i32_1 : i32, i32, i32, i32
  }
}

</mosaic_0001>

<llo_original>
// kernel: spatial_channel.1
$region0: #{spatial_channel.1}
  #allocation0 [shape = 'u32[]', space=smem, size = 0x4, offset = 0x4, fixed_abs, tag = 'smem constant byte address 0x4 - core index']
  #allocation1 [shape = 'u32[72,128]{1,0:T(1,128)}', space=vmem, size = 0x9000, scoped, tag = 'internal scratch']
  #allocation2 [shape = 'f32[1,256]{1,0:T(1,128)}', space=vmem, size = 0x400, scoped, tag = 'scratch operand']
  #allocation3 [shape = 'f32[1,256]{1,0:T(1,128)}', space=vmem, size = 0x400, scoped, tag = 'scratch operand']
  #allocation4 [shape = 'f32[2,22,22]{2,1,0:T(8,128)}', space=vmem, size = 0x6000, scoped, tag = 'scratch operand']
  %s0 = inlined_call_operand.vmem [shape: f32[98], index: 0, kind: input, shape index: {}]
  %s1 = inlined_call_operand.vmem [shape: f32[2,4,256], index: 1, kind: input, shape index: {}]
  %s2 = inlined_call_operand.hbm [shape: f32[2,1,16,16], index: 2, kind: output, shape index: {}]
  %s3 = sld [smem:[#allocation0]]
  $region53: #{spatial_channel.1} parent=0
    _
  %s5 = ssub.s32 1, %s3
  %s6 = scalar_select 0, %s5, %s3
  $region1: #{spatial_channel.1} parent=0
    #allocation5 [shape = 'u8[512]{0}', space=smem, size = 0x200, scoped, tag = 'input window, operand 0, single buffered']
    #allocation6 [shape = 's32[2]{0}', space=sflag, size = 0x8, scoped, tag = 'scoped memory for spatial_channel.1']
    #allocation7 [shape = 's32[2]{0}', space=sflag, size = 0x8, scoped, tag = 'scoped memory for spatial_channel.1']
    #allocation8 [shape = 'u8[16384]{0}', space=vmem, size = 0x4000, scoped, tag = 'output window, operand 0']
    %7 = vsyncpa [#allocation7], 0
    %8 = vsyncpa [#allocation6], 0
    %s9 = scalar_lea.sflag [#allocation6], 1
    %10 = vsyncpa %s9, 0
    loop: start=0, step=1, limit=4
    $region2: #{spatial_channel.1} parent=1 // loop_pre_header
      _
    $region3: #{spatial_channel.1} parent=1 // loop_header
      %s12 = sphi 0, %s16
      %p13 = scmp.ge.s32.totalorder %s12, 4
      %s19 = sphi 0, %s31
      %s20 = sphi 0, %s27
      %s21 = sphi 0, %s19
      %s22 = sphi 0, %s20
      %s23 = sphi 0, %s21
      %s24 = sphi 0, %s22
      %s32 = sphi 0, %s32
      %s34 = sphi 0, %s32
      %s35 = sphi 0, %s34
      %s49 = sphi 0, %s35
      %s57 = sphi 0, %s59
      %s60 = sphi 0, %s57
      %s61 = sphi 0, %s60
      %s77 = sphi 0, %s61
      %s83 = sphi 0, %s85
      %s86 = sphi 0, %s83
      %s87 = sphi 0, %s86
      %s103 = sphi 0, %s87
    $region4: #{spatial_channel.1} parent=1 // loop_header_branch
      %15 = sbr.rel (%p13) target = $region8
    $region5: #{spatial_channel.1} parent=1 // loop_body
      %s17 = ssub.s32 %s12, 1
      %s18 = ssub.s32 %s12, 2
      %s25 = sadd.s32 1, %s20
      %p26 = scmp.ge.s32.totalorder %s25, 1
      %s27 = scalar_select %p26, 0, %s25
      %s28 = sadd.s32 1, %s19
      %s29 = scalar_select %p26, %s28, %s19
      %p30 = scmp.ge.s32.totalorder %s29, 2
      %s31 = scalar_select %p30, 0, %s29
      %s33 = sadd.s32 %s32, 1
      %p36 = scmp.eq.s32.totalorder %s12, 1
      %p37 = scmp.ne.s32.totalorder %s32, %s34
      %p38 = scmp.eq.s32.totalorder %s12, 0
      %p39 = por %p37, %p38
      %p40 = scmp.ne.s32.totalorder %s32, %s34
      %p41 = scmp.eq.s32.totalorder %s17, 1
      %p42 = por %p40, %p41
      %p43 = scmp.ne.s32.totalorder %s34, %s35
      %p44 = scmp.eq.s32.totalorder %s17, 0
      %p45 = por %p43, %p44
      %p46 = scmp.ne.s32.totalorder %s34, %s35
      %p47 = scmp.eq.s32.totalorder %s18, 1
      %p48 = por %p46, %p47
      %p50 = scmp.ne.s32.totalorder %s35, %s49
      %p51 = scmp.eq.s32.totalorder %s18, 0
      %p52 = por %p50, %p51
      %s53 = ssub.s32 %s19, %s31
      %s54 = ssub.s32 %s20, %s27
      %s55 = sor.u32 %s53, %s54
      %p56 = scmp.eq.s32.totalorder %s55, 0
      %s58 = sadd.s32 %s57, 1
      %s59 = scalar_select %p56, %s57, %s58
      %p62 = pneg %p56
      %p63 = scmp.eq.s32.totalorder %s12, 1
      %p64 = por %p62, %p63
      %p65 = scmp.ne.s32.totalorder %s57, %s60
      %p66 = scmp.eq.s32.totalorder %s12, 0
      %p67 = por %p65, %p66
      %p68 = scmp.ne.s32.totalorder %s57, %s60
      %p69 = scmp.eq.s32.totalorder %s17, 1
      %p70 = por %p68, %p69
      %p71 = scmp.ne.s32.totalorder %s60, %s61
      %p72 = scmp.eq.s32.totalorder %s17, 0
      %p73 = por %p71, %p72
      %p74 = scmp.ne.s32.totalorder %s60, %s61
      %p75 = scmp.eq.s32.totalorder %s18, 1
      %p76 = por %p74, %p75
      %p78 = scmp.ne.s32.totalorder %s61, %s77
      %p79 = scmp.eq.s32.totalorder %s18, 0
      %p80 = por %p78, %p79
      %s81 = ssub.s32 %s19, %s31
      %p82 = scmp.eq.s32.totalorder %s81, 0
      %s84 = sadd.s32 %s83, 1
      %s85 = scalar_select %p82, %s83, %s84
      %p88 = pneg %p82
      %p89 = scmp.eq.s32.totalorder %s12, 1
      %p90 = por %p88, %p89
      %p91 = scmp.ne.s32.totalorder %s83, %s86
      %p92 = scmp.eq.s32.totalorder %s12, 0
      %p93 = por %p91, %p92
      %p94 = scmp.ne.s32.totalorder %s83, %s86
      %p95 = scmp.eq.s32.totalorder %s17, 1
      %p96 = por %p94, %p95
      %p97 = scmp.ne.s32.totalorder %s86, %s87
      %p98 = scmp.eq.s32.totalorder %s17, 0
      %p99 = por %p97, %p98
      %p100 = scmp.ne.s32.totalorder %s86, %s87
      %p101 = scmp.eq.s32.totalorder %s18, 1
      %p102 = por %p100, %p101
      %p104 = scmp.ne.s32.totalorder %s87, %s103
      %p105 = scmp.eq.s32.totalorder %s18, 0
      %p106 = por %p104, %p105
      %p107 = scmp.le.s32.totalorder 1, %s12
      %p108 = scmp.lt.s32.totalorder %s12, 3
      %p109 = pnand %p107, %p108
      %p110 = pneg %p109
      // Predicated region
      $region9: #{spatial_channel.1} parent=5 // pred_check
        _
      $region10: #{spatial_channel.1} parent=5 // pred_check_branch
        %112 = sbr.rel (%p109) target = $region12
      $region11: #{spatial_channel.1} parent=5 // pred_region
        %s113 = ssub.s32 %s12, 1
        // Predicated region
        $region13: #{spatial_channel.1} parent=11 // pred_check
          %p114 = pneg %p45
        $region14: #{spatial_channel.1} parent=11 // pred_check_branch
          %116 = sbr.rel (%p114) target = $region16
        $region15: #{spatial_channel.1} parent=11 // pred_region
          %118 = vsyncadd [#allocation7], 0
          %s120 = sshll.u32 %s0, 4
          %s121 = int_to_ptr.vmem [resolvable:$true] %s120
          %123 = dma.vmem_to_smem %s121, 16, [#allocation5], [#allocation7]
        $region16: #{spatial_channel.1} parent=11 // pred_fallthru
          _
      $region12: #{spatial_channel.1} parent=5 // pred_fallthru
        _
      %p124 = scmp.lt.s32.totalorder %s12, 2
      // Predicated region
      $region17: #{spatial_channel.1} parent=5 // pred_check
        %p125 = pneg %p124
      $region18: #{spatial_channel.1} parent=5 // pred_check_branch
        %127 = sbr.rel (%p125) target = $region20
      $region19: #{spatial_channel.1} parent=5 // pred_region
        // Predicated region
        $region21: #{spatial_channel.1} parent=19 // pred_check
          %p128 = pneg %p67
        $region22: #{spatial_channel.1} parent=19 // pred_check_branch
          %130 = sbr.rel (%p128) target = $region24
        $region23: #{spatial_channel.1} parent=19 // pred_region
          %p131 = scmp.lt.s32.totalorder %s19, 1
          %s132 = scalar_select %p131, %s19, 1
          %p133 = scmp.lt.s32.totalorder %s20, 0
          %s134 = scalar_select %p133, %s20, 0
          %s135 = smul.addr %s134, 2
          %s136 = smul.addr %s132, 2
          %s137 = sadd.s32 %s135, %s136
          %s138 = smul.addr %s137, 4
          %s139 = scalar_lea.vmem %s1, %s138
        $region24: #{spatial_channel.1} parent=19 // pred_fallthru
          _
      $region20: #{spatial_channel.1} parent=5 // pred_fallthru
        _
      %p140 = scmp.le.s32.totalorder 1, %s12
      %p141 = scmp.lt.s32.totalorder %s12, 3
      %p142 = pnand %p140, %p141
      %p143 = pneg %p142
      // Predicated region
      $region25: #{spatial_channel.1} parent=5 // pred_check
        _
      $region26: #{spatial_channel.1} parent=5 // pred_check_branch
        %145 = sbr.rel (%p142) target = $region28
      $region27: #{spatial_channel.1} parent=5 // pred_region
        %s146 = ssub.s32 %s12, 1
        // Predicated region
        $region29: #{spatial_channel.1} parent=27 // pred_check
          %p147 = pneg %p45
        $region30: #{spatial_channel.1} parent=27 // pred_check_branch
          %149 = sbr.rel (%p147) target = $region32
        $region31: #{spatial_channel.1} parent=27 // pred_region
          %151 = dma.done [#allocation7], 16
        $region32: #{spatial_channel.1} parent=27 // pred_fallthru
          _
        %152 = sfence
        %p153 = pneg %p45
        %p154 = pneg %p42
        %p155 = scmp.lt.s32.totalorder %s21, 1
        %s156 = scalar_select %p155, %s21, 1
        %p157 = scmp.lt.s32.totalorder %s22, 0
        %s158 = scalar_select %p157, %s22, 0
        %s159 = smul.addr %s158, 2
        %s160 = smul.addr %s156, 2
        %s161 = sadd.s32 %s159, %s160
        %s162 = smul.addr %s161, 4
        %s163 = scalar_lea.vmem %s1, %s162
        %p164 = pneg %p73
        %p165 = pneg %p70
        %p166 = pneg %p99
        %p167 = pneg %p96
        %s168 = sand.u32 %s86, 1
        %s169 = scalar_lea.sflag [#allocation6], %s168
        %s170 = sand.u32 %s86, 1
        %s171 = smul.addr %s170, 16
        %s172 = scalar_lea.vmem [#allocation8], %s171
        %p173 = scmp.lt.s32.totalorder %s21, 1
        %s174 = scalar_select %p173, %s21, 1
        %p175 = scmp.lt.s32.totalorder %s22, 0
        %s176 = scalar_select %p175, %s22, 0
        %s177 = smul.addr %s176, 2
        %s178 = smul.addr %s174, 2
        %s179 = sadd.s32 %s177, %s178
        %s180 = smul.addr %s179, 4
        %s181 = scalar_lea.vmem %s1, %s180
        %v182 = vld [vmem:[%s181] sm:$0xff]
        %184 = vst [vmem:[#allocation1] ss:$2 sm:$0xff] %v182
        %v185 = vld.sshfl [vmem:[#allocation1] sm:$0xff pattern:$0x75316420]
        %v186 = vld.sshfl [vmem:[#allocation1 + $0x8] sm:$0xff pattern:$0x75316420]
        %vm189 = vcmask 1043456
        %v190 = vsel %vm189, %v185, -inf
        %v191 = vrot.slane %v190, 4
        %v192 = vmax.f32 %v190, %v191
        %v193 = vrot.slane %v192, 2
        %v194 = vmax.f32 %v192, %v193
        %v195 = vrot.slane %v194, 1
        %v196 = vmax.f32 %v194, %v195
        %v197 = vsel %vm189, %v186, -inf
        %v198 = vrot.slane %v197, 4
        %v199 = vmax.f32 %v197, %v198
        %v200 = vrot.slane %v199, 2
        %v201 = vmax.f32 %v199, %v200
        %v202 = vrot.slane %v201, 1
        %v203 = vmax.f32 %v201, %v202
        %204 = vst [vmem:[#allocation1] ss:$2 sm:$0xff] %v182
        %v205 = vld.sshfl [vmem:[#allocation1] sm:$0xff pattern:$0x75316420]
        %v206 = vld.sshfl [vmem:[#allocation1 + $0x8] sm:$0xff pattern:$0x75316420]
        %v209 = vsel %vm189, %v205, 0.0
        %v210 = vrot.slane %v209, 4
        %v211 = vadd.f32 %v209, %v210
        %v212 = vrot.slane %v211, 2
        %v213 = vadd.f32 %v211, %v212
        %v214 = vrot.slane %v213, 1
        %v215 = vadd.f32 %v213, %v214
        %v216 = vsel %vm189, %v206, 0.0
        %v217 = vrot.slane %v216, 4
        %v218 = vadd.f32 %v216, %v217
        %v219 = vrot.slane %v218, 2
        %v220 = vadd.f32 %v218, %v219
        %v221 = vrot.slane %v220, 1
        %v222 = vadd.f32 %v220, %v221
        %p223 = scmp.eq.s32.totalorder %s22, 0
        // Predicated region
        $region33: #{spatial_channel.1} parent=27 // pred_check
          %p224 = pneg %p223
        $region34: #{spatial_channel.1} parent=27 // pred_check_branch
          %226 = sbr.rel (%p224) target = $region36
        $region35: #{spatial_channel.1} parent=27 // pred_region
          %v227 = vlaneseq
          %vm228 = vcmp.ge.s32.totalorder %v227, 0
          %vm229 = vcmp.lt.s32.totalorder %v227, 256
          %vm230 = vmand %vm228, %vm229
          %231 = vst.msk [vmem:[#allocation2] sm:$0x3] %vm230, -inf
          %232 = vst.msk [vmem:[#allocation3] sm:$0x3] %vm230, 0.0
        $region36: #{spatial_channel.1} parent=27 // pred_fallthru
          _
        %v233 = vld [vmem:[#allocation2] sm:$0x3]
        %v236 = vrot.slane %v203, 7
        %vm237 = vcmask 1040384
        %v238 = vsel %vm237, %v196, %v236
        %v240 = vmax.f32 %v233, %v238
        %v241 = vlaneseq
        %vm242 = vcmp.ge.s32.totalorder %v241, 0
        %vm243 = vcmp.lt.s32.totalorder %v241, 256
        %vm244 = vmand %vm242, %vm243
        %245 = vst.msk [vmem:[#allocation2] sm:$0x3] %vm244, %v240
        %v246 = vld [vmem:[#allocation3] sm:$0x3]
        %v249 = vrot.slane %v222, 7
        %v250 = vsel %vm237, %v215, %v249
        %v252 = vadd.f32 %v246, %v250
        %253 = vst.msk [vmem:[#allocation3] sm:$0x3] %vm244, %v252
        // Predicated region
        $region37: #{spatial_channel.1} parent=27 // pred_check
          %p254 = pneg %p223
        $region38: #{spatial_channel.1} parent=27 // pred_check_branch
          %256 = sbr.rel (%p254) target = $region40
        $region39: #{spatial_channel.1} parent=27 // pred_region
          %vm257 = vcmask 179200
          %258 = vst.msk [vmem:[#allocation4] sm:$0xff] %vm257, 0.0
          %259 = vst.msk [vmem:[#allocation4 + $0x8] sm:$0xff] %vm257, 0.0
          %vm260 = vcmask 177152
          %261 = vst.msk [vmem:[#allocation4 + $0x10] sm:$0x3f] %vm260, 0.0
          %262 = vst.msk [vmem:[#allocation4 + $0x18] sm:$0xff] %vm257, 0.0
          %263 = vst.msk [vmem:[#allocation4 + $0x20] sm:$0xff] %vm257, 0.0
          %264 = vst.msk [vmem:[#allocation4 + $0x28] sm:$0x3f] %vm260, 0.0
          %v265 = vld [vmem:[#allocation2] sm:$0x1]
          %v267 = vperm.slane %v265, 0
          %268 = vrot.lane.b32.xlu0 %v267, 3
          %v269 = vpop.permute.xlu0 %268
          %vm271 = vcmask 147480
          %272 = vst.msk [vmem:[#allocation4 + $0x3] sm:$0x1] %vm271, %v269
          %v273 = vld [vmem:[#allocation3] sm:$0x1]
          %v274 = vmul.f32 %v273, 0.25
          %v276 = vperm.slane %v274, 0
          %277 = vrot.lane.b32.xlu0 %v276, 3
          %v278 = vpop.permute.xlu0 %277
          %s280 = scalar_lea.vmem [#allocation4], 24
          %281 = vst.msk [vmem:[%s280 + $0x3] sm:$0x1] %vm271, %v278
          %v282 = vld [vmem:[#allocation2] sm:$0x1]
          %v284 = vperm.slane %v282, 0
          %285 = vrot.lane.b32.xlu0 %v284, 115
          %v286 = vpop.permute.xlu0 %285
          %288 = vst.msk [vmem:[#allocation4 + $0x4] sm:$0x1] %vm271, %v286
          %v289 = vld [vmem:[#allocation3] sm:$0x1]
          %v290 = vmul.f32 %v289, 0.25
          %v292 = vperm.slane %v290, 0
          %293 = vrot.lane.b32.xlu0 %v292, 115
          %v294 = vpop.permute.xlu0 %293
          %296 = vst.msk [vmem:[%s280 + $0x4] sm:$0x1] %vm271, %v294
          %v297 = vld [vmem:[#allocation2] sm:$0x1]
          %v299 = vperm.slane %v297, 0
          %300 = vrot.lane.b32.xlu0 %v299, 99
          %v301 = vpop.permute.xlu0 %300
          %303 = vst.msk [vmem:[#allocation4 + $0x5] sm:$0x1] %vm271, %v301
          %v304 = vld [vmem:[#allocation3] sm:$0x1]
          %v305 = vmul.f32 %v304, 0.25
          %v307 = vperm.slane %v305, 0
          %308 = vrot.lane.b32.xlu0 %v307, 99
          %v309 = vpop.permute.xlu0 %308
          %311 = vst.msk [vmem:[%s280 + $0x5] sm:$0x1] %vm271, %v309
          %v312 = vld [vmem:[#allocation2] sm:$0x1]
          %v314 = vperm.slane %v312, 0
          %315 = vrot.lane.b32.xlu0 %v314, 83
          %v316 = vpop.permute.xlu0 %315
          %318 = vst.msk [vmem:[#allocation4 + $0x6] sm:$0x1] %vm271, %v316
          %v319 = vld [vmem:[#allocation3] sm:$0x1]
          %v320 = vmul.f32 %v319, 0.25
          %v322 = vperm.slane %v320, 0
          %323 = vrot.lane.b32.xlu0 %v322, 83
          %v324 = vpop.permute.xlu0 %323
          %326 = vst.msk [vmem:[%s280 + $0x6] sm:$0x1] %vm271, %v324
          %v327 = vld [vmem:[#allocation2] sm:$0x1]
          %v329 = vperm.slane %v327, 0
          %330 = vrot.lane.b32.xlu0 %v329, 67
          %v331 = vpop.permute.xlu0 %330
          %333 = vst.msk [vmem:[#allocation4 + $0x7] sm:$0x1] %vm271, %v331
          %v334 = vld [vmem:[#allocation3] sm:$0x1]
          %v335 = vmul.f32 %v334, 0.25
          %v337 = vperm.slane %v335, 0
          %338 = vrot.lane.b32.xlu0 %v337, 67
          %v339 = vpop.permute.xlu0 %338
          %341 = vst.msk [vmem:[%s280 + $0x7] sm:$0x1] %vm271, %v339
          %v342 = vld [vmem:[#allocation2] sm:$0x1]
          %v344 = vperm.slane %v342, 0
          %345 = vrot.lane.b32.xlu0 %v344, 51
          %v346 = vpop.permute.xlu0 %345
          %348 = vst.msk [vmem:[#allocation4 + $0x8] sm:$0x1] %vm271, %v346
          %v349 = vld [vmem:[#allocation3] sm:$0x1]
          %v350 = vmul.f32 %v349, 0.25
          %v352 = vperm.slane %v350, 0
          %353 = vrot.lane.b32.xlu0 %v352, 51
          %v354 = vpop.permute.xlu0 %353
          %356 = vst.msk [vmem:[%s280 + $0x8] sm:$0x1] %vm271, %v354
          %v357 = vld [vmem:[#allocation2] sm:$0x1]
          %v359 = vperm.slane %v357, 0
          %360 = vrot.lane.b32.xlu0 %v359, 35
          %v361 = vpop.permute.xlu0 %360
          %363 = vst.msk [vmem:[#allocation4 + $0x9] sm:$0x1] %vm271, %v361
          %v364 = vld [vmem:[#allocation3] sm:$0x1]
          %v365 = vmul.f32 %v364, 0.25
          %v367 = vperm.slane %v365, 0
          %368 = vrot.lane.b32.xlu0 %v367, 35
          %v369 = vpop.permute.xlu0 %368
          %371 = vst.msk [vmem:[%s280 + $0x9] sm:$0x1] %vm271, %v369
          %v372 = vld [vmem:[#allocation2] sm:$0x1]
          %v374 = vperm.slane %v372, 0
          %375 = vrot.lane.b32.xlu0 %v374, 19
          %v376 = vpop.permute.xlu0 %375
          %378 = vst.msk [vmem:[#allocation4 + $0xa] sm:$0x1] %vm271, %v376
          %v379 = vld [vmem:[#allocation3] sm:$0x1]
          %v380 = vmul.f32 %v379, 0.25
          %v382 = vperm.slane %v380, 0
          %383 = vrot.lane.b32.xlu0 %v382, 19
          %v384 = vpop.permute.xlu0 %383
          %386 = vst.msk [vmem:[%s280 + $0xa] sm:$0x1] %vm271, %v384
          %v387 = vld [vmem:[#allocation2 + $0x1] sm:$0x1]
          %v389 = vperm.slane %v387, 0
          %390 = vrot.lane.b32.xlu0 %v389, 3
          %v391 = vpop.permute.xlu0 %390
          %393 = vst.msk [vmem:[#allocation4 + $0xb] sm:$0x1] %vm271, %v391
          %v394 = vld [vmem:[#allocation3 + $0x1] sm:$0x1]
          %v395 = vmul.f32 %v394, 0.25
          %v397 = vperm.slane %v395, 0
          %398 = vrot.lane.b32.xlu0 %v397, 3
          %v399 = vpop.permute.xlu0 %398
          %401 = vst.msk [vmem:[%s280 + $0xb] sm:$0x1] %vm271, %v399
          %v402 = vld [vmem:[#allocation2 + $0x1] sm:$0x1]
          %v404 = vperm.slane %v402, 0
          %405 = vrot.lane.b32.xlu0 %v404, 115
          %v406 = vpop.permute.xlu0 %405
          %408 = vst.msk [vmem:[#allocation4 + $0xc] sm:$0x1] %vm271, %v406
          %v409 = vld [vmem:[#allocation3 + $0x1] sm:$0x1]
          %v410 = vmul.f32 %v409, 0.25
          %v412 = vperm.slane %v410, 0
          %413 = vrot.lane.b32.xlu0 %v412, 115
          %v414 = vpop.permute.xlu0 %413
          %416 = vst.msk [vmem:[%s280 + $0xc] sm:$0x1] %vm271, %v414
          %v417 = vld [vmem:[#allocation2 + $0x1] sm:$0x1]
          %v419 = vperm.slane %v417, 0
          %420 = vrot.lane.b32.xlu0 %v419, 99
          %v421 = vpop.permute.xlu0 %420
          %423 = vst.msk [vmem:[#allocation4 + $0xd] sm:$0x1] %vm271, %v421
          %v424 = vld [vmem:[#allocation3 + $0x1] sm:$0x1]
          %v425 = vmul.f32 %v424, 0.25
          %v427 = vperm.slane %v425, 0
          %428 = vrot.lane.b32.xlu0 %v427, 99
          %v429 = vpop.permute.xlu0 %428
          %431 = vst.msk [vmem:[%s280 + $0xd] sm:$0x1] %vm271, %v429
          %v432 = vld [vmem:[#allocation2 + $0x1] sm:$0x1]
          %v434 = vperm.slane %v432, 0
          %435 = vrot.lane.b32.xlu0 %v434, 83
          %v436 = vpop.permute.xlu0 %435
          %438 = vst.msk [vmem:[#allocation4 + $0xe] sm:$0x1] %vm271, %v436
          %v439 = vld [vmem:[#allocation3 + $0x1] sm:$0x1]
          %v440 = vmul.f32 %v439, 0.25
          %v442 = vperm.slane %v440, 0
          %443 = vrot.lane.b32.xlu0 %v442, 83
          %v444 = vpop.permute.xlu0 %443
          %446 = vst.msk [vmem:[%s280 + $0xe] sm:$0x1] %vm271, %v444
          %v447 = vld [vmem:[#allocation2 + $0x1] sm:$0x1]
          %v449 = vperm.slane %v447, 0
          %450 = vrot.lane.b32.xlu0 %v449, 67
          %v451 = vpop.permute.xlu0 %450
          %453 = vst.msk [vmem:[#allocation4 + $0xf] sm:$0x1] %vm271, %v451
          %v454 = vld [vmem:[#allocation3 + $0x1] sm:$0x1]
          %v455 = vmul.f32 %v454, 0.25
          %v457 = vperm.slane %v455, 0
          %458 = vrot.lane.b32.xlu0 %v457, 67
          %v459 = vpop.permute.xlu0 %458
          %461 = vst.msk [vmem:[%s280 + $0xf] sm:$0x1] %vm271, %v459
          %v462 = vld [vmem:[#allocation2 + $0x1] sm:$0x1]
          %v464 = vperm.slane %v462, 0
          %465 = vrot.lane.b32.xlu0 %v464, 51
          %v466 = vpop.permute.xlu0 %465
          %468 = vst.msk [vmem:[#allocation4 + $0x10] sm:$0x1] %vm271, %v466
          %v469 = vld [vmem:[#allocation3 + $0x1] sm:$0x1]
          %v470 = vmul.f32 %v469, 0.25
          %v472 = vperm.slane %v470, 0
          %473 = vrot.lane.b32.xlu0 %v472, 51
          %v474 = vpop.permute.xlu0 %473
          %476 = vst.msk [vmem:[%s280 + $0x10] sm:$0x1] %vm271, %v474
          %v477 = vld [vmem:[#allocation2 + $0x1] sm:$0x1]
          %v479 = vperm.slane %v477, 0
          %480 = vrot.lane.b32.xlu0 %v479, 35
          %v481 = vpop.permute.xlu0 %480
          %483 = vst.msk [vmem:[#allocation4 + $0x11] sm:$0x1] %vm271, %v481
          %v484 = vld [vmem:[#allocation3 + $0x1] sm:$0x1]
          %v485 = vmul.f32 %v484, 0.25
          %v487 = vperm.slane %v485, 0
          %488 = vrot.lane.b32.xlu0 %v487, 35
          %v489 = vpop.permute.xlu0 %488
          %491 = vst.msk [vmem:[%s280 + $0x11] sm:$0x1] %vm271, %v489
          %v492 = vld [vmem:[#allocation2 + $0x1] sm:$0x1]
          %v494 = vperm.slane %v492, 0
          %495 = vrot.lane.b32.xlu0 %v494, 19
          %v496 = vpop.permute.xlu0 %495
          %498 = vst.msk [vmem:[#allocation4 + $0x12] sm:$0x1] %vm271, %v496
          %v499 = vld [vmem:[#allocation3 + $0x1] sm:$0x1]
          %v500 = vmul.f32 %v499, 0.25
          %v502 = vperm.slane %v500, 0
          %503 = vrot.lane.b32.xlu0 %v502, 19
          %v504 = vpop.permute.xlu0 %503
          %506 = vst.msk [vmem:[%s280 + $0x12] sm:$0x1] %vm271, %v504
          %s507 = sld [smem:[#allocation5]]
          %v508 = vld [vmem:[#allocation4] sm:$0xff]
          %v509 = vld [vmem:[#allocation4 + $0x8] sm:$0xff]
          %v510 = vstv %s507
          %v511 = vmul.f32 %v510, %v508
          %v512 = vmul.f32 %v510, %v509
          %v513 = vadd.f32 %v511, 0.0
          %v514 = vadd.f32 %v512, 0.0
          %s515 = sld [smem:[#allocation5 + $0x1]]
          %v516 = vstv %s515
          %v517 = vmul.f32 %v516, %v508
          %v518 = vmul.f32 %v516, %v509
          %521 = vrot.lane.b32.xlu0 %v517, 127
          %v522 = vpop.permute.xlu0 %521
          %523 = vrot.lane.b32.xlu0 %v518, 127
          %v524 = vpop.permute.xlu0 %523
          %v527 = vadd.f32 %v513, %v522
          %v528 = vadd.f32 %v514, %v524
          %s529 = sld [smem:[#allocation5 + $0x2]]
          %v530 = vstv %s529
          %v531 = vmul.f32 %v530, %v508
          %v532 = vmul.f32 %v530, %v509
          %535 = vrot.lane.b32.xlu0 %v531, 126
          %v536 = vpop.permute.xlu0 %535
          %537 = vrot.lane.b32.xlu0 %v532, 126
          %v538 = vpop.permute.xlu0 %537
          %v541 = vadd.f32 %v527, %v536
          %v542 = vadd.f32 %v528, %v538
          %s543 = sld [smem:[#allocation5 + $0x3]]
          %v544 = vstv %s543
          %v545 = vmul.f32 %v544, %v508
          %v546 = vmul.f32 %v544, %v509
          %549 = vrot.lane.b32.xlu0 %v545, 125
          %v550 = vpop.permute.xlu0 %549
          %551 = vrot.lane.b32.xlu0 %v546, 125
          %v552 = vpop.permute.xlu0 %551
          %v555 = vadd.f32 %v541, %v550
          %v556 = vadd.f32 %v542, %v552
          %s557 = sld [smem:[#allocation5 + $0x4]]
          %v558 = vstv %s557
          %v559 = vmul.f32 %v558, %v508
          %v560 = vmul.f32 %v558, %v509
          %563 = vrot.lane.b32.xlu0 %v559, 124
          %v564 = vpop.permute.xlu0 %563
          %565 = vrot.lane.b32.xlu0 %v560, 124
          %v566 = vpop.permute.xlu0 %565
          %v569 = vadd.f32 %v555, %v564
          %v570 = vadd.f32 %v556, %v566
          %s571 = sld [smem:[#allocation5 + $0x5]]
          %v572 = vstv %s571
          %v573 = vmul.f32 %v572, %v508
          %v574 = vmul.f32 %v572, %v509
          %577 = vrot.lane.b32.xlu0 %v573, 123
          %v578 = vpop.permute.xlu0 %577
          %579 = vrot.lane.b32.xlu0 %v574, 123
          %v580 = vpop.permute.xlu0 %579
          %v583 = vadd.f32 %v569, %v578
          %v584 = vadd.f32 %v570, %v580
          %s585 = sld [smem:[#allocation5 + $0x6]]
          %v586 = vstv %s585
          %v587 = vmul.f32 %v586, %v508
          %v588 = vmul.f32 %v586, %v509
          %591 = vrot.lane.b32.xlu0 %v587, 122
          %v592 = vpop.permute.xlu0 %591
          %593 = vrot.lane.b32.xlu0 %v588, 122
          %v594 = vpop.permute.xlu0 %593
          %v597 = vadd.f32 %v583, %v592
          %v598 = vadd.f32 %v584, %v594
          %s599 = sld [smem:[#allocation5 + $0x7]]
          %v600 = vld [vmem:[#allocation4 + $0x1] sm:$0xff]
          %v601 = vld [vmem:[#allocation4 + $0x9] sm:$0xff]
          %v602 = vstv %s599
          %v603 = vmul.f32 %v602, %v600
          %v604 = vmul.f32 %v602, %v601
          %v605 = vadd.f32 %v597, %v603
          %v606 = vadd.f32 %v598, %v604
          %s607 = sld [smem:[#allocation5 + $0x8]]
          %v608 = vstv %s607
          %v609 = vmul.f32 %v608, %v600
          %v610 = vmul.f32 %v608, %v601
          %613 = vrot.lane.b32.xlu0 %v609, 127
          %v614 = vpop.permute.xlu0 %613
          %615 = vrot.lane.b32.xlu0 %v610, 127
          %v616 = vpop.permute.xlu0 %615
          %v619 = vadd.f32 %v605, %v614
          %v620 = vadd.f32 %v606, %v616
          %s621 = sld [smem:[#allocation5 + $0x9]]
          %v622 = vstv %s621
          %v623 = vmul.f32 %v622, %v600
          %v624 = vmul.f32 %v622, %v601
          %627 = vrot.lane.b32.xlu0 %v623, 126
          %v628 = vpop.permute.xlu0 %627
          %629 = vrot.lane.b32.xlu0 %v624, 126
          %v630 = vpop.permute.xlu0 %629
          %v633 = vadd.f32 %v619, %v628
          %v634 = vadd.f32 %v620, %v630
          %s635 = sld [smem:[#allocation5 + $0xa]]
          %v636 = vstv %s635
          %v637 = vmul.f32 %v636, %v600
          %v638 = vmul.f32 %v636, %v601
          %641 = vrot.lane.b32.xlu0 %v637, 125
          %v642 = vpop.permute.xlu0 %641
          %643 = vrot.lane.b32.xlu0 %v638, 125
          %v644 = vpop.permute.xlu0 %643
          %v647 = vadd.f32 %v633, %v642
          %v648 = vadd.f32 %v634, %v644
          %s649 = sld [smem:[#allocation5 + $0xb]]
          %v650 = vstv %s649
          %v651 = vmul.f32 %v650, %v600
          %v652 = vmul.f32 %v650, %v601
          %655 = vrot.lane.b32.xlu0 %v651, 124
          %v656 = vpop.permute.xlu0 %655
          %657 = vrot.lane.b32.xlu0 %v652, 124
          %v658 = vpop.permute.xlu0 %657
          %v661 = vadd.f32 %v647, %v656
          %v662 = vadd.f32 %v648, %v658
          %s663 = sld [smem:[#allocation5 + $0xc]]
          %v664 = vstv %s663
          %v665 = vmul.f32 %v664, %v600
          %v666 = vmul.f32 %v664, %v601
          %669 = vrot.lane.b32.xlu0 %v665, 123
          %v670 = vpop.permute.xlu0 %669
          %671 = vrot.lane.b32.xlu0 %v666, 123
          %v672 = vpop.permute.xlu0 %671
          %v675 = vadd.f32 %v661, %v670
          %v676 = vadd.f32 %v662, %v672
          %s677 = sld [smem:[#allocation5 + $0xd]]
          %v678 = vstv %s677
          %v679 = vmul.f32 %v678, %v600
          %v680 = vmul.f32 %v678, %v601
          %683 = vrot.lane.b32.xlu0 %v679, 122
          %v684 = vpop.permute.xlu0 %683
          %685 = vrot.lane.b32.xlu0 %v680, 122
          %v686 = vpop.permute.xlu0 %685
          %v689 = vadd.f32 %v675, %v684
          %v690 = vadd.f32 %v676, %v686
          %s691 = sld [smem:[#allocation5 + $0xe]]
          %v692 = vld [vmem:[#allocation4 + $0x2] sm:$0xff]
          %v693 = vld [vmem:[#allocation4 + $0xa] sm:$0xff]
          %v694 = vstv %s691
          %v695 = vmul.f32 %v694, %v692
          %v696 = vmul.f32 %v694, %v693
          %v697 = vadd.f32 %v689, %v695
          %v698 = vadd.f32 %v690, %v696
          %s699 = sld [smem:[#allocation5 + $0xf]]
          %v700 = vstv %s699
          %v701 = vmul.f32 %v700, %v692
          %v702 = vmul.f32 %v700, %v693
          %705 = vrot.lane.b32.xlu0 %v701, 127
          %v706 = vpop.permute.xlu0 %705
          %707 = vrot.lane.b32.xlu0 %v702, 127
          %v708 = vpop.permute.xlu0 %707
          %v711 = vadd.f32 %v697, %v706
          %v712 = vadd.f32 %v698, %v708
          %s713 = sld [smem:[#allocation5 + $0x10]]
          %v714 = vstv %s713
          %v715 = vmul.f32 %v714, %v692
          %v716 = vmul.f32 %v714, %v693
          %719 = vrot.lane.b32.xlu0 %v715, 126
          %v720 = vpop.permute.xlu0 %719
          %721 = vrot.lane.b32.xlu0 %v716, 126
          %v722 = vpop.permute.xlu0 %721
          %v725 = vadd.f32 %v711, %v720
          %v726 = vadd.f32 %v712, %v722
          %s727 = sld [smem:[#allocation5 + $0x11]]
          %v728 = vstv %s727
          %v729 = vmul.f32 %v728, %v692
          %v730 = vmul.f32 %v728, %v693
          %733 = vrot.lane.b32.xlu0 %v729, 125
          %v734 = vpop.permute.xlu0 %733
          %735 = vrot.lane.b32.xlu0 %v730, 125
          %v736 = vpop.permute.xlu0 %735
          %v739 = vadd.f32 %v725, %v734
          %v740 = vadd.f32 %v726, %v736
          %s741 = sld [smem:[#allocation5 + $0x12]]
          %v742 = vstv %s741
          %v743 = vmul.f32 %v742, %v692
          %v744 = vmul.f32 %v742, %v693
          %747 = vrot.lane.b32.xlu0 %v743, 124
          %v748 = vpop.permute.xlu0 %747
          %749 = vrot.lane.b32.xlu0 %v744, 124
          %v750 = vpop.permute.xlu0 %749
          %v753 = vadd.f32 %v739, %v748
          %v754 = vadd.f32 %v740, %v750
          %s755 = sld [smem:[#allocation5 + $0x13]]
          %v756 = vstv %s755
          %v757 = vmul.f32 %v756, %v692
          %v758 = vmul.f32 %v756, %v693
          %761 = vrot.lane.b32.xlu0 %v757, 123
          %v762 = vpop.permute.xlu0 %761
          %763 = vrot.lane.b32.xlu0 %v758, 123
          %v764 = vpop.permute.xlu0 %763
          %v767 = vadd.f32 %v753, %v762
          %v768 = vadd.f32 %v754, %v764
          %s769 = sld [smem:[#allocation5 + $0x14]]
          %v770 = vstv %s769
          %v771 = vmul.f32 %v770, %v692
          %v772 = vmul.f32 %v770, %v693
          %775 = vrot.lane.b32.xlu0 %v771, 122
          %v776 = vpop.permute.xlu0 %775
          %777 = vrot.lane.b32.xlu0 %v772, 122
          %v778 = vpop.permute.xlu0 %777
          %v781 = vadd.f32 %v767, %v776
          %v782 = vadd.f32 %v768, %v778
          %s783 = sld [smem:[#allocation5 + $0x15]]
          %v784 = vld [vmem:[#allocation4 + $0x3] sm:$0xff]
          %v785 = vld [vmem:[#allocation4 + $0xb] sm:$0xff]
          %v786 = vstv %s783
          %v787 = vmul.f32 %v786, %v784
          %v788 = vmul.f32 %v786, %v785
          %v789 = vadd.f32 %v781, %v787
          %v790 = vadd.f32 %v782, %v788
          %s791 = sld [smem:[#allocation5 + $0x16]]
          %v792 = vstv %s791
          %v793 = vmul.f32 %v792, %v784
          %v794 = vmul.f32 %v792, %v785
          %797 = vrot.lane.b32.xlu0 %v793, 127
          %v798 = vpop.permute.xlu0 %797
          %799 = vrot.lane.b32.xlu0 %v794, 127
          %v800 = vpop.permute.xlu0 %799
          %v803 = vadd.f32 %v789, %v798
          %v804 = vadd.f32 %v790, %v800
          %s805 = sld [smem:[#allocation5 + $0x17]]
          %v806 = vstv %s805
          %v807 = vmul.f32 %v806, %v784
          %v808 = vmul.f32 %v806, %v785
          %811 = vrot.lane.b32.xlu0 %v807, 126
          %v812 = vpop.permute.xlu0 %811
          %813 = vrot.lane.b32.xlu0 %v808, 126
          %v814 = vpop.permute.xlu0 %813
          %v817 = vadd.f32 %v803, %v812
          %v818 = vadd.f32 %v804, %v814
          %s819 = sld [smem:[#allocation5 + $0x18]]
          %v820 = vstv %s819
          %v821 = vmul.f32 %v820, %v784
          %v822 = vmul.f32 %v820, %v785
          %825 = vrot.lane.b32.xlu0 %v821, 125
          %v826 = vpop.permute.xlu0 %825
          %827 = vrot.lane.b32.xlu0 %v822, 125
          %v828 = vpop.permute.xlu0 %827
          %v831 = vadd.f32 %v817, %v826
          %v832 = vadd.f32 %v818, %v828
          %s833 = sld [smem:[#allocation5 + $0x19]]
          %v834 = vstv %s833
          %v835 = vmul.f32 %v834, %v784
          %v836 = vmul.f32 %v834, %v785
          %839 = vrot.lane.b32.xlu0 %v835, 124
          %v840 = vpop.permute.xlu0 %839
          %841 = vrot.lane.b32.xlu0 %v836, 124
          %v842 = vpop.permute.xlu0 %841
          %v845 = vadd.f32 %v831, %v840
          %v846 = vadd.f32 %v832, %v842
          %s847 = sld [smem:[#allocation5 + $0x1a]]
          %v848 = vstv %s847
          %v849 = vmul.f32 %v848, %v784
          %v850 = vmul.f32 %v848, %v785
          %853 = vrot.lane.b32.xlu0 %v849, 123
          %v854 = vpop.permute.xlu0 %853
          %855 = vrot.lane.b32.xlu0 %v850, 123
          %v856 = vpop.permute.xlu0 %855
          %v859 = vadd.f32 %v845, %v854
          %v860 = vadd.f32 %v846, %v856
          %s861 = sld [smem:[#allocation5 + $0x1b]]
          %v862 = vstv %s861
          %v863 = vmul.f32 %v862, %v784
          %v864 = vmul.f32 %v862, %v785
          %867 = vrot.lane.b32.xlu0 %v863, 122
          %v868 = vpop.permute.xlu0 %867
          %869 = vrot.lane.b32.xlu0 %v864, 122
          %v870 = vpop.permute.xlu0 %869
          %v873 = vadd.f32 %v859, %v868
          %v874 = vadd.f32 %v860, %v870
          %s875 = sld [smem:[#allocation5 + $0x1c]]
          %v876 = vld [vmem:[#allocation4 + $0x4] sm:$0xff]
          %v877 = vld [vmem:[#allocation4 + $0xc] sm:$0xff]
          %v878 = vstv %s875
          %v879 = vmul.f32 %v878, %v876
          %v880 = vmul.f32 %v878, %v877
          %v881 = vadd.f32 %v873, %v879
          %v882 = vadd.f32 %v874, %v880
          %s883 = sld [smem:[#allocation5 + $0x1d]]
          %v884 = vstv %s883
          %v885 = vmul.f32 %v884, %v876
          %v886 = vmul.f32 %v884, %v877
          %889 = vrot.lane.b32.xlu0 %v885, 127
          %v890 = vpop.permute.xlu0 %889
          %891 = vrot.lane.b32.xlu0 %v886, 127
          %v892 = vpop.permute.xlu0 %891
          %v895 = vadd.f32 %v881, %v890
          %v896 = vadd.f32 %v882, %v892
          %s897 = sld [smem:[#allocation5 + $0x1e]]
          %v898 = vstv %s897
          %v899 = vmul.f32 %v898, %v876
          %v900 = vmul.f32 %v898, %v877
          %903 = vrot.lane.b32.xlu0 %v899, 126
          %v904 = vpop.permute.xlu0 %903
          %905 = vrot.lane.b32.xlu0 %v900, 126
          %v906 = vpop.permute.xlu0 %905
          %v909 = vadd.f32 %v895, %v904
          %v910 = vadd.f32 %v896, %v906
          %s911 = sld [smem:[#allocation5 + $0x1f]]
          %v912 = vstv %s911
          %v913 = vmul.f32 %v912, %v876
          %v914 = vmul.f32 %v912, %v877
          %917 = vrot.lane.b32.xlu0 %v913, 125
          %v918 = vpop.permute.xlu0 %917
          %919 = vrot.lane.b32.xlu0 %v914, 125
          %v920 = vpop.permute.xlu0 %919
          %v923 = vadd.f32 %v909, %v918
          %v924 = vadd.f32 %v910, %v920
          %s925 = sld [smem:[#allocation5 + $0x20]]
          %v926 = vstv %s925
          %v927 = vmul.f32 %v926, %v876
          %v928 = vmul.f32 %v926, %v877
          %931 = vrot.lane.b32.xlu0 %v927, 124
          %v932 = vpop.permute.xlu0 %931
          %933 = vrot.lane.b32.xlu0 %v928, 124
          %v934 = vpop.permute.xlu0 %933
          %v937 = vadd.f32 %v923, %v932
          %v938 = vadd.f32 %v924, %v934
          %s939 = sld [smem:[#allocation5 + $0x21]]
          %v940 = vstv %s939
          %v941 = vmul.f32 %v940, %v876
          %v942 = vmul.f32 %v940, %v877
          %945 = vrot.lane.b32.xlu0 %v941, 123
          %v946 = vpop.permute.xlu0 %945
          %947 = vrot.lane.b32.xlu0 %v942, 123
          %v948 = vpop.permute.xlu0 %947
          %v951 = vadd.f32 %v937, %v946
          %v952 = vadd.f32 %v938, %v948
          %s953 = sld [smem:[#allocation5 + $0x22]]
          %v954 = vstv %s953
          %v955 = vmul.f32 %v954, %v876
          %v956 = vmul.f32 %v954, %v877
          %959 = vrot.lane.b32.xlu0 %v955, 122
          %v960 = vpop.permute.xlu0 %959
          %961 = vrot.lane.b32.xlu0 %v956, 122
          %v962 = vpop.permute.xlu0 %961
          %v965 = vadd.f32 %v951, %v960
          %v966 = vadd.f32 %v952, %v962
          %s967 = sld [smem:[#allocation5 + $0x23]]
          %v968 = vld [vmem:[#allocation4 + $0x5] sm:$0xff]
          %v969 = vld [vmem:[#allocation4 + $0xd] sm:$0xff]
          %v970 = vstv %s967
          %v971 = vmul.f32 %v970, %v968
          %v972 = vmul.f32 %v970, %v969
          %v973 = vadd.f32 %v965, %v971
          %v974 = vadd.f32 %v966, %v972
          %s975 = sld [smem:[#allocation5 + $0x24]]
          %v976 = vstv %s975
          %v977 = vmul.f32 %v976, %v968
          %v978 = vmul.f32 %v976, %v969
          %981 = vrot.lane.b32.xlu0 %v977, 127
          %v982 = vpop.permute.xlu0 %981
          %983 = vrot.lane.b32.xlu0 %v978, 127
          %v984 = vpop.permute.xlu0 %983
          %v987 = vadd.f32 %v973, %v982
          %v988 = vadd.f32 %v974, %v984
          %s989 = sld [smem:[#allocation5 + $0x25]]
          %v990 = vstv %s989
          %v991 = vmul.f32 %v990, %v968
          %v992 = vmul.f32 %v990, %v969
          %995 = vrot.lane.b32.xlu0 %v991, 126
          %v996 = vpop.permute.xlu0 %995
          %997 = vrot.lane.b32.xlu0 %v992, 126
          %v998 = vpop.permute.xlu0 %997
          %v1001 = vadd.f32 %v987, %v996
          %v1002 = vadd.f32 %v988, %v998
          %s1003 = sld [smem:[#allocation5 + $0x26]]
          %v1004 = vstv %s1003
          %v1005 = vmul.f32 %v1004, %v968
          %v1006 = vmul.f32 %v1004, %v969
          %1009 = vrot.lane.b32.xlu0 %v1005, 125
          %v1010 = vpop.permute.xlu0 %1009
          %1011 = vrot.lane.b32.xlu0 %v1006, 125
          %v1012 = vpop.permute.xlu0 %1011
          %v1015 = vadd.f32 %v1001, %v1010
          %v1016 = vadd.f32 %v1002, %v1012
          %s1017 = sld [smem:[#allocation5 + $0x27]]
          %v1018 = vstv %s1017
          %v1019 = vmul.f32 %v1018, %v968
          %v1020 = vmul.f32 %v1018, %v969
          %1023 = vrot.lane.b32.xlu0 %v1019, 124
          %v1024 = vpop.permute.xlu0 %1023
          %1025 = vrot.lane.b32.xlu0 %v1020, 124
          %v1026 = vpop.permute.xlu0 %1025
          %v1029 = vadd.f32 %v1015, %v1024
          %v1030 = vadd.f32 %v1016, %v1026
          %s1031 = sld [smem:[#allocation5 + $0x28]]
          %v1032 = vstv %s1031
          %v1033 = vmul.f32 %v1032, %v968
          %v1034 = vmul.f32 %v1032, %v969
          %1037 = vrot.lane.b32.xlu0 %v1033, 123
          %v1038 = vpop.permute.xlu0 %1037
          %1039 = vrot.lane.b32.xlu0 %v1034, 123
          %v1040 = vpop.permute.xlu0 %1039
          %v1043 = vadd.f32 %v1029, %v1038
          %v1044 = vadd.f32 %v1030, %v1040
          %s1045 = sld [smem:[#allocation5 + $0x29]]
          %v1046 = vstv %s1045
          %v1047 = vmul.f32 %v1046, %v968
          %v1048 = vmul.f32 %v1046, %v969
          %1051 = vrot.lane.b32.xlu0 %v1047, 122
          %v1052 = vpop.permute.xlu0 %1051
          %1053 = vrot.lane.b32.xlu0 %v1048, 122
          %v1054 = vpop.permute.xlu0 %1053
          %v1057 = vadd.f32 %v1043, %v1052
          %v1058 = vadd.f32 %v1044, %v1054
          %s1059 = sld [smem:[#allocation5 + $0x2a]]
          %v1060 = vld [vmem:[#allocation4 + $0x6] sm:$0xff]
          %v1061 = vld [vmem:[#allocation4 + $0xe] sm:$0xff]
          %v1062 = vstv %s1059
          %v1063 = vmul.f32 %v1062, %v1060
          %v1064 = vmul.f32 %v1062, %v1061
          %v1065 = vadd.f32 %v1057, %v1063
          %v1066 = vadd.f32 %v1058, %v1064
          %s1067 = sld [smem:[#allocation5 + $0x2b]]
          %v1068 = vstv %s1067
          %v1069 = vmul.f32 %v1068, %v1060
          %v1070 = vmul.f32 %v1068, %v1061
          %1073 = vrot.lane.b32.xlu0 %v1069, 127
          %v1074 = vpop.permute.xlu0 %1073
          %1075 = vrot.lane.b32.xlu0 %v1070, 127
          %v1076 = vpop.permute.xlu0 %1075
          %v1079 = vadd.f32 %v1065, %v1074
          %v1080 = vadd.f32 %v1066, %v1076
          %s1081 = sld [smem:[#allocation5 + $0x2c]]
          %v1082 = vstv %s1081
          %v1083 = vmul.f32 %v1082, %v1060
          %v1084 = vmul.f32 %v1082, %v1061
          %1087 = vrot.lane.b32.xlu0 %v1083, 126
          %v1088 = vpop.permute.xlu0 %1087
          %1089 = vrot.lane.b32.xlu0 %v1084, 126
          %v1090 = vpop.permute.xlu0 %1089
          %v1093 = vadd.f32 %v1079, %v1088
          %v1094 = vadd.f32 %v1080, %v1090
          %s1095 = sld [smem:[#allocation5 + $0x2d]]
          %v1096 = vstv %s1095
          %v1097 = vmul.f32 %v1096, %v1060
          %v1098 = vmul.f32 %v1096, %v1061
          %1101 = vrot.lane.b32.xlu0 %v1097, 125
          %v1102 = vpop.permute.xlu0 %1101
          %1103 = vrot.lane.b32.xlu0 %v1098, 125
          %v1104 = vpop.permute.xlu0 %1103
          %v1107 = vadd.f32 %v1093, %v1102
          %v1108 = vadd.f32 %v1094, %v1104
          %s1109 = sld [smem:[#allocation5 + $0x2e]]
          %v1110 = vstv %s1109
          %v1111 = vmul.f32 %v1110, %v1060
          %v1112 = vmul.f32 %v1110, %v1061
          %1115 = vrot.lane.b32.xlu0 %v1111, 124
          %v1116 = vpop.permute.xlu0 %1115
          %1117 = vrot.lane.b32.xlu0 %v1112, 124
          %v1118 = vpop.permute.xlu0 %1117
          %v1121 = vadd.f32 %v1107, %v1116
          %v1122 = vadd.f32 %v1108, %v1118
          %s1123 = sld [smem:[#allocation5 + $0x2f]]
          %v1124 = vstv %s1123
          %v1125 = vmul.f32 %v1124, %v1060
          %v1126 = vmul.f32 %v1124, %v1061
          %1129 = vrot.lane.b32.xlu0 %v1125, 123
          %v1130 = vpop.permute.xlu0 %1129
          %1131 = vrot.lane.b32.xlu0 %v1126, 123
          %v1132 = vpop.permute.xlu0 %1131
          %v1135 = vadd.f32 %v1121, %v1130
          %v1136 = vadd.f32 %v1122, %v1132
          %s1137 = sld [smem:[#allocation5 + $0x30]]
          %v1138 = vstv %s1137
          %v1139 = vmul.f32 %v1138, %v1060
          %v1140 = vmul.f32 %v1138, %v1061
          %1143 = vrot.lane.b32.xlu0 %v1139, 122
          %v1144 = vpop.permute.xlu0 %1143
          %1145 = vrot.lane.b32.xlu0 %v1140, 122
          %v1146 = vpop.permute.xlu0 %1145
          %v1149 = vadd.f32 %v1135, %v1144
          %v1150 = vadd.f32 %v1136, %v1146
          %s1151 = sld [smem:[#allocation5 + $0x31]]
          %v1152 = vld [vmem:[%s280] sm:$0xff]
          %v1153 = vld [vmem:[%s280 + $0x8] sm:$0xff]
          %v1154 = vstv %s1151
          %v1155 = vmul.f32 %v1154, %v1152
          %v1156 = vmul.f32 %v1154, %v1153
          %v1157 = vadd.f32 %v1149, %v1155
          %v1158 = vadd.f32 %v1150, %v1156
          %s1159 = sld [smem:[#allocation5 + $0x32]]
          %v1160 = vstv %s1159
          %v1161 = vmul.f32 %v1160, %v1152
          %v1162 = vmul.f32 %v1160, %v1153
          %1165 = vrot.lane.b32.xlu0 %v1161, 127
          %v1166 = vpop.permute.xlu0 %1165
          %1167 = vrot.lane.b32.xlu0 %v1162, 127
          %v1168 = vpop.permute.xlu0 %1167
          %v1171 = vadd.f32 %v1157, %v1166
          %v1172 = vadd.f32 %v1158, %v1168
          %s1173 = sld [smem:[#allocation5 + $0x33]]
          %v1174 = vstv %s1173
          %v1175 = vmul.f32 %v1174, %v1152
          %v1176 = vmul.f32 %v1174, %v1153
          %1179 = vrot.lane.b32.xlu0 %v1175, 126
          %v1180 = vpop.permute.xlu0 %1179
          %1181 = vrot.lane.b32.xlu0 %v1176, 126
          %v1182 = vpop.permute.xlu0 %1181
          %v1185 = vadd.f32 %v1171, %v1180
          %v1186 = vadd.f32 %v1172, %v1182
          %s1187 = sld [smem:[#allocation5 + $0x34]]
          %v1188 = vstv %s1187
          %v1189 = vmul.f32 %v1188, %v1152
          %v1190 = vmul.f32 %v1188, %v1153
          %1193 = vrot.lane.b32.xlu0 %v1189, 125
          %v1194 = vpop.permute.xlu0 %1193
          %1195 = vrot.lane.b32.xlu0 %v1190, 125
          %v1196 = vpop.permute.xlu0 %1195
          %v1199 = vadd.f32 %v1185, %v1194
          %v1200 = vadd.f32 %v1186, %v1196
          %s1201 = sld [smem:[#allocation5 + $0x35]]
          %v1202 = vstv %s1201
          %v1203 = vmul.f32 %v1202, %v1152
          %v1204 = vmul.f32 %v1202, %v1153
          %1207 = vrot.lane.b32.xlu0 %v1203, 124
          %v1208 = vpop.permute.xlu0 %1207
          %1209 = vrot.lane.b32.xlu0 %v1204, 124
          %v1210 = vpop.permute.xlu0 %1209
          %v1213 = vadd.f32 %v1199, %v1208
          %v1214 = vadd.f32 %v1200, %v1210
          %s1215 = sld [smem:[#allocation5 + $0x36]]
          %v1216 = vstv %s1215
          %v1217 = vmul.f32 %v1216, %v1152
          %v1218 = vmul.f32 %v1216, %v1153
          %1221 = vrot.lane.b32.xlu0 %v1217, 123
          %v1222 = vpop.permute.xlu0 %1221
          %1223 = vrot.lane.b32.xlu0 %v1218, 123
          %v1224 = vpop.permute.xlu0 %1223
          %v1227 = vadd.f32 %v1213, %v1222
          %v1228 = vadd.f32 %v1214, %v1224
          %s1229 = sld [smem:[#allocation5 + $0x37]]
          %v1230 = vstv %s1229
          %v1231 = vmul.f32 %v1230, %v1152
          %v1232 = vmul.f32 %v1230, %v1153
          %1235 = vrot.lane.b32.xlu0 %v1231, 122
          %v1236 = vpop.permute.xlu0 %1235
          %1237 = vrot.lane.b32.xlu0 %v1232, 122
          %v1238 = vpop.permute.xlu0 %1237
          %v1241 = vadd.f32 %v1227, %v1236
          %v1242 = vadd.f32 %v1228, %v1238
          %s1243 = sld [smem:[#allocation5 + $0x38]]
          %v1244 = vld [vmem:[%s280 + $0x1] sm:$0xff]
          %v1245 = vld [vmem:[%s280 + $0x9] sm:$0xff]
          %v1246 = vstv %s1243
          %v1247 = vmul.f32 %v1246, %v1244
          %v1248 = vmul.f32 %v1246, %v1245
          %v1249 = vadd.f32 %v1241, %v1247
          %v1250 = vadd.f32 %v1242, %v1248
          %s1251 = sld [smem:[#allocation5 + $0x39]]
          %v1252 = vstv %s1251
          %v1253 = vmul.f32 %v1252, %v1244
          %v1254 = vmul.f32 %v1252, %v1245
          %1257 = vrot.lane.b32.xlu0 %v1253, 127
          %v1258 = vpop.permute.xlu0 %1257
          %1259 = vrot.lane.b32.xlu0 %v1254, 127
          %v1260 = vpop.permute.xlu0 %1259
          %v1263 = vadd.f32 %v1249, %v1258
          %v1264 = vadd.f32 %v1250, %v1260
          %s1265 = sld [smem:[#allocation5 + $0x3a]]
          %v1266 = vstv %s1265
          %v1267 = vmul.f32 %v1266, %v1244
          %v1268 = vmul.f32 %v1266, %v1245
          %1271 = vrot.lane.b32.xlu0 %v1267, 126
          %v1272 = vpop.permute.xlu0 %1271
          %1273 = vrot.lane.b32.xlu0 %v1268, 126
          %v1274 = vpop.permute.xlu0 %1273
          %v1277 = vadd.f32 %v1263, %v1272
          %v1278 = vadd.f32 %v1264, %v1274
          %s1279 = sld [smem:[#allocation5 + $0x3b]]
          %v1280 = vstv %s1279
          %v1281 = vmul.f32 %v1280, %v1244
          %v1282 = vmul.f32 %v1280, %v1245
          %1285 = vrot.lane.b32.xlu0 %v1281, 125
          %v1286 = vpop.permute.xlu0 %1285
          %1287 = vrot.lane.b32.xlu0 %v1282, 125
          %v1288 = vpop.permute.xlu0 %1287
          %v1291 = vadd.f32 %v1277, %v1286
          %v1292 = vadd.f32 %v1278, %v1288
          %s1293 = sld [smem:[#allocation5 + $0x3c]]
          %v1294 = vstv %s1293
          %v1295 = vmul.f32 %v1294, %v1244
          %v1296 = vmul.f32 %v1294, %v1245
          %1299 = vrot.lane.b32.xlu0 %v1295, 124
          %v1300 = vpop.permute.xlu0 %1299
          %1301 = vrot.lane.b32.xlu0 %v1296, 124
          %v1302 = vpop.permute.xlu0 %1301
          %v1305 = vadd.f32 %v1291, %v1300
          %v1306 = vadd.f32 %v1292, %v1302
          %s1307 = sld [smem:[#allocation5 + $0x3d]]
          %v1308 = vstv %s1307
          %v1309 = vmul.f32 %v1308, %v1244
          %v1310 = vmul.f32 %v1308, %v1245
          %1313 = vrot.lane.b32.xlu0 %v1309, 123
          %v1314 = vpop.permute.xlu0 %1313
          %1315 = vrot.lane.b32.xlu0 %v1310, 123
          %v1316 = vpop.permute.xlu0 %1315
          %v1319 = vadd.f32 %v1305, %v1314
          %v1320 = vadd.f32 %v1306, %v1316
          %s1321 = sld [smem:[#allocation5 + $0x3e]]
          %v1322 = vstv %s1321
          %v1323 = vmul.f32 %v1322, %v1244
          %v1324 = vmul.f32 %v1322, %v1245
          %1327 = vrot.lane.b32.xlu0 %v1323, 122
          %v1328 = vpop.permute.xlu0 %1327
          %1329 = vrot.lane.b32.xlu0 %v1324, 122
          %v1330 = vpop.permute.xlu0 %1329
          %v1333 = vadd.f32 %v1319, %v1328
          %v1334 = vadd.f32 %v1320, %v1330
          %s1335 = sld [smem:[#allocation5 + $0x3f]]
          %v1336 = vld [vmem:[%s280 + $0x2] sm:$0xff]
          %v1337 = vld [vmem:[%s280 + $0xa] sm:$0xff]
          %v1338 = vstv %s1335
          %v1339 = vmul.f32 %v1338, %v1336
          %v1340 = vmul.f32 %v1338, %v1337
          %v1341 = vadd.f32 %v1333, %v1339
          %v1342 = vadd.f32 %v1334, %v1340
          %s1343 = sld [smem:[#allocation5 + $0x40]]
          %v1344 = vstv %s1343
          %v1345 = vmul.f32 %v1344, %v1336
          %v1346 = vmul.f32 %v1344, %v1337
          %1349 = vrot.lane.b32.xlu0 %v1345, 127
          %v1350 = vpop.permute.xlu0 %1349
          %1351 = vrot.lane.b32.xlu0 %v1346, 127
          %v1352 = vpop.permute.xlu0 %1351
          %v1355 = vadd.f32 %v1341, %v1350
          %v1356 = vadd.f32 %v1342, %v1352
          %s1357 = sld [smem:[#allocation5 + $0x41]]
          %v1358 = vstv %s1357
          %v1359 = vmul.f32 %v1358, %v1336
          %v1360 = vmul.f32 %v1358, %v1337
          %1363 = vrot.lane.b32.xlu0 %v1359, 126
          %v1364 = vpop.permute.xlu0 %1363
          %1365 = vrot.lane.b32.xlu0 %v1360, 126
          %v1366 = vpop.permute.xlu0 %1365
          %v1369 = vadd.f32 %v1355, %v1364
          %v1370 = vadd.f32 %v1356, %v1366
          %s1371 = sld [smem:[#allocation5 + $0x42]]
          %v1372 = vstv %s1371
          %v1373 = vmul.f32 %v1372, %v1336
          %v1374 = vmul.f32 %v1372, %v1337
          %1377 = vrot.lane.b32.xlu0 %v1373, 125
          %v1378 = vpop.permute.xlu0 %1377
          %1379 = vrot.lane.b32.xlu0 %v1374, 125
          %v1380 = vpop.permute.xlu0 %1379
          %v1383 = vadd.f32 %v1369, %v1378
          %v1384 = vadd.f32 %v1370, %v1380
          %s1385 = sld [smem:[#allocation5 + $0x43]]
          %v1386 = vstv %s1385
          %v1387 = vmul.f32 %v1386, %v1336
          %v1388 = vmul.f32 %v1386, %v1337
          %1391 = vrot.lane.b32.xlu0 %v1387, 124
          %v1392 = vpop.permute.xlu0 %1391
          %1393 = vrot.lane.b32.xlu0 %v1388, 124
          %v1394 = vpop.permute.xlu0 %1393
          %v1397 = vadd.f32 %v1383, %v1392
          %v1398 = vadd.f32 %v1384, %v1394
          %s1399 = sld [smem:[#allocation5 + $0x44]]
          %v1400 = vstv %s1399
          %v1401 = vmul.f32 %v1400, %v1336
          %v1402 = vmul.f32 %v1400, %v1337
          %1405 = vrot.lane.b32.xlu0 %v1401, 123
          %v1406 = vpop.permute.xlu0 %1405
          %1407 = vrot.lane.b32.xlu0 %v1402, 123
          %v1408 = vpop.permute.xlu0 %1407
          %v1411 = vadd.f32 %v1397, %v1406
          %v1412 = vadd.f32 %v1398, %v1408
          %s1413 = sld [smem:[#allocation5 + $0x45]]
          %v1414 = vstv %s1413
          %v1415 = vmul.f32 %v1414, %v1336
          %v1416 = vmul.f32 %v1414, %v1337
          %1419 = vrot.lane.b32.xlu0 %v1415, 122
          %v1420 = vpop.permute.xlu0 %1419
          %1421 = vrot.lane.b32.xlu0 %v1416, 122
          %v1422 = vpop.permute.xlu0 %1421
          %v1425 = vadd.f32 %v1411, %v1420
          %v1426 = vadd.f32 %v1412, %v1422
          %s1427 = sld [smem:[#allocation5 + $0x46]]
          %v1428 = vld [vmem:[%s280 + $0x3] sm:$0xff]
          %v1429 = vld [vmem:[%s280 + $0xb] sm:$0xff]
          %v1430 = vstv %s1427
          %v1431 = vmul.f32 %v1430, %v1428
          %v1432 = vmul.f32 %v1430, %v1429
          %v1433 = vadd.f32 %v1425, %v1431
          %v1434 = vadd.f32 %v1426, %v1432
          %s1435 = sld [smem:[#allocation5 + $0x47]]
          %v1436 = vstv %s1435
          %v1437 = vmul.f32 %v1436, %v1428
          %v1438 = vmul.f32 %v1436, %v1429
          %1441 = vrot.lane.b32.xlu0 %v1437, 127
          %v1442 = vpop.permute.xlu0 %1441
          %1443 = vrot.lane.b32.xlu0 %v1438, 127
          %v1444 = vpop.permute.xlu0 %1443
          %v1447 = vadd.f32 %v1433, %v1442
          %v1448 = vadd.f32 %v1434, %v1444
          %s1449 = sld [smem:[#allocation5 + $0x48]]
          %v1450 = vstv %s1449
          %v1451 = vmul.f32 %v1450, %v1428
          %v1452 = vmul.f32 %v1450, %v1429
          %1455 = vrot.lane.b32.xlu0 %v1451, 126
          %v1456 = vpop.permute.xlu0 %1455
          %1457 = vrot.lane.b32.xlu0 %v1452, 126
          %v1458 = vpop.permute.xlu0 %1457
          %v1461 = vadd.f32 %v1447, %v1456
          %v1462 = vadd.f32 %v1448, %v1458
          %s1463 = sld [smem:[#allocation5 + $0x49]]
          %v1464 = vstv %s1463
          %v1465 = vmul.f32 %v1464, %v1428
          %v1466 = vmul.f32 %v1464, %v1429
          %1469 = vrot.lane.b32.xlu0 %v1465, 125
          %v1470 = vpop.permute.xlu0 %1469
          %1471 = vrot.lane.b32.xlu0 %v1466, 125
          %v1472 = vpop.permute.xlu0 %1471
          %v1475 = vadd.f32 %v1461, %v1470
          %v1476 = vadd.f32 %v1462, %v1472
          %s1477 = sld [smem:[#allocation5 + $0x4a]]
          %v1478 = vstv %s1477
          %v1479 = vmul.f32 %v1478, %v1428
          %v1480 = vmul.f32 %v1478, %v1429
          %1483 = vrot.lane.b32.xlu0 %v1479, 124
          %v1484 = vpop.permute.xlu0 %1483
          %1485 = vrot.lane.b32.xlu0 %v1480, 124
          %v1486 = vpop.permute.xlu0 %1485
          %v1489 = vadd.f32 %v1475, %v1484
          %v1490 = vadd.f32 %v1476, %v1486
          %s1491 = sld [smem:[#allocation5 + $0x4b]]
          %v1492 = vstv %s1491
          %v1493 = vmul.f32 %v1492, %v1428
          %v1494 = vmul.f32 %v1492, %v1429
          %1497 = vrot.lane.b32.xlu0 %v1493, 123
          %v1498 = vpop.permute.xlu0 %1497
          %1499 = vrot.lane.b32.xlu0 %v1494, 123
          %v1500 = vpop.permute.xlu0 %1499
          %v1503 = vadd.f32 %v1489, %v1498
          %v1504 = vadd.f32 %v1490, %v1500
          %s1505 = sld [smem:[#allocation5 + $0x4c]]
          %v1506 = vstv %s1505
          %v1507 = vmul.f32 %v1506, %v1428
          %v1508 = vmul.f32 %v1506, %v1429
          %1511 = vrot.lane.b32.xlu0 %v1507, 122
          %v1512 = vpop.permute.xlu0 %1511
          %1513 = vrot.lane.b32.xlu0 %v1508, 122
          %v1514 = vpop.permute.xlu0 %1513
          %v1517 = vadd.f32 %v1503, %v1512
          %v1518 = vadd.f32 %v1504, %v1514
          %s1519 = sld [smem:[#allocation5 + $0x4d]]
          %v1520 = vld [vmem:[%s280 + $0x4] sm:$0xff]
          %v1521 = vld [vmem:[%s280 + $0xc] sm:$0xff]
          %v1522 = vstv %s1519
          %v1523 = vmul.f32 %v1522, %v1520
          %v1524 = vmul.f32 %v1522, %v1521
          %v1525 = vadd.f32 %v1517, %v1523
          %v1526 = vadd.f32 %v1518, %v1524
          %s1527 = sld [smem:[#allocation5 + $0x4e]]
          %v1528 = vstv %s1527
          %v1529 = vmul.f32 %v1528, %v1520
          %v1530 = vmul.f32 %v1528, %v1521
          %1533 = vrot.lane.b32.xlu0 %v1529, 127
          %v1534 = vpop.permute.xlu0 %1533
          %1535 = vrot.lane.b32.xlu0 %v1530, 127
          %v1536 = vpop.permute.xlu0 %1535
          %v1539 = vadd.f32 %v1525, %v1534
          %v1540 = vadd.f32 %v1526, %v1536
          %s1541 = sld [smem:[#allocation5 + $0x4f]]
          %v1542 = vstv %s1541
          %v1543 = vmul.f32 %v1542, %v1520
          %v1544 = vmul.f32 %v1542, %v1521
          %1547 = vrot.lane.b32.xlu0 %v1543, 126
          %v1548 = vpop.permute.xlu0 %1547
          %1549 = vrot.lane.b32.xlu0 %v1544, 126
          %v1550 = vpop.permute.xlu0 %1549
          %v1553 = vadd.f32 %v1539, %v1548
          %v1554 = vadd.f32 %v1540, %v1550
          %s1555 = sld [smem:[#allocation5 + $0x50]]
          %v1556 = vstv %s1555
          %v1557 = vmul.f32 %v1556, %v1520
          %v1558 = vmul.f32 %v1556, %v1521
          %1561 = vrot.lane.b32.xlu0 %v1557, 125
          %v1562 = vpop.permute.xlu0 %1561
          %1563 = vrot.lane.b32.xlu0 %v1558, 125
          %v1564 = vpop.permute.xlu0 %1563
          %v1567 = vadd.f32 %v1553, %v1562
          %v1568 = vadd.f32 %v1554, %v1564
          %s1569 = sld [smem:[#allocation5 + $0x51]]
          %v1570 = vstv %s1569
          %v1571 = vmul.f32 %v1570, %v1520
          %v1572 = vmul.f32 %v1570, %v1521
          %1575 = vrot.lane.b32.xlu0 %v1571, 124
          %v1576 = vpop.permute.xlu0 %1575
          %1577 = vrot.lane.b32.xlu0 %v1572, 124
          %v1578 = vpop.permute.xlu0 %1577
          %v1581 = vadd.f32 %v1567, %v1576
          %v1582 = vadd.f32 %v1568, %v1578
          %s1583 = sld [smem:[#allocation5 + $0x52]]
          %v1584 = vstv %s1583
          %v1585 = vmul.f32 %v1584, %v1520
          %v1586 = vmul.f32 %v1584, %v1521
          %1589 = vrot.lane.b32.xlu0 %v1585, 123
          %v1590 = vpop.permute.xlu0 %1589
          %1591 = vrot.lane.b32.xlu0 %v1586, 123
          %v1592 = vpop.permute.xlu0 %1591
          %v1595 = vadd.f32 %v1581, %v1590
          %v1596 = vadd.f32 %v1582, %v1592
          %s1597 = sld [smem:[#allocation5 + $0x53]]
          %v1598 = vstv %s1597
          %v1599 = vmul.f32 %v1598, %v1520
          %v1600 = vmul.f32 %v1598, %v1521
          %1603 = vrot.lane.b32.xlu0 %v1599, 122
          %v1604 = vpop.permute.xlu0 %1603
          %1605 = vrot.lane.b32.xlu0 %v1600, 122
          %v1606 = vpop.permute.xlu0 %1605
          %v1609 = vadd.f32 %v1595, %v1604
          %v1610 = vadd.f32 %v1596, %v1606
          %s1611 = sld [smem:[#allocation5 + $0x54]]
          %v1612 = vld [vmem:[%s280 + $0x5] sm:$0xff]
          %v1613 = vld [vmem:[%s280 + $0xd] sm:$0xff]
          %v1614 = vstv %s1611
          %v1615 = vmul.f32 %v1614, %v1612
          %v1616 = vmul.f32 %v1614, %v1613
          %v1617 = vadd.f32 %v1609, %v1615
          %v1618 = vadd.f32 %v1610, %v1616
          %s1619 = sld [smem:[#allocation5 + $0x55]]
          %v1620 = vstv %s1619
          %v1621 = vmul.f32 %v1620, %v1612
          %v1622 = vmul.f32 %v1620, %v1613
          %1625 = vrot.lane.b32.xlu0 %v1621, 127
          %v1626 = vpop.permute.xlu0 %1625
          %1627 = vrot.lane.b32.xlu0 %v1622, 127
          %v1628 = vpop.permute.xlu0 %1627
          %v1631 = vadd.f32 %v1617, %v1626
          %v1632 = vadd.f32 %v1618, %v1628
          %s1633 = sld [smem:[#allocation5 + $0x56]]
          %v1634 = vstv %s1633
          %v1635 = vmul.f32 %v1634, %v1612
          %v1636 = vmul.f32 %v1634, %v1613
          %1639 = vrot.lane.b32.xlu0 %v1635, 126
          %v1640 = vpop.permute.xlu0 %1639
          %1641 = vrot.lane.b32.xlu0 %v1636, 126
          %v1642 = vpop.permute.xlu0 %1641
          %v1645 = vadd.f32 %v1631, %v1640
          %v1646 = vadd.f32 %v1632, %v1642
          %s1647 = sld [smem:[#allocation5 + $0x57]]
          %v1648 = vstv %s1647
          %v1649 = vmul.f32 %v1648, %v1612
          %v1650 = vmul.f32 %v1648, %v1613
          %1653 = vrot.lane.b32.xlu0 %v1649, 125
          %v1654 = vpop.permute.xlu0 %1653
          %1655 = vrot.lane.b32.xlu0 %v1650, 125
          %v1656 = vpop.permute.xlu0 %1655
          %v1659 = vadd.f32 %v1645, %v1654
          %v1660 = vadd.f32 %v1646, %v1656
          %s1661 = sld [smem:[#allocation5 + $0x58]]
          %v1662 = vstv %s1661
          %v1663 = vmul.f32 %v1662, %v1612
          %v1664 = vmul.f32 %v1662, %v1613
          %1667 = vrot.lane.b32.xlu0 %v1663, 124
          %v1668 = vpop.permute.xlu0 %1667
          %1669 = vrot.lane.b32.xlu0 %v1664, 124
          %v1670 = vpop.permute.xlu0 %1669
          %v1673 = vadd.f32 %v1659, %v1668
          %v1674 = vadd.f32 %v1660, %v1670
          %s1675 = sld [smem:[#allocation5 + $0x59]]
          %v1676 = vstv %s1675
          %v1677 = vmul.f32 %v1676, %v1612
          %v1678 = vmul.f32 %v1676, %v1613
          %1681 = vrot.lane.b32.xlu0 %v1677, 123
          %v1682 = vpop.permute.xlu0 %1681
          %1683 = vrot.lane.b32.xlu0 %v1678, 123
          %v1684 = vpop.permute.xlu0 %1683
          %v1687 = vadd.f32 %v1673, %v1682
          %v1688 = vadd.f32 %v1674, %v1684
          %s1689 = sld [smem:[#allocation5 + $0x5a]]
          %v1690 = vstv %s1689
          %v1691 = vmul.f32 %v1690, %v1612
          %v1692 = vmul.f32 %v1690, %v1613
          %1695 = vrot.lane.b32.xlu0 %v1691, 122
          %v1696 = vpop.permute.xlu0 %1695
          %1697 = vrot.lane.b32.xlu0 %v1692, 122
          %v1698 = vpop.permute.xlu0 %1697
          %v1701 = vadd.f32 %v1687, %v1696
          %v1702 = vadd.f32 %v1688, %v1698
          %s1703 = sld [smem:[#allocation5 + $0x5b]]
          %v1704 = vld [vmem:[%s280 + $0x6] sm:$0xff]
          %v1705 = vld [vmem:[%s280 + $0xe] sm:$0xff]
          %v1706 = vstv %s1703
          %v1707 = vmul.f32 %v1706, %v1704
          %v1708 = vmul.f32 %v1706, %v1705
          %v1709 = vadd.f32 %v1701, %v1707
          %v1710 = vadd.f32 %v1702, %v1708
          %s1711 = sld [smem:[#allocation5 + $0x5c]]
          %v1712 = vstv %s1711
          %v1713 = vmul.f32 %v1712, %v1704
          %v1714 = vmul.f32 %v1712, %v1705
          %1717 = vrot.lane.b32.xlu0 %v1713, 127
          %v1718 = vpop.permute.xlu0 %1717
          %1719 = vrot.lane.b32.xlu0 %v1714, 127
          %v1720 = vpop.permute.xlu0 %1719
          %v1723 = vadd.f32 %v1709, %v1718
          %v1724 = vadd.f32 %v1710, %v1720
          %s1725 = sld [smem:[#allocation5 + $0x5d]]
          %v1726 = vstv %s1725
          %v1727 = vmul.f32 %v1726, %v1704
          %v1728 = vmul.f32 %v1726, %v1705
          %1731 = vrot.lane.b32.xlu0 %v1727, 126
          %v1732 = vpop.permute.xlu0 %1731
          %1733 = vrot.lane.b32.xlu0 %v1728, 126
          %v1734 = vpop.permute.xlu0 %1733
          %v1737 = vadd.f32 %v1723, %v1732
          %v1738 = vadd.f32 %v1724, %v1734
          %s1739 = sld [smem:[#allocation5 + $0x5e]]
          %v1740 = vstv %s1739
          %v1741 = vmul.f32 %v1740, %v1704
          %v1742 = vmul.f32 %v1740, %v1705
          %1745 = vrot.lane.b32.xlu0 %v1741, 125
          %v1746 = vpop.permute.xlu0 %1745
          %1747 = vrot.lane.b32.xlu0 %v1742, 125
          %v1748 = vpop.permute.xlu0 %1747
          %v1751 = vadd.f32 %v1737, %v1746
          %v1752 = vadd.f32 %v1738, %v1748
          %s1753 = sld [smem:[#allocation5 + $0x5f]]
          %v1754 = vstv %s1753
          %v1755 = vmul.f32 %v1754, %v1704
          %v1756 = vmul.f32 %v1754, %v1705
          %1759 = vrot.lane.b32.xlu0 %v1755, 124
          %v1760 = vpop.permute.xlu0 %1759
          %1761 = vrot.lane.b32.xlu0 %v1756, 124
          %v1762 = vpop.permute.xlu0 %1761
          %v1765 = vadd.f32 %v1751, %v1760
          %v1766 = vadd.f32 %v1752, %v1762
          %s1767 = sld [smem:[#allocation5 + $0x60]]
          %v1768 = vstv %s1767
          %v1769 = vmul.f32 %v1768, %v1704
          %v1770 = vmul.f32 %v1768, %v1705
          %1773 = vrot.lane.b32.xlu0 %v1769, 123
          %v1774 = vpop.permute.xlu0 %1773
          %1775 = vrot.lane.b32.xlu0 %v1770, 123
          %v1776 = vpop.permute.xlu0 %1775
          %v1779 = vadd.f32 %v1765, %v1774
          %v1780 = vadd.f32 %v1766, %v1776
          %s1781 = sld [smem:[#allocation5 + $0x61]]
          %v1782 = vstv %s1781
          %v1783 = vmul.f32 %v1782, %v1704
          %v1784 = vmul.f32 %v1782, %v1705
          %1787 = vrot.lane.b32.xlu0 %v1783, 122
          %v1788 = vpop.permute.xlu0 %1787
          %1789 = vrot.lane.b32.xlu0 %v1784, 122
          %v1790 = vpop.permute.xlu0 %1789
          %v1793 = vadd.f32 %v1779, %v1788
          %v1794 = vadd.f32 %v1780, %v1790
          %v1795 = vxor.u32 %v1793, 2147483648
          %v1796 = vxor.u32 %v1794, 2147483648
          %v1797 = vmul.f32 %v1795, 1.442695
          %v1798 = vpow.pop %v1797
          %v1799 = vmul.f32 %v1796, 1.442695
          %v1800 = vpow.pop %v1799
          %v1801 = vadd.f32 %v1798, 1.0
          %v1802 = vadd.f32 %v1800, 1.0
          %v1803 = vrcp.pop %v1801
          %v1804 = vmul.f32 %v1801, %v1803
          %v1805 = vsub.f32 1.0, %v1804
          %v1806 = vmul.f32 %v1803, %v1805
          %v1807 = vadd.f32 %v1803, %v1806
          %vm1808 = vweird.f32 %v1801
          %vm1809 = vweird.f32 %v1803
          %vm1810 = vmor %vm1808, %vm1809
          %v1811 = vsel %vm1810, %v1803, %v1807
          %v1812 = vand.u32 2147483647, %v1801
          %vm1813 = vcmp.eq.f32.partialorder %v1812, 8.507059e+37
          %v1814 = vand.u32 %v1801, 2147483648
          %v1815 = vor.u32 1.1754944e-38, %v1814
          %v1816 = vsel %vm1813, %v1815, %v1811
          %v1817 = vmul.f32 1.0, %v1816
          %v1818 = vrcp.pop %v1802
          %v1819 = vmul.f32 %v1802, %v1818
          %v1820 = vsub.f32 1.0, %v1819
          %v1821 = vmul.f32 %v1818, %v1820
          %v1822 = vadd.f32 %v1818, %v1821
          %vm1823 = vweird.f32 %v1802
          %vm1824 = vweird.f32 %v1818
          %vm1825 = vmor %vm1823, %vm1824
          %v1826 = vsel %vm1825, %v1818, %v1822
          %v1827 = vand.u32 2147483647, %v1802
          %vm1828 = vcmp.eq.f32.partialorder %v1827, 8.507059e+37
          %v1829 = vand.u32 %v1802, 2147483648
          %v1830 = vor.u32 1.1754944e-38, %v1829
          %v1831 = vsel %vm1828, %v1830, %v1826
          %v1832 = vmul.f32 1.0, %v1831
          %vm1833 = vcmask 130048
          %1834 = vst.msk [vmem:[%s172] sm:$0xff] %vm1833, %v1817
          %1835 = vst.msk [vmem:[%s172 + $0x8] sm:$0xff] %vm1833, %v1832
        $region40: #{spatial_channel.1} parent=27 // pred_fallthru
          _
        %s1836 = sand.u32 %s86, 1
        %s1837 = scalar_lea.sflag [#allocation6], %s1836
        %s1838 = sand.u32 %s86, 1
        %s1839 = smul.addr %s1838, 16
        %s1840 = scalar_lea.vmem [#allocation8], %s1839
        // Predicated region
        $region41: #{spatial_channel.1} parent=27 // pred_check
          %p1841 = pneg %p96
        $region42: #{spatial_channel.1} parent=27 // pred_check_branch
          %1843 = sbr.rel (%p1841) target = $region44
        $region43: #{spatial_channel.1} parent=27 // pred_region
          %1845 = vsyncadd %s1837, 0
          %s1846 = smul.addr %s21, 2
          %s1847 = smul.addr %s1846, 8
          %s1848 = scalar_lea.hbm %s2, %s1847
          %s1849 = sshll.u32 %s1840, 4
          %s1850 = int_to_ptr.vmem [resolvable:$true] %s1849
          %s1851 = sshll.u32 %s1848, 4
          %s1852 = int_to_ptr.hbm [resolvable:$true] %s1851
          %1857 = dma.vmem_to_hbm [thread:$0]  %s1850, 256, %s1852, %s1837, 128, 128, 8
        $region44: #{spatial_channel.1} parent=27 // pred_fallthru
          _
      $region28: #{spatial_channel.1} parent=5 // pred_fallthru
        _
      %p1858 = scmp.le.s32.totalorder 2, %s12
      // Predicated region
      $region45: #{spatial_channel.1} parent=5 // pred_check
        %p1859 = pneg %p1858
      $region46: #{spatial_channel.1} parent=5 // pred_check_branch
        %1861 = sbr.rel (%p1859) target = $region48
      $region47: #{spatial_channel.1} parent=5 // pred_region
        %s1862 = ssub.s32 %s12, 2
        // Predicated region
        $region49: #{spatial_channel.1} parent=47 // pred_check
          %p1863 = pneg %p102
        $region50: #{spatial_channel.1} parent=47 // pred_check_branch
          %1865 = sbr.rel (%p1863) target = $region52
        $region51: #{spatial_channel.1} parent=47 // pred_region
          %s1866 = sand.u32 %s87, 1
          %s1867 = scalar_lea.sflag [#allocation6], %s1866
          %s1868 = sand.u32 %s87, 1
          %s1869 = smul.addr %s1868, 16
          %s1870 = scalar_lea.vmem [#allocation8], %s1869
          %1872 = dma.done %s1867, 256
        $region52: #{spatial_channel.1} parent=47 // pred_fallthru
          _
      $region48: #{spatial_channel.1} parent=5 // pred_fallthru
        _
    $region6: #{spatial_channel.1} parent=1 // loop_footer
      %s16 = sadd.s32 1, %s12
    $region7: #{spatial_channel.1} parent=1 // loop_footer_branch
      %11 = sbr.rel target = $region3
    $region8: #{spatial_channel.1} parent=1 // loop_exit
      _
    %1873 = vsyncpa [#allocation6], 1
    %s1874 = scalar_lea.sflag [#allocation6], 1
    %1875 = vsyncpa %s1874, 1
    %1876 = vsyncpa [#allocation7], 1
    %s1877 = scalar_lea.sflag [#allocation7], 1
    %1878 = vsyncpa %s1877, 1

</llo_original>
